<compile_context>
chip_gen: v7x
topology: tpu7x:2x2x1
jax: 0.10.0
libtpu: 0.0.40
codegen_flags: <defaults>
</compile_context>

<pallas_src>
import functools
import math

import jax
import jax.numpy as jnp
from jax.experimental import pallas as pl
from jax.experimental.pallas import tpu as pltpu


def _ggnn_kernel(h0_ref, mask_ref,
                 w_msg_ref, b_msg_ref,
                 w_zr_a_ref, w_zr_h_ref, b_zr_ref,
                 w_cand_a_ref, w_cand_h_ref, b_cand_ref,
                 w_cls_ref, b_cls_ref,
                 out_ref, mask_sc, *, time_steps, hidden):
    f32 = jnp.float32
    cdt = w_msg_ref.dtype            # MXU input dtype (bf16)
    D = hidden                       # lane-padded hidden width

    # Upcast the int8 block-diagonal adjacency once per grid block into VMEM
    # scratch (the int8 HBM copy halves the largest recurring per-step DMA).
    mask_sc[...] = mask_ref[...].astype(f32).astype(cdt)

    h = h0_ref[...].astype(f32)      # (TBR, D) GGNN state (input2ggnn), f32

    # Hoist bias loads out of the unrolled time loop (broadcast_in_dim is not
    # CSE'd; re-loading per step is wasted vld/VPU work).
    b_msg = b_msg_ref[...]           # (1, D)   f32
    b_zr = b_zr_ref[...]             # (1, 2D)  f32
    b_cand = b_cand_ref[...]         # (1, D)   f32

    def step(_, h):
        h16 = h.astype(cdt)
        # message + neighbor aggregation (one wide matmul over the block diag)
        m = jnp.dot(h16, w_msg_ref[...], preferred_element_type=f32) + b_msg
        a = jnp.dot(mask_sc[...], m.astype(cdt), preferred_element_type=f32)
        a16 = a.astype(cdt)          # MXU-only operand -> bf16 immediately
        # fused update/reset gates as two dots summed in f32 (no lane concat):
        #   [z | r] = sigmoid(a @ [Wz Wr] + h @ [Uz Ur] + [bz br])
        zr = jax.nn.sigmoid(
            jnp.dot(a16, w_zr_a_ref[...], preferred_element_type=f32)
            + jnp.dot(h16, w_zr_h_ref[...], preferred_element_type=f32)
            + b_zr)
        z = zr[:, :D]                # lane-aligned slices (D padded to 128)
        r = zr[:, D:]
        # candidate state, again as two dots (no lane concat)
        h_tilde = jnp.tanh(
            jnp.dot(a16, w_cand_a_ref[...], preferred_element_type=f32)
            + jnp.dot((r * h).astype(cdt), w_cand_h_ref[...],
                      preferred_element_type=f32)
            + b_cand)
        return (1.0 - z) * h + z * h_tilde

    h = jax.lax.fori_loop(0, time_steps, step, h, unroll=True)

    # classifier -> lane-dense (TBR, L_pad) store (kept f32 for downstream loss)
    logits = jnp.dot(h.astype(cdt), w_cls_ref[...],
                     preferred_element_type=f32) + b_cls_ref[...]
    out_ref[...] = logits.astype(out_ref.dtype)


def _default_target_rows():
    """Aggregation-K target: one MXU pass (128 on v5e, 256 on v6e/v7x)."""
    try:
        kind = jax.devices()[0].device_kind.lower()
    except Exception:
        return 256
    if "v5 lite" in kind or "v5e" in kind or "v5lite" in kind:
        return 128
    return 256


def _pick_tb(batch, roles, *, target_rows=256, sublane=32):
    """Pick the per-grid-step batch block TB.

    TB*R (folded matmul row dim = aggregation K) must be sublane-aligned; take
    the largest aligned value that (a) stays within target_rows (single MXU
    K-pass for the aggregation), (b) does not overshoot the batch, and
    (c) leaves >= 2 grid steps when the batch allows it (v7x has 2 TCs).
    """
    tb_min = sublane // math.gcd(roles, sublane)
    cap = max(tb_min, batch)
    cands = [tb for tb in range(tb_min, cap + 1, tb_min)
             if tb * roles <= target_rows]
    if not cands:
        return tb_min
    if batch > cands[0]:
        two_step = [tb for tb in cands if -(-batch // tb) >= 2]
        if two_step:
            return two_step[-1]
    return cands[-1]


def ggnn_baseline_forward(params, v_org, gt_verb, *, time_steps=3,
                          target_rows=None, compute_dtype=jnp.bfloat16):
    B, C = v_org.shape[0], v_org.shape[1]
    R = params["role_ids"].shape[1]
    D = params["verb_emb"].shape[1]
    L = params["w_cls"].shape[1]
    D_pad = pl.cdiv(D, 128) * 128                     # lane-dense hidden width
    L_pad = pl.cdiv(L, 128) * 128                     # lane-dense classifier width
    if target_rows is None:
        target_rows = _default_target_rows()

    # ------------- plain-JAX glue (convnet trunk, encoder lookups) -----------
    pooled = jnp.mean(v_org, axis=(2, 3))                       # (B, C) GAP
    img = pooled @ params["w_img"] + params["b_img"]            # (B, D) projection
    verb_e = params["verb_emb"][gt_verb]                        # (B, D)
    role_idx = params["role_ids"][gt_verb]                      # (B, R)
    role_e = params["role_emb"][role_idx]                       # (B, R, D)
    adj = params["adj"][gt_verb]                                # (B, R, R) no-self

    # input2ggnn = img * role_embd * verb_embed_expand
    h0 = img[:, None, :] * role_e * verb_e[:, None, :]          # (B, R, D)

    # ---- pick batch block, pad batch, flatten (batch*roles, D_pad) ----------
    TB = _pick_tb(B, R, target_rows=target_rows, sublane=32)
    NB = pl.cdiv(B, TB)
    B_pad = NB * TB
    if B_pad != B:
        h0 = jnp.concatenate(
            [h0, jnp.zeros((B_pad - B, R, D), h0.dtype)], axis=0)
        adj = jnp.concatenate(
            [adj, jnp.zeros((B_pad - B, R, R), adj.dtype)], axis=0)
    TBR = TB * R

    h0_flat = jnp.zeros((B_pad * R, D_pad), compute_dtype)
    h0_flat = h0_flat.at[:, :D].set(
        h0.reshape(B_pad * R, D).astype(compute_dtype))

    # block-diagonal adjacency per TB-item block -> one wide aggregation matmul.
    # Stored as int8 in HBM (exact: the no-self adjacency is binary); upcast
    # in-kernel once per block.
    eye_tb = jnp.eye(TB, dtype=jnp.float32)
    mask_bd = jnp.einsum('ntij,ts->ntisj',
                         adj.reshape(NB, TB, R, R).astype(jnp.float32), eye_tb)
    mask_bd = mask_bd.reshape(NB * TBR, TBR).astype(jnp.int8)

    # ---- zero-pad weights to lane-dense widths; split/fuse GRU gate weights --
    def pad2(x, rows, cols):
        out = jnp.zeros((rows, cols), jnp.float32)
        return out.at[:x.shape[0], :x.shape[1]].set(x.astype(jnp.float32))

    w_msg = pad2(params["w_msg"], D_pad, D_pad)
    b_msg = pad2(params["b_msg"], 1, D_pad)
    w_zr_a = jnp.concatenate([pad2(params["w_z"], D_pad, D_pad),
                              pad2(params["w_r"], D_pad, D_pad)], axis=1)
    w_zr_h = jnp.concatenate([pad2(params["u_z"], D_pad, D_pad),
                              pad2(params["u_r"], D_pad, D_pad)], axis=1)
    b_zr = jnp.concatenate([pad2(params["b_z"], 1, D_pad),
                            pad2(params["b_r"], 1, D_pad)], axis=1)
    w_cand_a = pad2(params["w_h"], D_pad, D_pad)
    w_cand_h = pad2(params["u_h"], D_pad, D_pad)
    b_cand = pad2(params["b_h"], 1, D_pad)
    w_cls = pad2(params["w_cls"], D_pad, L_pad)
    b_cls = pad2(params["b_cls"], 1, L_pad)

    weights = [
        w_msg.astype(compute_dtype), b_msg,
        w_zr_a.astype(compute_dtype), w_zr_h.astype(compute_dtype), b_zr,
        w_cand_a.astype(compute_dtype), w_cand_h.astype(compute_dtype), b_cand,
        w_cls.astype(compute_dtype), b_cls,
    ]

    def const_spec(shape):
        zeros = (0,) * len(shape)
        return pl.BlockSpec(shape, lambda b, _z=zeros: _z)

    in_specs = [
        pl.BlockSpec((TBR, D_pad), lambda b: (b, 0)),    # h0 (input2ggnn)
        pl.BlockSpec((TBR, TBR), lambda b: (b, 0)),      # block-diag adjacency (i8)
    ] + [const_spec(w.shape) for w in weights]

    out = pl.pallas_call(
        functools.partial(_ggnn_kernel, time_steps=time_steps, hidden=D_pad),
        out_shape=jax.ShapeDtypeStruct((B_pad * R, L_pad), jnp.float32),
        grid=(NB,),
        in_specs=in_specs,
        out_specs=pl.BlockSpec((TBR, L_pad), lambda b: (b, 0)),
        scratch_shapes=[pltpu.VMEM((TBR, TBR), compute_dtype)],
        compiler_params=pltpu.CompilerParams(
            dimension_semantics=("parallel",),
            # >= default scoped limit on v5e/v6e/v7x, < 64 MiB physical on v7x
            vmem_limit_bytes=48 * 1024 * 1024),
    )(h0_flat, mask_bd, *weights)

    return out.reshape(B_pad, R, L_pad)[:B, :, :L]               # (B, R, L)


def ggnn_baseline_reference(params, v_org, gt_verb, *, time_steps=3):
    """Pure-JAX reference with the original (un-fused) GGNN formulation."""
    pooled = jnp.mean(v_org, axis=(2, 3))
    img = pooled @ params["w_img"] + params["b_img"]
    verb_e = params["verb_emb"][gt_verb]
    role_e = params["role_emb"][params["role_ids"][gt_verb]]
    mask = params["adj"][gt_verb]
    h = img[:, None, :] * role_e * verb_e[:, None, :]
    for _ in range(time_steps):
        m = h @ params["w_msg"] + params["b_msg"]
        a = jnp.einsum('bij,bjd->bid', mask, m)
        z = jax.nn.sigmoid(a @ params["w_z"] + h @ params["u_z"] + params["b_z"])
        r = jax.nn.sigmoid(a @ params["w_r"] + h @ params["u_r"] + params["b_r"])
        h_tilde = jnp.tanh(a @ params["w_h"] + (r * h) @ params["u_h"]
                           + params["b_h"])
        h = (1.0 - z) * h + z * h_tilde
    return h @ params["w_cls"] + params["b_cls"]


def init_params(key, *, C, D, R, num_verbs, num_roles, L):
    ks = jax.random.split(key, 12)

    def w(k, shape, scale):
        return (scale * jax.random.normal(k, shape)).astype(jnp.float32)

    zeros = lambda shape: jnp.zeros(shape, jnp.float32)
    params = dict(
        verb_emb=w(ks[0], (num_verbs, D), 1.0),
        role_emb=w(ks[1], (num_roles, D), 1.0),
        w_img=w(ks[2], (C, D), 0.3), b_img=zeros((1, D)),
        w_msg=w(ks[3], (D, D), 0.3), b_msg=zeros((1, D)),
        w_z=w(ks[4], (D, D), 0.3), u_z=w(ks[5], (D, D), 0.3), b_z=zeros((1, D)),
        w_r=w(ks[6], (D, D), 0.3), u_r=w(ks[7], (D, D), 0.3), b_r=zeros((1, D)),
        w_h=w(ks[8], (D, D), 0.3), u_h=w(ks[9], (D, D), 0.3), b_h=zeros((1, D)),
        w_cls=w(ks[10], (D, L), 0.3), b_cls=w(ks[11], (1, L), 0.1),
    )
    # synthetic encoder tables (deterministic)
    role_ids = (jnp.arange(num_verbs)[:, None] * R
                + jnp.arange(R)[None, :]) % num_roles
    params["role_ids"] = role_ids.astype(jnp.int32)                   # (num_verbs, R)
    adj = jnp.ones((R, R), jnp.float32) - jnp.eye(R, dtype=jnp.float32)
    params["adj"] = jnp.broadcast_to(adj, (num_verbs, R, R)).astype(jnp.float32)
    return params


if __name__ == "__main__":
    B, C, H, W = 2, 4, 16, 16      # v_org: NCHW
    D, R, L = 32, 6, 64            # hidden dim, max_role_count, num labels
    num_verbs, num_roles = 8, 16
    T = 3                          # GGNN propagation steps

    key = jax.random.PRNGKey(0)
    k_param, k_img, k_verb = jax.random.split(key, 3)
    params = init_params(k_param, C=C, D=D, R=R,
                         num_verbs=num_verbs, num_roles=num_roles, L=L)
    v_org = jax.random.normal(k_img, (B, C, H, W), jnp.float32)
    gt_verb = jax.random.randint(k_verb, (B,), 0, num_verbs)

    role_label_pred = ggnn_baseline_forward(params, v_org, gt_verb, time_steps=T)
    jax.block_until_ready(role_label_pred)
    assert role_label_pred.shape == (B, R, L)
    assert role_label_pred.dtype == jnp.float32

    # correctness check against the un-fused pure-JAX reference
    ref = ggnn_baseline_reference(params, v_org, gt_verb, time_steps=T)
    err = float(jnp.max(jnp.abs(role_label_pred - ref)))
    tol = 1e-2 + 5e-2 * float(jnp.max(jnp.abs(ref)))
    assert err < tol, f"max abs err {err} vs tol {tol}"
    print("KERNEL_OK")
</pallas_src>

<mosaic_0001>
module attributes {stable_mosaic.version = 11 : i64} {
  func.func @_ggnn_kernel(%arg0: i32, %arg1: memref<96x128xbf16, #tpu.memory_space<vmem>>, %arg2: memref<96x96xi8, #tpu.memory_space<vmem>>, %arg3: memref<128x128xbf16, #tpu.memory_space<vmem>>, %arg4: memref<1x128xf32, #tpu.memory_space<vmem>>, %arg5: memref<128x256xbf16, #tpu.memory_space<vmem>>, %arg6: memref<128x256xbf16, #tpu.memory_space<vmem>>, %arg7: memref<1x256xf32, #tpu.memory_space<vmem>>, %arg8: memref<128x128xbf16, #tpu.memory_space<vmem>>, %arg9: memref<128x128xbf16, #tpu.memory_space<vmem>>, %arg10: memref<1x128xf32, #tpu.memory_space<vmem>>, %arg11: memref<128x128xbf16, #tpu.memory_space<vmem>>, %arg12: memref<1x128xf32, #tpu.memory_space<vmem>>, %arg13: memref<96x128xf32, #tpu.memory_space<vmem>>, %arg14: memref<96x96xbf16, #tpu.memory_space<vmem>>) attributes {dimension_semantics = [#tpu.dimension_semantics<parallel>], iteration_bounds = array<i64: 1>, scalar_prefetch = 0 : i64, scratch_operands = 1 : i64, tpu.core_type = #tpu.core_type<tc>, window_params = [{transform_indices = @transform_0, window_bounds = array<i64: 96, 128>}, {transform_indices = @transform_1, window_bounds = array<i64: 96, 96>}, {pipeline_mode = #tpu.pipeline_mode<synchronous>, transform_indices = @transform_2, window_bounds = array<i64: 128, 128>}, {pipeline_mode = #tpu.pipeline_mode<synchronous>, transform_indices = @transform_3, window_bounds = array<i64: 1, 128>}, {pipeline_mode = #tpu.pipeline_mode<synchronous>, transform_indices = @transform_4, window_bounds = array<i64: 128, 256>}, {pipeline_mode = #tpu.pipeline_mode<synchronous>, transform_indices = @transform_5, window_bounds = array<i64: 128, 256>}, {pipeline_mode = #tpu.pipeline_mode<synchronous>, transform_indices = @transform_6, window_bounds = array<i64: 1, 256>}, {pipeline_mode = #tpu.pipeline_mode<synchronous>, transform_indices = @transform_7, window_bounds = array<i64: 128, 128>}, {pipeline_mode = #tpu.pipeline_mode<synchronous>, transform_indices = @transform_8, window_bounds = array<i64: 128, 128>}, {pipeline_mode = #tpu.pipeline_mode<synchronous>, transform_indices = @transform_9, window_bounds = array<i64: 1, 128>}, {pipeline_mode = #tpu.pipeline_mode<synchronous>, transform_indices = @transform_10, window_bounds = array<i64: 128, 128>}, {pipeline_mode = #tpu.pipeline_mode<synchronous>, transform_indices = @transform_11, window_bounds = array<i64: 1, 128>}, {transform_indices = @transform_12, window_bounds = array<i64: 96, 128>}]} {
    %c0 = arith.constant 0 : index
    %c0_0 = arith.constant 0 : index
    %0 = vector.load %arg2[%c0, %c0_0] : memref<96x96xi8, #tpu.memory_space<vmem>>, vector<96x96xi8>
    %1 = arith.sitofp %0 : vector<96x96xi8> to vector<96x96xf32>
    %2 = arith.truncf %1 : vector<96x96xf32> to vector<96x96xbf16>
    %c0_1 = arith.constant 0 : index
    %c0_2 = arith.constant 0 : index
    %3 = vector.load %arg14[%c0_1, %c0_2] : memref<96x96xbf16, #tpu.memory_space<vmem>>, vector<96x96xbf16>
    tpu.vector_store %arg14[%c0_1, %c0_2], %2 {strides = array<i32>} : memref<96x96xbf16, #tpu.memory_space<vmem>>, vector<96x96xbf16>,
    %c0_3 = arith.constant 0 : index
    %c0_4 = arith.constant 0 : index
    %4 = vector.load %arg1[%c0_3, %c0_4] : memref<96x128xbf16, #tpu.memory_space<vmem>>, vector<96x128xbf16>
    %5 = arith.extf %4 : vector<96x128xbf16> to vector<96x128xf32>
    %c0_5 = arith.constant 0 : index
    %c0_6 = arith.constant 0 : index
    %6 = vector.load %arg4[%c0_5, %c0_6] : memref<1x128xf32, #tpu.memory_space<vmem>>, vector<1x128xf32>
    %c0_7 = arith.constant 0 : index
    %c0_8 = arith.constant 0 : index
    %7 = vector.load %arg7[%c0_7, %c0_8] : memref<1x256xf32, #tpu.memory_space<vmem>>, vector<1x256xf32>
    %c0_9 = arith.constant 0 : index
    %c0_10 = arith.constant 0 : index
    %8 = vector.load %arg10[%c0_9, %c0_10] : memref<1x128xf32, #tpu.memory_space<vmem>>, vector<1x128xf32>
    %c0_i32 = arith.constant 0 : i32
    %9 = arith.truncf %5 : vector<96x128xf32> to vector<96x128xbf16>
    %c0_11 = arith.constant 0 : index
    %c0_12 = arith.constant 0 : index
    %10 = vector.load %arg3[%c0_11, %c0_12] : memref<128x128xbf16, #tpu.memory_space<vmem>>, vector<128x128xbf16>
    %cst = arith.constant dense<0.000000e+00> : vector<96x128xf32>
    %11 = tpu.matmul %9, %10, %cst {dimension_numbers = #tpu.dot_dimension_numbers<[1], [0], [0], [1], [0, 0, 1, 1], [], []>} : vector<96x128xbf16>, vector<128x128xbf16>, vector<96x128xf32> -> vector<96x128xf32>
    %12 = vector.broadcast %6 : vector<1x128xf32> to vector<96x128xf32>
    %13 = arith.addf %11, %12 : vector<96x128xf32>
    %c0_13 = arith.constant 0 : index
    %c0_14 = arith.constant 0 : index
    %14 = vector.load %arg14[%c0_13, %c0_14] : memref<96x96xbf16, #tpu.memory_space<vmem>>, vector<96x96xbf16>
    %15 = arith.truncf %13 : vector<96x128xf32> to vector<96x128xbf16>
    %cst_15 = arith.constant dense<0.000000e+00> : vector<96x128xf32>
    %16 = tpu.matmul %14, %15, %cst_15 {dimension_numbers = #tpu.dot_dimension_numbers<[1], [0], [0], [1], [0, 0, 1, 1], [], []>} : vector<96x96xbf16>, vector<96x128xbf16>, vector<96x128xf32> -> vector<96x128xf32>
    %17 = arith.truncf %16 : vector<96x128xf32> to vector<96x128xbf16>
    %c0_16 = arith.constant 0 : index
    %c0_17 = arith.constant 0 : index
    %18 = vector.load %arg5[%c0_16, %c0_17] : memref<128x256xbf16, #tpu.memory_space<vmem>>, vector<128x256xbf16>
    %cst_18 = arith.constant dense<0.000000e+00> : vector<96x256xf32>
    %19 = tpu.matmul %17, %18, %cst_18 {dimension_numbers = #tpu.dot_dimension_numbers<[1], [0], [0], [1], [0, 0, 1, 1], [], []>} : vector<96x128xbf16>, vector<128x256xbf16>, vector<96x256xf32> -> vector<96x256xf32>
    %c0_19 = arith.constant 0 : index
    %c0_20 = arith.constant 0 : index
    %20 = vector.load %arg6[%c0_19, %c0_20] : memref<128x256xbf16, #tpu.memory_space<vmem>>, vector<128x256xbf16>
    %cst_21 = arith.constant dense<0.000000e+00> : vector<96x256xf32>
    %21 = tpu.matmul %9, %20, %cst_21 {dimension_numbers = #tpu.dot_dimension_numbers<[1], [0], [0], [1], [0, 0, 1, 1], [], []>} : vector<96x128xbf16>, vector<128x256xbf16>, vector<96x256xf32> -> vector<96x256xf32>
    %22 = arith.addf %19, %21 : vector<96x256xf32>
    %23 = vector.broadcast %7 : vector<1x256xf32> to vector<96x256xf32>
    %24 = arith.addf %22, %23 : vector<96x256xf32>
    %25 = arith.negf %24 : vector<96x256xf32>
    %26 = math.exp %25 : vector<96x256xf32>
    %cst_22 = arith.constant 1.000000e+00 : f32
    %27 = vector.broadcast %cst_22 : f32 to vector<96x256xf32>
    %28 = arith.addf %27, %26 : vector<96x256xf32>
    %29 = arith.divf %27, %28 : vector<96x256xf32>
    %30 = vector.extract_strided_slice %29 {offsets = [0, 0], sizes = [96, 128], strides = [1, 1]} : vector<96x256xf32> to vector<96x128xf32>
    %31 = vector.extract_strided_slice %29 {offsets = [0, 128], sizes = [96, 128], strides = [1, 1]} : vector<96x256xf32> to vector<96x128xf32>
    %c0_23 = arith.constant 0 : index
    %c0_24 = arith.constant 0 : index
    %32 = vector.load %arg8[%c0_23, %c0_24] : memref<128x128xbf16, #tpu.memory_space<vmem>>, vector<128x128xbf16>
    %cst_25 = arith.constant dense<0.000000e+00> : vector<96x128xf32>
    %33 = tpu.matmul %17, %32, %cst_25 {dimension_numbers = #tpu.dot_dimension_numbers<[1], [0], [0], [1], [0, 0, 1, 1], [], []>} : vector<96x128xbf16>, vector<128x128xbf16>, vector<96x128xf32> -> vector<96x128xf32>
    %34 = arith.mulf %31, %5 : vector<96x128xf32>
    %35 = arith.truncf %34 : vector<96x128xf32> to vector<96x128xbf16>
    %c0_26 = arith.constant 0 : index
    %c0_27 = arith.constant 0 : index
    %36 = vector.load %arg9[%c0_26, %c0_27] : memref<128x128xbf16, #tpu.memory_space<vmem>>, vector<128x128xbf16>
    %cst_28 = arith.constant dense<0.000000e+00> : vector<96x128xf32>
    %37 = tpu.matmul %35, %36, %cst_28 {dimension_numbers = #tpu.dot_dimension_numbers<[1], [0], [0], [1], [0, 0, 1, 1], [], []>} : vector<96x128xbf16>, vector<128x128xbf16>, vector<96x128xf32> -> vector<96x128xf32>
    %38 = arith.addf %33, %37 : vector<96x128xf32>
    %39 = vector.broadcast %8 : vector<1x128xf32> to vector<96x128xf32>
    %40 = arith.addf %38, %39 : vector<96x128xf32>
    %41 = math.tanh %40 : vector<96x128xf32>
    %cst_29 = arith.constant 1.000000e+00 : f32
    %42 = vector.broadcast %cst_29 : f32 to vector<96x128xf32>
    %43 = arith.subf %42, %30 : vector<96x128xf32>
    %44 = arith.mulf %43, %5 : vector<96x128xf32>
    %45 = arith.mulf %30, %41 : vector<96x128xf32>
    %46 = arith.addf %44, %45 : vector<96x128xf32>
    %c1_i32 = arith.constant 1 : i32
    %47 = arith.truncf %46 : vector<96x128xf32> to vector<96x128xbf16>
    %c0_30 = arith.constant 0 : index
    %c0_31 = arith.constant 0 : index
    %48 = vector.load %arg3[%c0_30, %c0_31] : memref<128x128xbf16, #tpu.memory_space<vmem>>, vector<128x128xbf16>
    %cst_32 = arith.constant dense<0.000000e+00> : vector<96x128xf32>
    %49 = tpu.matmul %47, %48, %cst_32 {dimension_numbers = #tpu.dot_dimension_numbers<[1], [0], [0], [1], [0, 0, 1, 1], [], []>} : vector<96x128xbf16>, vector<128x128xbf16>, vector<96x128xf32> -> vector<96x128xf32>
    %50 = vector.broadcast %6 : vector<1x128xf32> to vector<96x128xf32>
    %51 = arith.addf %49, %50 : vector<96x128xf32>
    %c0_33 = arith.constant 0 : index
    %c0_34 = arith.constant 0 : index
    %52 = vector.load %arg14[%c0_33, %c0_34] : memref<96x96xbf16, #tpu.memory_space<vmem>>, vector<96x96xbf16>
    %53 = arith.truncf %51 : vector<96x128xf32> to vector<96x128xbf16>
    %cst_35 = arith.constant dense<0.000000e+00> : vector<96x128xf32>
    %54 = tpu.matmul %52, %53, %cst_35 {dimension_numbers = #tpu.dot_dimension_numbers<[1], [0], [0], [1], [0, 0, 1, 1], [], []>} : vector<96x96xbf16>, vector<96x128xbf16>, vector<96x128xf32> -> vector<96x128xf32>
    %55 = arith.truncf %54 : vector<96x128xf32> to vector<96x128xbf16>
    %c0_36 = arith.constant 0 : index
    %c0_37 = arith.constant 0 : index
    %56 = vector.load %arg5[%c0_36, %c0_37] : memref<128x256xbf16, #tpu.memory_space<vmem>>, vector<128x256xbf16>
    %cst_38 = arith.constant dense<0.000000e+00> : vector<96x256xf32>
    %57 = tpu.matmul %55, %56, %cst_38 {dimension_numbers = #tpu.dot_dimension_numbers<[1], [0], [0], [1], [0, 0, 1, 1], [], []>} : vector<96x128xbf16>, vector<128x256xbf16>, vector<96x256xf32> -> vector<96x256xf32>
    %c0_39 = arith.constant 0 : index
    %c0_40 = arith.constant 0 : index
    %58 = vector.load %arg6[%c0_39, %c0_40] : memref<128x256xbf16, #tpu.memory_space<vmem>>, vector<128x256xbf16>
    %cst_41 = arith.constant dense<0.000000e+00> : vector<96x256xf32>
    %59 = tpu.matmul %47, %58, %cst_41 {dimension_numbers = #tpu.dot_dimension_numbers<[1], [0], [0], [1], [0, 0, 1, 1], [], []>} : vector<96x128xbf16>, vector<128x256xbf16>, vector<96x256xf32> -> vector<96x256xf32>
    %60 = arith.addf %57, %59 : vector<96x256xf32>
    %61 = vector.broadcast %7 : vector<1x256xf32> to vector<96x256xf32>
    %62 = arith.addf %60, %61 : vector<96x256xf32>
    %63 = arith.negf %62 : vector<96x256xf32>
    %64 = math.exp %63 : vector<96x256xf32>
    %cst_42 = arith.constant 1.000000e+00 : f32
    %65 = vector.broadcast %cst_42 : f32 to vector<96x256xf32>
    %66 = arith.addf %65, %64 : vector<96x256xf32>
    %67 = arith.divf %65, %66 : vector<96x256xf32>
    %68 = vector.extract_strided_slice %67 {offsets = [0, 0], sizes = [96, 128], strides = [1, 1]} : vector<96x256xf32> to vector<96x128xf32>
    %69 = vector.extract_strided_slice %67 {offsets = [0, 128], sizes = [96, 128], strides = [1, 1]} : vector<96x256xf32> to vector<96x128xf32>
    %c0_43 = arith.constant 0 : index
    %c0_44 = arith.constant 0 : index
    %70 = vector.load %arg8[%c0_43, %c0_44] : memref<128x128xbf16, #tpu.memory_space<vmem>>, vector<128x128xbf16>
    %cst_45 = arith.constant dense<0.000000e+00> : vector<96x128xf32>
    %71 = tpu.matmul %55, %70, %cst_45 {dimension_numbers = #tpu.dot_dimension_numbers<[1], [0], [0], [1], [0, 0, 1, 1], [], []>} : vector<96x128xbf16>, vector<128x128xbf16>, vector<96x128xf32> -> vector<96x128xf32>
    %72 = arith.mulf %69, %46 : vector<96x128xf32>
    %73 = arith.truncf %72 : vector<96x128xf32> to vector<96x128xbf16>
    %c0_46 = arith.constant 0 : index
    %c0_47 = arith.constant 0 : index
    %74 = vector.load %arg9[%c0_46, %c0_47] : memref<128x128xbf16, #tpu.memory_space<vmem>>, vector<128x128xbf16>
    %cst_48 = arith.constant dense<0.000000e+00> : vector<96x128xf32>
    %75 = tpu.matmul %73, %74, %cst_48 {dimension_numbers = #tpu.dot_dimension_numbers<[1], [0], [0], [1], [0, 0, 1, 1], [], []>} : vector<96x128xbf16>, vector<128x128xbf16>, vector<96x128xf32> -> vector<96x128xf32>
    %76 = arith.addf %71, %75 : vector<96x128xf32>
    %77 = vector.broadcast %8 : vector<1x128xf32> to vector<96x128xf32>
    %78 = arith.addf %76, %77 : vector<96x128xf32>
    %79 = math.tanh %78 : vector<96x128xf32>
    %cst_49 = arith.constant 1.000000e+00 : f32
    %80 = vector.broadcast %cst_49 : f32 to vector<96x128xf32>
    %81 = arith.subf %80, %68 : vector<96x128xf32>
    %82 = arith.mulf %81, %46 : vector<96x128xf32>
    %83 = arith.mulf %68, %79 : vector<96x128xf32>
    %84 = arith.addf %82, %83 : vector<96x128xf32>
    %c2_i32 = arith.constant 2 : i32
    %85 = arith.truncf %84 : vector<96x128xf32> to vector<96x128xbf16>
    %c0_50 = arith.constant 0 : index
    %c0_51 = arith.constant 0 : index
    %86 = vector.load %arg3[%c0_50, %c0_51] : memref<128x128xbf16, #tpu.memory_space<vmem>>, vector<128x128xbf16>
    %cst_52 = arith.constant dense<0.000000e+00> : vector<96x128xf32>
    %87 = tpu.matmul %85, %86, %cst_52 {dimension_numbers = #tpu.dot_dimension_numbers<[1], [0], [0], [1], [0, 0, 1, 1], [], []>} : vector<96x128xbf16>, vector<128x128xbf16>, vector<96x128xf32> -> vector<96x128xf32>
    %88 = vector.broadcast %6 : vector<1x128xf32> to vector<96x128xf32>
    %89 = arith.addf %87, %88 : vector<96x128xf32>
    %c0_53 = arith.constant 0 : index
    %c0_54 = arith.constant 0 : index
    %90 = vector.load %arg14[%c0_53, %c0_54] : memref<96x96xbf16, #tpu.memory_space<vmem>>, vector<96x96xbf16>
    %91 = arith.truncf %89 : vector<96x128xf32> to vector<96x128xbf16>
    %cst_55 = arith.constant dense<0.000000e+00> : vector<96x128xf32>
    %92 = tpu.matmul %90, %91, %cst_55 {dimension_numbers = #tpu.dot_dimension_numbers<[1], [0], [0], [1], [0, 0, 1, 1], [], []>} : vector<96x96xbf16>, vector<96x128xbf16>, vector<96x128xf32> -> vector<96x128xf32>
    %93 = arith.truncf %92 : vector<96x128xf32> to vector<96x128xbf16>
    %c0_56 = arith.constant 0 : index
    %c0_57 = arith.constant 0 : index
    %94 = vector.load %arg5[%c0_56, %c0_57] : memref<128x256xbf16, #tpu.memory_space<vmem>>, vector<128x256xbf16>
    %cst_58 = arith.constant dense<0.000000e+00> : vector<96x256xf32>
    %95 = tpu.matmul %93, %94, %cst_58 {dimension_numbers = #tpu.dot_dimension_numbers<[1], [0], [0], [1], [0, 0, 1, 1], [], []>} : vector<96x128xbf16>, vector<128x256xbf16>, vector<96x256xf32> -> vector<96x256xf32>
    %c0_59 = arith.constant 0 : index
    %c0_60 = arith.constant 0 : index
    %96 = vector.load %arg6[%c0_59, %c0_60] : memref<128x256xbf16, #tpu.memory_space<vmem>>, vector<128x256xbf16>
    %cst_61 = arith.constant dense<0.000000e+00> : vector<96x256xf32>
    %97 = tpu.matmul %85, %96, %cst_61 {dimension_numbers = #tpu.dot_dimension_numbers<[1], [0], [0], [1], [0, 0, 1, 1], [], []>} : vector<96x128xbf16>, vector<128x256xbf16>, vector<96x256xf32> -> vector<96x256xf32>
    %98 = arith.addf %95, %97 : vector<96x256xf32>
    %99 = vector.broadcast %7 : vector<1x256xf32> to vector<96x256xf32>
    %100 = arith.addf %98, %99 : vector<96x256xf32>
    %101 = arith.negf %100 : vector<96x256xf32>
    %102 = math.exp %101 : vector<96x256xf32>
    %cst_62 = arith.constant 1.000000e+00 : f32
    %103 = vector.broadcast %cst_62 : f32 to vector<96x256xf32>
    %104 = arith.addf %103, %102 : vector<96x256xf32>
    %105 = arith.divf %103, %104 : vector<96x256xf32>
    %106 = vector.extract_strided_slice %105 {offsets = [0, 0], sizes = [96, 128], strides = [1, 1]} : vector<96x256xf32> to vector<96x128xf32>
    %107 = vector.extract_strided_slice %105 {offsets = [0, 128], sizes = [96, 128], strides = [1, 1]} : vector<96x256xf32> to vector<96x128xf32>
    %c0_63 = arith.constant 0 : index
    %c0_64 = arith.constant 0 : index
    %108 = vector.load %arg8[%c0_63, %c0_64] : memref<128x128xbf16, #tpu.memory_space<vmem>>, vector<128x128xbf16>
    %cst_65 = arith.constant dense<0.000000e+00> : vector<96x128xf32>
    %109 = tpu.matmul %93, %108, %cst_65 {dimension_numbers = #tpu.dot_dimension_numbers<[1], [0], [0], [1], [0, 0, 1, 1], [], []>} : vector<96x128xbf16>, vector<128x128xbf16>, vector<96x128xf32> -> vector<96x128xf32>
    %110 = arith.mulf %107, %84 : vector<96x128xf32>
    %111 = arith.truncf %110 : vector<96x128xf32> to vector<96x128xbf16>
    %c0_66 = arith.constant 0 : index
    %c0_67 = arith.constant 0 : index
    %112 = vector.load %arg9[%c0_66, %c0_67] : memref<128x128xbf16, #tpu.memory_space<vmem>>, vector<128x128xbf16>
    %cst_68 = arith.constant dense<0.000000e+00> : vector<96x128xf32>
    %113 = tpu.matmul %111, %112, %cst_68 {dimension_numbers = #tpu.dot_dimension_numbers<[1], [0], [0], [1], [0, 0, 1, 1], [], []>} : vector<96x128xbf16>, vector<128x128xbf16>, vector<96x128xf32> -> vector<96x128xf32>
    %114 = arith.addf %109, %113 : vector<96x128xf32>
    %115 = vector.broadcast %8 : vector<1x128xf32> to vector<96x128xf32>
    %116 = arith.addf %114, %115 : vector<96x128xf32>
    %117 = math.tanh %116 : vector<96x128xf32>
    %cst_69 = arith.constant 1.000000e+00 : f32
    %118 = vector.broadcast %cst_69 : f32 to vector<96x128xf32>
    %119 = arith.subf %118, %106 : vector<96x128xf32>
    %120 = arith.mulf %119, %84 : vector<96x128xf32>
    %121 = arith.mulf %106, %117 : vector<96x128xf32>
    %122 = arith.addf %120, %121 : vector<96x128xf32>
    %123 = arith.truncf %122 : vector<96x128xf32> to vector<96x128xbf16>
    %c0_70 = arith.constant 0 : index
    %c0_71 = arith.constant 0 : index
    %124 = vector.load %arg11[%c0_70, %c0_71] : memref<128x128xbf16, #tpu.memory_space<vmem>>, vector<128x128xbf16>
    %cst_72 = arith.constant dense<0.000000e+00> : vector<96x128xf32>
    %125 = tpu.matmul %123, %124, %cst_72 {dimension_numbers = #tpu.dot_dimension_numbers<[1], [0], [0], [1], [0, 0, 1, 1], [], []>} : vector<96x128xbf16>, vector<128x128xbf16>, vector<96x128xf32> -> vector<96x128xf32>
    %c0_73 = arith.constant 0 : index
    %c0_74 = arith.constant 0 : index
    %126 = vector.load %arg12[%c0_73, %c0_74] : memref<1x128xf32, #tpu.memory_space<vmem>>, vector<1x128xf32>
    %127 = vector.broadcast %126 : vector<1x128xf32> to vector<96x128xf32>
    %128 = arith.addf %125, %127 : vector<96x128xf32>
    %c0_75 = arith.constant 0 : index
    %c0_76 = arith.constant 0 : index
    %129 = vector.load %arg13[%c0_75, %c0_76] : memref<96x128xf32, #tpu.memory_space<vmem>>, vector<96x128xf32>
    tpu.vector_store %arg13[%c0_75, %c0_76], %128 {strides = array<i32>} : memref<96x128xf32, #tpu.memory_space<vmem>>, vector<96x128xf32>,
    return
  }
  func.func @transform_0(%arg0: i32) -> (i32, i32) {
    %c0_i32 = arith.constant 0 : i32
    %c0_i32_0 = arith.constant 0 : i32
    return %arg0, %c0_i32 : i32, i32
  }
  func.func @transform_1(%arg0: i32) -> (i32, i32) {
    %c0_i32 = arith.constant 0 : i32
    %c0_i32_0 = arith.constant 0 : i32
    return %arg0, %c0_i32 : i32, i32
  }
  func.func @transform_2(%arg0: i32) -> (i32, i32) {
    %c0_i32 = arith.constant 0 : i32
    %c0_i32_0 = arith.constant 0 : i32
    %c0_i32_1 = arith.constant 0 : i32
    return %c0_i32, %c0_i32_0 : i32, i32
  }
  func.func @transform_3(%arg0: i32) -> (i32, i32) {
    %c0_i32 = arith.constant 0 : i32
    %c0_i32_0 = arith.constant 0 : i32
    %c0_i32_1 = arith.constant 0 : i32
    return %c0_i32, %c0_i32_0 : i32, i32
  }
  func.func @transform_4(%arg0: i32) -> (i32, i32) {
    %c0_i32 = arith.constant 0 : i32
    %c0_i32_0 = arith.constant 0 : i32
    %c0_i32_1 = arith.constant 0 : i32
    return %c0_i32, %c0_i32_0 : i32, i32
  }
  func.func @transform_5(%arg0: i32) -> (i32, i32) {
    %c0_i32 = arith.constant 0 : i32
    %c0_i32_0 = arith.constant 0 : i32
    %c0_i32_1 = arith.constant 0 : i32
    return %c0_i32, %c0_i32_0 : i32, i32
  }
  func.func @transform_6(%arg0: i32) -> (i32, i32) {
    %c0_i32 = arith.constant 0 : i32
    %c0_i32_0 = arith.constant 0 : i32
    %c0_i32_1 = arith.constant 0 : i32
    return %c0_i32, %c0_i32_0 : i32, i32
  }
  func.func @transform_7(%arg0: i32) -> (i32, i32) {
    %c0_i32 = arith.constant 0 : i32
    %c0_i32_0 = arith.constant 0 : i32
    %c0_i32_1 = arith.constant 0 : i32
    return %c0_i32, %c0_i32_0 : i32, i32
  }
  func.func @transform_8(%arg0: i32) -> (i32, i32) {
    %c0_i32 = arith.constant 0 : i32
    %c0_i32_0 = arith.constant 0 : i32
    %c0_i32_1 = arith.constant 0 : i32
    return %c0_i32, %c0_i32_0 : i32, i32
  }
  func.func @transform_9(%arg0: i32) -> (i32, i32) {
    %c0_i32 = arith.constant 0 : i32
    %c0_i32_0 = arith.constant 0 : i32
    %c0_i32_1 = arith.constant 0 : i32
    return %c0_i32, %c0_i32_0 : i32, i32
  }
  func.func @transform_10(%arg0: i32) -> (i32, i32) {
    %c0_i32 = arith.constant 0 : i32
    %c0_i32_0 = arith.constant 0 : i32
    %c0_i32_1 = arith.constant 0 : i32
    return %c0_i32, %c0_i32_0 : i32, i32
  }
  func.func @transform_11(%arg0: i32) -> (i32, i32) {
    %c0_i32 = arith.constant 0 : i32
    %c0_i32_0 = arith.constant 0 : i32
    %c0_i32_1 = arith.constant 0 : i32
    return %c0_i32, %c0_i32_0 : i32, i32
  }
  func.func @transform_12(%arg0: i32) -> (i32, i32) {
    %c0_i32 = arith.constant 0 : i32
    %c0_i32_0 = arith.constant 0 : i32
    return %arg0, %c0_i32 : i32, i32
  }
}

</mosaic_0001>

<llo_original>
// kernel: tpu_custom_call.1
$region0: #{tpu_custom_call.1}
  #allocation0 [shape = 'u32[]', space=smem, size = 0x4, offset = 0x4, fixed_abs, tag = 'smem constant byte address 0x4 - core index']
  #allocation1 [shape = 'u32[144,128]{1,0:T(1,128)}', space=vmem, size = 0x12000, scoped, tag = 'internal scratch']
  #allocation2 [shape = 'bf16[96,96]{1,0:T(16,128)(2,1)}', space=vmem, size = 0x6000, scoped, tag = 'scratch operand']
  %s0 = inlined_call_operand.hbm [shape: bf16[96,128], index: 0, kind: input, shape index: {}]
  %s1 = inlined_call_operand.hbm [shape: s8[96,96], index: 1, kind: input, shape index: {}]
  %s2 = inlined_call_operand.hbm [shape: bf16[128,128], index: 2, kind: input, shape index: {}]
  %s3 = inlined_call_operand.vmem [shape: f32[1,128], index: 3, kind: input, shape index: {}]
  %s4 = inlined_call_operand.hbm [shape: bf16[128,256], index: 4, kind: input, shape index: {}]
  %s5 = inlined_call_operand.hbm [shape: bf16[128,256], index: 5, kind: input, shape index: {}]
  %s6 = inlined_call_operand.vmem [shape: f32[1,256], index: 6, kind: input, shape index: {}]
  %s7 = inlined_call_operand.hbm [shape: bf16[128,128], index: 7, kind: input, shape index: {}]
  %s8 = inlined_call_operand.hbm [shape: bf16[128,128], index: 8, kind: input, shape index: {}]
  %s9 = inlined_call_operand.vmem [shape: f32[1,128], index: 9, kind: input, shape index: {}]
  %s10 = inlined_call_operand.hbm [shape: bf16[128,128], index: 10, kind: input, shape index: {}]
  %s11 = inlined_call_operand.vmem [shape: f32[1,128], index: 11, kind: input, shape index: {}]
  %s12 = inlined_call_operand.hbm [shape: f32[96,128], index: 12, kind: output, shape index: {}]
  %s13 = sld [smem:[#allocation0]]
  $region90: #{tpu_custom_call.1} parent=0
    _
  %s15 = ssub.s32 1, %s13
  %s16 = scalar_select 0, %s15, %s13
  $region1: #{tpu_custom_call.1} parent=0
    #allocation3 [shape = 'u8[24576]{0}', space=vmem, size = 0x6000, scoped, tag = 'input window, operand 0, single buffered']
    #allocation4 [shape = 's32[1]{0}', space=sflag, size = 0x4, scoped, tag = 'scoped memory for tpu_custom_call.1']
    #allocation5 [shape = 's32[1]{0}', space=sflag, size = 0x4, scoped, tag = 'scoped memory for tpu_custom_call.1']
    #allocation6 [shape = 'u8[12288]{0}', space=vmem, size = 0x3000, scoped, tag = 'input window, operand 1, single buffered']
    #allocation7 [shape = 's32[1]{0}', space=sflag, size = 0x4, scoped, tag = 'scoped memory for tpu_custom_call.1']
    #allocation8 [shape = 'u8[32768]{0}', space=vmem, size = 0x8000, scoped, tag = 'input window, operand 2, single buffered']
    #allocation9 [shape = 'u8[65536]{0}', space=vmem, size = 0x10000, scoped, tag = 'input window, operand 4, single buffered']
    #allocation10 [shape = 's32[1]{0}', space=sflag, size = 0x4, scoped, tag = 'scoped memory for tpu_custom_call.1']
    #allocation11 [shape = 'u8[65536]{0}', space=vmem, size = 0x10000, scoped, tag = 'input window, operand 5, single buffered']
    #allocation12 [shape = 'u8[32768]{0}', space=vmem, size = 0x8000, scoped, tag = 'input window, operand 7, single buffered']
    #allocation13 [shape = 's32[1]{0}', space=sflag, size = 0x4, scoped, tag = 'scoped memory for tpu_custom_call.1']
    #allocation14 [shape = 'u8[32768]{0}', space=vmem, size = 0x8000, scoped, tag = 'input window, operand 8, single buffered']
    #allocation15 [shape = 'u8[32768]{0}', space=vmem, size = 0x8000, scoped, tag = 'input window, operand 10, single buffered']
    #allocation16 [shape = 's32[1]{0}', space=sflag, size = 0x4, scoped, tag = 'scoped memory for tpu_custom_call.1']
    #allocation17 [shape = 'u8[49152]{0}', space=vmem, size = 0xc000, scoped, tag = 'output window, operand 0, single buffered']
    %17 = vsyncpa [#allocation4], 0
    %18 = vsyncpa [#allocation7], 0
    %19 = vsyncpa [#allocation10], 0
    %20 = vsyncpa [#allocation13], 0
    %21 = vsyncpa [#allocation16], 0
    %22 = vsyncpa [#allocation5], 0
    // Predicated region
    $region2: #{tpu_custom_call.1} parent=1 // pred_check
      _
    $region3: #{tpu_custom_call.1} parent=1 // pred_check_branch
      %24 = sbr.rel (0) target = $region5
    $region4: #{tpu_custom_call.1} parent=1 // pred_region
      %s26 = ssub.s32 768, 768
      %27 = vsyncadd [#allocation4], %s26
      %s28 = sshll.u32 [#allocation3], 4
      %s29 = int_to_ptr.vmem [resolvable:$true] %s28
      %34 = dma.hbm_to_vmem [thread:$0]  %s0, 768, %s29, [#allocation4], 64, 64, 4
    $region5: #{tpu_custom_call.1} parent=1 // pred_fallthru
      _
    // Predicated region
    $region6: #{tpu_custom_call.1} parent=1 // pred_check
      _
    $region7: #{tpu_custom_call.1} parent=1 // pred_check_branch
      %36 = sbr.rel (0) target = $region9
    $region8: #{tpu_custom_call.1} parent=1 // pred_region
      %s38 = ssub.s32 384, 384
      %39 = vsyncadd [#allocation7], %s38
      %s40 = sshll.u32 [#allocation6], 4
      %s41 = int_to_ptr.vmem [resolvable:$true] %s40
      %46 = dma.hbm_to_vmem [thread:$0]  %s1, 384, %s41, [#allocation7], 128, 128, 8
    $region9: #{tpu_custom_call.1} parent=1 // pred_fallthru
      _
    // Predicated region
    $region10: #{tpu_custom_call.1} parent=1 // pred_check
      _
    $region11: #{tpu_custom_call.1} parent=1 // pred_check_branch
      %48 = sbr.rel (0) target = $region13
    $region12: #{tpu_custom_call.1} parent=1 // pred_region
      %s50 = ssub.s32 1024, 1024
      %51 = vsyncadd [#allocation7], %s50
      %s52 = sshll.u32 [#allocation8], 4
      %s53 = int_to_ptr.vmem [resolvable:$true] %s52
      %58 = dma.hbm_to_vmem [thread:$0]  %s2, 1024, %s53, [#allocation7], 64, 64, 4
    $region13: #{tpu_custom_call.1} parent=1 // pred_fallthru
      _
    // Predicated region
    $region14: #{tpu_custom_call.1} parent=1 // pred_check
      _
    $region15: #{tpu_custom_call.1} parent=1 // pred_check_branch
      %60 = sbr.rel (0) target = $region17
    $region16: #{tpu_custom_call.1} parent=1 // pred_region
      _
    $region17: #{tpu_custom_call.1} parent=1 // pred_fallthru
      _
    // Predicated region
    $region18: #{tpu_custom_call.1} parent=1 // pred_check
      _
    $region19: #{tpu_custom_call.1} parent=1 // pred_check_branch
      %62 = sbr.rel (0) target = $region21
    $region20: #{tpu_custom_call.1} parent=1 // pred_region
      %s64 = ssub.s32 2048, 2048
      %65 = vsyncadd [#allocation10], %s64
      %s66 = sshll.u32 [#allocation9], 4
      %s67 = int_to_ptr.vmem [resolvable:$true] %s66
      %72 = dma.hbm_to_vmem [thread:$0]  %s4, 2048, %s67, [#allocation10], 128, 128, 8
    $region21: #{tpu_custom_call.1} parent=1 // pred_fallthru
      _
    // Predicated region
    $region22: #{tpu_custom_call.1} parent=1 // pred_check
      _
    $region23: #{tpu_custom_call.1} parent=1 // pred_check_branch
      %74 = sbr.rel (0) target = $region25
    $region24: #{tpu_custom_call.1} parent=1 // pred_region
      %s76 = ssub.s32 2048, 2048
      %77 = vsyncadd [#allocation10], %s76
      %s78 = sshll.u32 [#allocation11], 4
      %s79 = int_to_ptr.vmem [resolvable:$true] %s78
      %84 = dma.hbm_to_vmem [thread:$0]  %s5, 2048, %s79, [#allocation10], 128, 128, 8
    $region25: #{tpu_custom_call.1} parent=1 // pred_fallthru
      _
    // Predicated region
    $region26: #{tpu_custom_call.1} parent=1 // pred_check
      _
    $region27: #{tpu_custom_call.1} parent=1 // pred_check_branch
      %86 = sbr.rel (0) target = $region29
    $region28: #{tpu_custom_call.1} parent=1 // pred_region
      _
    $region29: #{tpu_custom_call.1} parent=1 // pred_fallthru
      _
    // Predicated region
    $region30: #{tpu_custom_call.1} parent=1 // pred_check
      _
    $region31: #{tpu_custom_call.1} parent=1 // pred_check_branch
      %88 = sbr.rel (0) target = $region33
    $region32: #{tpu_custom_call.1} parent=1 // pred_region
      %s90 = ssub.s32 1024, 1024
      %91 = vsyncadd [#allocation13], %s90
      %s92 = sshll.u32 [#allocation12], 4
      %s93 = int_to_ptr.vmem [resolvable:$true] %s92
      %98 = dma.hbm_to_vmem [thread:$0]  %s7, 1024, %s93, [#allocation13], 64, 64, 4
    $region33: #{tpu_custom_call.1} parent=1 // pred_fallthru
      _
    // Predicated region
    $region34: #{tpu_custom_call.1} parent=1 // pred_check
      _
    $region35: #{tpu_custom_call.1} parent=1 // pred_check_branch
      %100 = sbr.rel (0) target = $region37
    $region36: #{tpu_custom_call.1} parent=1 // pred_region
      %s102 = ssub.s32 1024, 1024
      %103 = vsyncadd [#allocation13], %s102
      %s104 = sshll.u32 [#allocation14], 4
      %s105 = int_to_ptr.vmem [resolvable:$true] %s104
      %110 = dma.hbm_to_vmem [thread:$0]  %s8, 1024, %s105, [#allocation13], 64, 64, 4
    $region37: #{tpu_custom_call.1} parent=1 // pred_fallthru
      _
    // Predicated region
    $region38: #{tpu_custom_call.1} parent=1 // pred_check
      _
    $region39: #{tpu_custom_call.1} parent=1 // pred_check_branch
      %112 = sbr.rel (0) target = $region41
    $region40: #{tpu_custom_call.1} parent=1 // pred_region
      _
    $region41: #{tpu_custom_call.1} parent=1 // pred_fallthru
      _
    // Predicated region
    $region42: #{tpu_custom_call.1} parent=1 // pred_check
      _
    $region43: #{tpu_custom_call.1} parent=1 // pred_check_branch
      %114 = sbr.rel (0) target = $region45
    $region44: #{tpu_custom_call.1} parent=1 // pred_region
      %s116 = ssub.s32 1024, 1024
      %117 = vsyncadd [#allocation16], %s116
      %s118 = sshll.u32 [#allocation15], 4
      %s119 = int_to_ptr.vmem [resolvable:$true] %s118
      %124 = dma.hbm_to_vmem [thread:$0]  %s10, 1024, %s119, [#allocation16], 64, 64, 4
    $region45: #{tpu_custom_call.1} parent=1 // pred_fallthru
      _
    // Predicated region
    $region46: #{tpu_custom_call.1} parent=1 // pred_check
      _
    $region47: #{tpu_custom_call.1} parent=1 // pred_check_branch
      %126 = sbr.rel (0) target = $region49
    $region48: #{tpu_custom_call.1} parent=1 // pred_region
      _
    $region49: #{tpu_custom_call.1} parent=1 // pred_fallthru
      _
    // Predicated region
    $region50: #{tpu_custom_call.1} parent=1 // pred_check
      _
    $region51: #{tpu_custom_call.1} parent=1 // pred_check_branch
      %128 = sbr.rel (0) target = $region53
    $region52: #{tpu_custom_call.1} parent=1 // pred_region
      %129 = dma.done [#allocation4], 768
    $region53: #{tpu_custom_call.1} parent=1 // pred_fallthru
      _
    // Predicated region
    $region54: #{tpu_custom_call.1} parent=1 // pred_check
      _
    $region55: #{tpu_custom_call.1} parent=1 // pred_check_branch
      %131 = sbr.rel (0) target = $region57
    $region56: #{tpu_custom_call.1} parent=1 // pred_region
      %132 = dma.done [#allocation7], 384
    $region57: #{tpu_custom_call.1} parent=1 // pred_fallthru
      _
    // Predicated region
    $region58: #{tpu_custom_call.1} parent=1 // pred_check
      _
    $region59: #{tpu_custom_call.1} parent=1 // pred_check_branch
      %134 = sbr.rel (0) target = $region61
    $region60: #{tpu_custom_call.1} parent=1 // pred_region
      %135 = dma.done [#allocation7], 1024
    $region61: #{tpu_custom_call.1} parent=1 // pred_fallthru
      _
    // Predicated region
    $region62: #{tpu_custom_call.1} parent=1 // pred_check
      _
    $region63: #{tpu_custom_call.1} parent=1 // pred_check_branch
      %137 = sbr.rel (0) target = $region65
    $region64: #{tpu_custom_call.1} parent=1 // pred_region
      %138 = dma.done [#allocation10], 2048
    $region65: #{tpu_custom_call.1} parent=1 // pred_fallthru
      _
    // Predicated region
    $region66: #{tpu_custom_call.1} parent=1 // pred_check
      _
    $region67: #{tpu_custom_call.1} parent=1 // pred_check_branch
      %140 = sbr.rel (0) target = $region69
    $region68: #{tpu_custom_call.1} parent=1 // pred_region
      %141 = dma.done [#allocation10], 2048
    $region69: #{tpu_custom_call.1} parent=1 // pred_fallthru
      _
    // Predicated region
    $region70: #{tpu_custom_call.1} parent=1 // pred_check
      _
    $region71: #{tpu_custom_call.1} parent=1 // pred_check_branch
      %143 = sbr.rel (0) target = $region73
    $region72: #{tpu_custom_call.1} parent=1 // pred_region
      %144 = dma.done [#allocation13], 1024
    $region73: #{tpu_custom_call.1} parent=1 // pred_fallthru
      _
    // Predicated region
    $region74: #{tpu_custom_call.1} parent=1 // pred_check
      _
    $region75: #{tpu_custom_call.1} parent=1 // pred_check_branch
      %146 = sbr.rel (0) target = $region77
    $region76: #{tpu_custom_call.1} parent=1 // pred_region
      %147 = dma.done [#allocation13], 1024
    $region77: #{tpu_custom_call.1} parent=1 // pred_fallthru
      _
    // Predicated region
    $region78: #{tpu_custom_call.1} parent=1 // pred_check
      _
    $region79: #{tpu_custom_call.1} parent=1 // pred_check_branch
      %149 = sbr.rel (0) target = $region81
    $region80: #{tpu_custom_call.1} parent=1 // pred_region
      %150 = dma.done [#allocation16], 1024
    $region81: #{tpu_custom_call.1} parent=1 // pred_fallthru
      _
    %v152 = vld [vmem:[#allocation6] sm:$0xff]
    %v153 = vld [vmem:[#allocation6 + $0x8] sm:$0xff]
    %v154 = vld [vmem:[#allocation6 + $0x10] sm:$0xff]
    %v155 = vunpack.c.l.s8.bf16 %v152
    %v156 = vunpack.c.h.s8.bf16 %v152
    %v157 = vunpack.c.l.s8.bf16 %v153
    %v158 = vunpack.c.h.s8.bf16 %v153
    %v159 = vunpack.c.l.s8.bf16 %v154
    %v160 = vunpack.c.h.s8.bf16 %v154
    %vm161 = vcmask 785408
    %162 = vst.msk [vmem:[#allocation2] sm:$0xff] %vm161, %v155
    %163 = vst.msk [vmem:[#allocation2 + $0x8] sm:$0xff] %vm161, %v156
    %164 = vst.msk [vmem:[#allocation2 + $0x10] sm:$0xff] %vm161, %v157
    %165 = vst.msk [vmem:[#allocation2 + $0x18] sm:$0xff] %vm161, %v158
    %166 = vst.msk [vmem:[#allocation2 + $0x20] sm:$0xff] %vm161, %v159
    %167 = vst.msk [vmem:[#allocation2 + $0x28] sm:$0xff] %vm161, %v160
    %v168 = vld [vmem:[#allocation3] sm:$0xf]
    %v169 = vld [vmem:[#allocation3 + $0x4] sm:$0xf]
    %v170 = vld [vmem:[#allocation3 + $0x8] sm:$0xf]
    %v171 = vld [vmem:[#allocation3 + $0xc] sm:$0xf]
    %v172 = vld [vmem:[#allocation3 + $0x10] sm:$0xf]
    %v173 = vld [vmem:[#allocation3 + $0x14] sm:$0xf]
    %v174 = vld [vmem:[#allocation3 + $0x18] sm:$0xf]
    %v175 = vld [vmem:[#allocation3 + $0x1c] sm:$0xf]
    %v176 = vld [vmem:[#allocation3 + $0x20] sm:$0xf]
    %v177 = vld [vmem:[#allocation3 + $0x24] sm:$0xf]
    %v178 = vld [vmem:[#allocation3 + $0x28] sm:$0xf]
    %v179 = vld [vmem:[#allocation3 + $0x2c] sm:$0xf]
    %v180 = vunpack.c.l.bf16 %v168
    %v181 = vunpack.c.l.bf16 %v169
    %v182 = vunpack.c.l.bf16 %v170
    %v183 = vunpack.c.l.bf16 %v171
    %v184 = vunpack.c.l.bf16 %v172
    %v185 = vunpack.c.l.bf16 %v173
    %v186 = vunpack.c.l.bf16 %v174
    %v187 = vunpack.c.l.bf16 %v175
    %v188 = vunpack.c.l.bf16 %v176
    %v189 = vunpack.c.l.bf16 %v177
    %v190 = vunpack.c.l.bf16 %v178
    %v191 = vunpack.c.l.bf16 %v179
    %v192 = vld [vmem:[%s3] sm:$0x1]
    %v193 = vld [vmem:[%s6] sm:$0x3]
    %v194 = vld [vmem:[%s9] sm:$0x1]
    %v195 = vld [vmem:[#allocation8] sm:$0xf]
    %v196 = vld [vmem:[#allocation8 + $0x4] sm:$0xf]
    %v197 = vld [vmem:[#allocation8 + $0x8] sm:$0xf]
    %v198 = vld [vmem:[#allocation8 + $0xc] sm:$0xf]
    %v199 = vld [vmem:[#allocation8 + $0x10] sm:$0xf]
    %v200 = vld [vmem:[#allocation8 + $0x14] sm:$0xf]
    %v201 = vld [vmem:[#allocation8 + $0x18] sm:$0xf]
    %v202 = vld [vmem:[#allocation8 + $0x1c] sm:$0xf]
    %v203 = vld [vmem:[#allocation8 + $0x20] sm:$0xf]
    %v204 = vld [vmem:[#allocation8 + $0x24] sm:$0xf]
    %v205 = vld [vmem:[#allocation8 + $0x28] sm:$0xf]
    %v206 = vld [vmem:[#allocation8 + $0x2c] sm:$0xf]
    %v207 = vld [vmem:[#allocation8 + $0x30] sm:$0xf]
    %v208 = vld [vmem:[#allocation8 + $0x34] sm:$0xf]
    %v209 = vld [vmem:[#allocation8 + $0x38] sm:$0xf]
    %v210 = vld [vmem:[#allocation8 + $0x3c] sm:$0xf]
    %v212 = vlaneseq
    %v213 = vshrl.u32 %v212, 7
    %v214 = vsub.s32 0, %v213
    %v215 = vrot.slane %v192, %v214
    %v229 = vunpack.c.l.b16 %v168
    %v230 = vunpack.c.l.b16 %v169
    %v231 = vunpack.c.l.b16 %v170
    %v232 = vunpack.c.l.b16 %v171
    %v233 = vunpack.c.l.b16 %v172
    %v234 = vunpack.c.l.b16 %v173
    %v235 = vunpack.c.l.b16 %v174
    %v236 = vunpack.c.l.b16 %v175
    %v237 = vunpack.c.l.b16 %v176
    %v238 = vunpack.c.l.b16 %v177
    %v239 = vunpack.c.l.b16 %v178
    %v240 = vunpack.c.l.b16 %v179
    %v241 = vpack.c.b16 %v230, %v229
    %v242 = vpack.c.b16 %v232, %v231
    %v243 = vpack.c.b16 %v234, %v233
    %v244 = vpack.c.b16 %v236, %v235
    %v245 = vpack.c.b16 %v238, %v237
    %v246 = vpack.c.b16 %v240, %v239
    %v269 = vunpack.c.l.b16 %v195
    %v270 = vunpack.c.l.b16 %v196
    %v271 = vunpack.c.l.b16 %v197
    %v272 = vunpack.c.l.b16 %v198
    %v273 = vunpack.c.l.b16 %v199
    %v274 = vunpack.c.l.b16 %v200
    %v275 = vunpack.c.l.b16 %v201
    %v276 = vunpack.c.l.b16 %v202
    %v277 = vunpack.c.l.b16 %v203
    %v278 = vunpack.c.l.b16 %v204
    %v279 = vunpack.c.l.b16 %v205
    %v280 = vunpack.c.l.b16 %v206
    %v281 = vunpack.c.l.b16 %v207
    %v282 = vunpack.c.l.b16 %v208
    %v283 = vunpack.c.l.b16 %v209
    %v284 = vunpack.c.l.b16 %v210
    %v285 = vpack.c.b16 %v270, %v269
    %v286 = vpack.c.b16 %v272, %v271
    %v287 = vpack.c.b16 %v274, %v273
    %v288 = vpack.c.b16 %v276, %v275
    %v289 = vpack.c.b16 %v278, %v277
    %v290 = vpack.c.b16 %v280, %v279
    %v291 = vpack.c.b16 %v282, %v281
    %v292 = vpack.c.b16 %v284, %v283
    %301 = vmatprep.subr.bf16.mxu0 0
    %302 = vmatpush1.bf16.msra.mxu0 %v285
    %303 = vmatprep.subr.bf16.mxu0 0
    %304 = vmatpush1.bf16.msra.mxu0 %v286
    %305 = vmatprep.subr.bf16.mxu0 0
    %306 = vmatpush1.bf16.msra.mxu0 %v287
    %307 = vmatprep.subr.bf16.mxu0 0
    %308 = vmatpush1.bf16.msra.mxu0 %v288
    %309 = vmatprep.subr.bf16.mxu0 0
    %310 = vmatpush1.bf16.msra.mxu0 %v289
    %311 = vmatprep.subr.bf16.mxu0 0
    %312 = vmatpush1.bf16.msra.mxu0 %v290
    %313 = vmatprep.subr.bf16.mxu0 0
    %314 = vmatpush1.bf16.msra.mxu0 %v291
    %315 = vmatprep.subr.bf16.mxu0 0
    %316 = vmatpush1.bf16.msra.mxu0 %v292
    %317 = vmatprep.subr.bf16.mxu0 0
    %318 = vmatpush1.bf16.msra.mxu0 0
    %319 = vmatprep.subr.bf16.mxu0 0
    %320 = vmatpush1.bf16.msra.mxu0 0
    %321 = vmatprep.subr.bf16.mxu0 0
    %322 = vmatpush1.bf16.msra.mxu0 0
    %323 = vmatprep.subr.bf16.mxu0 0
    %324 = vmatpush1.bf16.msra.mxu0 0
    %325 = vmatprep.subr.bf16.mxu0 0
    %326 = vmatpush1.bf16.msra.mxu0 0
    %327 = vmatprep.subr.bf16.mxu0 0
    %328 = vmatpush1.bf16.msra.mxu0 0
    %329 = vmatprep.subr.bf16.mxu0 0
    %330 = vmatpush1.bf16.msra.mxu0 0
    %331 = vmatprep.subr.bf16.mxu0 0
    %332 = vmatpush1.bf16.msra.mxu0 0
    %333 = vmatprep.mubr.bf16.mxu0 0
    %334 = vmatmul.mubr.bf16.gmra.mrb[0].mxu0 %v241
    %v335 = vpop.f32.mrb[0].mxu0
    %v336 = vadd.f32 %v215, %v335
    %v337 = vpop.f32.mrb[0].mxu0
    %v338 = vpop.f32.mrb[0].mxu0
    %v339 = vadd.f32 %v215, %v338
    %v340 = vpop.f32.mrb[0].mxu0
    %341 = vmatprep.mubr.bf16.mxu0 0
    %342 = vmatmul.mubr.bf16.gmra.mrb[0].mxu0 %v242
    %v343 = vpop.f32.mrb[0].mxu0
    %v344 = vadd.f32 %v215, %v343
    %v345 = vpop.f32.mrb[0].mxu0
    %v346 = vpop.f32.mrb[0].mxu0
    %v347 = vadd.f32 %v215, %v346
    %v348 = vpop.f32.mrb[0].mxu0
    %349 = vmatprep.mubr.bf16.mxu0 0
    %350 = vmatmul.mubr.bf16.gmra.mrb[0].mxu0 %v243
    %v351 = vpop.f32.mrb[0].mxu0
    %v352 = vadd.f32 %v215, %v351
    %v353 = vpop.f32.mrb[0].mxu0
    %v354 = vpop.f32.mrb[0].mxu0
    %v355 = vadd.f32 %v215, %v354
    %v356 = vpop.f32.mrb[0].mxu0
    %357 = vmatprep.mubr.bf16.mxu0 0
    %358 = vmatmul.mubr.bf16.gmra.mrb[0].mxu0 %v244
    %v359 = vpop.f32.mrb[0].mxu0
    %v360 = vadd.f32 %v215, %v359
    %v361 = vpop.f32.mrb[0].mxu0
    %v362 = vpop.f32.mrb[0].mxu0
    %v363 = vadd.f32 %v215, %v362
    %v364 = vpop.f32.mrb[0].mxu0
    %365 = vmatprep.mubr.bf16.mxu0 0
    %366 = vmatmul.mubr.bf16.gmra.mrb[0].mxu0 %v245
    %v367 = vpop.f32.mrb[0].mxu0
    %v368 = vadd.f32 %v215, %v367
    %v369 = vpop.f32.mrb[0].mxu0
    %v370 = vpop.f32.mrb[0].mxu0
    %v371 = vadd.f32 %v215, %v370
    %v372 = vpop.f32.mrb[0].mxu0
    %373 = vmatprep.mubr.bf16.mxu0 0
    %374 = vmatmul.mubr.bf16.gmra.mrb[0].mxu0 %v246
    %v375 = vpop.f32.mrb[0].mxu0
    %v376 = vadd.f32 %v215, %v375
    %v377 = vpop.f32.mrb[0].mxu0
    %v378 = vpop.f32.mrb[0].mxu0
    %v379 = vadd.f32 %v215, %v378
    %v380 = vpop.f32.mrb[0].mxu0
    %381 = vdwg.mxu0
    %v382 = vld [vmem:[#allocation2] sm:$0xff]
    %v383 = vld [vmem:[#allocation2 + $0x8] sm:$0xff]
    %v384 = vld [vmem:[#allocation2 + $0x10] sm:$0xff]
    %v385 = vld [vmem:[#allocation2 + $0x18] sm:$0xff]
    %v386 = vld [vmem:[#allocation2 + $0x20] sm:$0xff]
    %v387 = vld [vmem:[#allocation2 + $0x28] sm:$0xff]
    %v388 = vpack.c.bf16 %v339, %v336
    %v389 = vpack.c.bf16 %v347, %v344
    %v390 = vpack.c.bf16 %v355, %v352
    %v391 = vpack.c.bf16 %v363, %v360
    %v392 = vpack.c.bf16 %v371, %v368
    %v393 = vpack.c.bf16 %v379, %v376
    %v395 = vsel %vm161, %v382, 0
    %v398 = vsel %vm161, %v383, 0
    %v401 = vsel %vm161, %v384, 0
    %v404 = vsel %vm161, %v385, 0
    %v407 = vsel %vm161, %v386, 0
    %v410 = vsel %vm161, %v387, 0
    %412 = vmatprep.subr.bf16.mxu0 0
    %413 = vmatpush1.bf16.msra.mxu0 %v388
    %414 = vmatprep.subr.bf16.mxu0 0
    %415 = vmatpush1.bf16.msra.mxu0 %v389
    %416 = vmatprep.subr.bf16.mxu0 0
    %417 = vmatpush1.bf16.msra.mxu0 %v390
    %418 = vmatprep.subr.bf16.mxu0 0
    %419 = vmatpush1.bf16.msra.mxu0 %v391
    %420 = vmatprep.subr.bf16.mxu0 0
    %421 = vmatpush1.bf16.msra.mxu0 %v392
    %422 = vmatprep.subr.bf16.mxu0 0
    %423 = vmatpush1.bf16.msra.mxu0 %v393
    %424 = vmatprep.subr.bf16.mxu0 0
    %425 = vmatpush1.bf16.msra.mxu0 0
    %426 = vmatprep.subr.bf16.mxu0 0
    %427 = vmatpush1.bf16.msra.mxu0 0
    %428 = vmatprep.subr.bf16.mxu0 0
    %429 = vmatpush1.bf16.msra.mxu0 0
    %430 = vmatprep.subr.bf16.mxu0 0
    %431 = vmatpush1.bf16.msra.mxu0 0
    %432 = vmatprep.subr.bf16.mxu0 0
    %433 = vmatpush1.bf16.msra.mxu0 0
    %434 = vmatprep.subr.bf16.mxu0 0
    %435 = vmatpush1.bf16.msra.mxu0 0
    %436 = vmatprep.subr.bf16.mxu0 0
    %437 = vmatpush1.bf16.msra.mxu0 0
    %438 = vmatprep.subr.bf16.mxu0 0
    %439 = vmatpush1.bf16.msra.mxu0 0
    %440 = vmatprep.subr.bf16.mxu0 0
    %441 = vmatpush1.bf16.msra.mxu0 0
    %442 = vmatprep.subr.bf16.mxu0 0
    %443 = vmatpush1.bf16.msra.mxu0 0
    %444 = vmatprep.mubr.bf16.mxu0 0
    %445 = vmatmul.mubr.bf16.gmra.mrb[0].mxu0 %v395
    %v446 = vpop.f32.mrb[0].mxu0
    %v447 = vadd.f32 0.0, %v446
    %v448 = vpop.f32.mrb[0].mxu0
    %v449 = vpop.f32.mrb[0].mxu0
    %v450 = vadd.f32 0.0, %v449
    %v451 = vpop.f32.mrb[0].mxu0
    %452 = vmatprep.mubr.bf16.mxu0 0
    %453 = vmatmul.mubr.bf16.gmra.mrb[0].mxu0 %v398
    %v454 = vpop.f32.mrb[0].mxu0
    %v455 = vadd.f32 0.0, %v454
    %v456 = vpop.f32.mrb[0].mxu0
    %v457 = vpop.f32.mrb[0].mxu0
    %v458 = vadd.f32 0.0, %v457
    %v459 = vpop.f32.mrb[0].mxu0
    %460 = vmatprep.mubr.bf16.mxu0 0
    %461 = vmatmul.mubr.bf16.gmra.mrb[0].mxu0 %v401
    %v462 = vpop.f32.mrb[0].mxu0
    %v463 = vadd.f32 0.0, %v462
    %v464 = vpop.f32.mrb[0].mxu0
    %v465 = vpop.f32.mrb[0].mxu0
    %v466 = vadd.f32 0.0, %v465
    %v467 = vpop.f32.mrb[0].mxu0
    %468 = vmatprep.mubr.bf16.mxu0 0
    %469 = vmatmul.mubr.bf16.gmra.mrb[0].mxu0 %v404
    %v470 = vpop.f32.mrb[0].mxu0
    %v471 = vadd.f32 0.0, %v470
    %v472 = vpop.f32.mrb[0].mxu0
    %v473 = vpop.f32.mrb[0].mxu0
    %v474 = vadd.f32 0.0, %v473
    %v475 = vpop.f32.mrb[0].mxu0
    %476 = vmatprep.mubr.bf16.mxu0 0
    %477 = vmatmul.mubr.bf16.gmra.mrb[0].mxu0 %v407
    %v478 = vpop.f32.mrb[0].mxu0
    %v479 = vadd.f32 0.0, %v478
    %v480 = vpop.f32.mrb[0].mxu0
    %v481 = vpop.f32.mrb[0].mxu0
    %v482 = vadd.f32 0.0, %v481
    %v483 = vpop.f32.mrb[0].mxu0
    %484 = vmatprep.mubr.bf16.mxu0 0
    %485 = vmatmul.mubr.bf16.gmra.mrb[0].mxu0 %v410
    %v486 = vpop.f32.mrb[0].mxu0
    %v487 = vadd.f32 0.0, %v486
    %v488 = vpop.f32.mrb[0].mxu0
    %v489 = vpop.f32.mrb[0].mxu0
    %v490 = vadd.f32 0.0, %v489
    %v491 = vpop.f32.mrb[0].mxu0
    %492 = vdwg.mxu0
    %v493 = vpack.c.bf16 %v450, %v447
    %v494 = vpack.c.bf16 %v458, %v455
    %v495 = vpack.c.bf16 %v466, %v463
    %v496 = vpack.c.bf16 %v474, %v471
    %v497 = vpack.c.bf16 %v482, %v479
    %v498 = vpack.c.bf16 %v490, %v487
    %v499 = vld [vmem:[#allocation9] sm:$0xff]
    %v500 = vld [vmem:[#allocation9 + $0x8] sm:$0xff]
    %v501 = vld [vmem:[#allocation9 + $0x10] sm:$0xff]
    %v502 = vld [vmem:[#allocation9 + $0x18] sm:$0xff]
    %v503 = vld [vmem:[#allocation9 + $0x20] sm:$0xff]
    %v504 = vld [vmem:[#allocation9 + $0x28] sm:$0xff]
    %v505 = vld [vmem:[#allocation9 + $0x30] sm:$0xff]
    %v506 = vld [vmem:[#allocation9 + $0x38] sm:$0xff]
    %v507 = vld [vmem:[#allocation9 + $0x40] sm:$0xff]
    %v508 = vld [vmem:[#allocation9 + $0x48] sm:$0xff]
    %v509 = vld [vmem:[#allocation9 + $0x50] sm:$0xff]
    %v510 = vld [vmem:[#allocation9 + $0x58] sm:$0xff]
    %v511 = vld [vmem:[#allocation9 + $0x60] sm:$0xff]
    %v512 = vld [vmem:[#allocation9 + $0x68] sm:$0xff]
    %v513 = vld [vmem:[#allocation9 + $0x70] sm:$0xff]
    %v514 = vld [vmem:[#allocation9 + $0x78] sm:$0xff]
    %v515 = vld [vmem:[#allocation11] sm:$0xff]
    %v516 = vld [vmem:[#allocation11 + $0x8] sm:$0xff]
    %v517 = vld [vmem:[#allocation11 + $0x10] sm:$0xff]
    %v518 = vld [vmem:[#allocation11 + $0x18] sm:$0xff]
    %v519 = vld [vmem:[#allocation11 + $0x20] sm:$0xff]
    %v520 = vld [vmem:[#allocation11 + $0x28] sm:$0xff]
    %v521 = vld [vmem:[#allocation11 + $0x30] sm:$0xff]
    %v522 = vld [vmem:[#allocation11 + $0x38] sm:$0xff]
    %v523 = vld [vmem:[#allocation11 + $0x40] sm:$0xff]
    %v524 = vld [vmem:[#allocation11 + $0x48] sm:$0xff]
    %v525 = vld [vmem:[#allocation11 + $0x50] sm:$0xff]
    %v526 = vld [vmem:[#allocation11 + $0x58] sm:$0xff]
    %v527 = vld [vmem:[#allocation11 + $0x60] sm:$0xff]
    %v528 = vld [vmem:[#allocation11 + $0x68] sm:$0xff]
    %v529 = vld [vmem:[#allocation11 + $0x70] sm:$0xff]
    %v530 = vld [vmem:[#allocation11 + $0x78] sm:$0xff]
    %v547 = vunpack.c.l.b16 %v515
    %v548 = vunpack.c.h.b16 %v515
    %v549 = vunpack.c.l.b16 %v516
    %v550 = vunpack.c.h.b16 %v516
    %v551 = vunpack.c.l.b16 %v517
    %v552 = vunpack.c.h.b16 %v517
    %v553 = vunpack.c.l.b16 %v518
    %v554 = vunpack.c.h.b16 %v518
    %v555 = vunpack.c.l.b16 %v519
    %v556 = vunpack.c.h.b16 %v519
    %v557 = vunpack.c.l.b16 %v520
    %v558 = vunpack.c.h.b16 %v520
    %v559 = vunpack.c.l.b16 %v521
    %v560 = vunpack.c.h.b16 %v521
    %v561 = vunpack.c.l.b16 %v522
    %v562 = vunpack.c.h.b16 %v522
    %v563 = vunpack.c.l.b16 %v523
    %v564 = vunpack.c.h.b16 %v523
    %v565 = vunpack.c.l.b16 %v524
    %v566 = vunpack.c.h.b16 %v524
    %v567 = vunpack.c.l.b16 %v525
    %v568 = vunpack.c.h.b16 %v525
    %v569 = vunpack.c.l.b16 %v526
    %v570 = vunpack.c.h.b16 %v526
    %v571 = vunpack.c.l.b16 %v527
    %v572 = vunpack.c.h.b16 %v527
    %v573 = vunpack.c.l.b16 %v528
    %v574 = vunpack.c.h.b16 %v528
    %v575 = vunpack.c.l.b16 %v529
    %v576 = vunpack.c.h.b16 %v529
    %v577 = vunpack.c.l.b16 %v530
    %v578 = vunpack.c.h.b16 %v530
    %v579 = vpack.c.b16 %v549, %v547
    %v580 = vpack.c.b16 %v550, %v548
    %v581 = vpack.c.b16 %v553, %v551
    %v582 = vpack.c.b16 %v554, %v552
    %v583 = vpack.c.b16 %v557, %v555
    %v584 = vpack.c.b16 %v558, %v556
    %v585 = vpack.c.b16 %v561, %v559
    %v586 = vpack.c.b16 %v562, %v560
    %v587 = vpack.c.b16 %v565, %v563
    %v588 = vpack.c.b16 %v566, %v564
    %v589 = vpack.c.b16 %v569, %v567
    %v590 = vpack.c.b16 %v570, %v568
    %v591 = vpack.c.b16 %v573, %v571
    %v592 = vpack.c.b16 %v574, %v572
    %v593 = vpack.c.b16 %v577, %v575
    %v594 = vpack.c.b16 %v578, %v576
    %611 = vmatprep.subr.bf16.mxu0 %v580
    %612 = vmatpush1.bf16.msra.mxu0 %v579
    %613 = vmatprep.subr.bf16.mxu0 %v582
    %614 = vmatpush1.bf16.msra.mxu0 %v581
    %615 = vmatprep.subr.bf16.mxu0 %v584
    %616 = vmatpush1.bf16.msra.mxu0 %v583
    %617 = vmatprep.subr.bf16.mxu0 %v586
    %618 = vmatpush1.bf16.msra.mxu0 %v585
    %619 = vmatprep.subr.bf16.mxu0 %v588
    %620 = vmatpush1.bf16.msra.mxu0 %v587
    %621 = vmatprep.subr.bf16.mxu0 %v590
    %622 = vmatpush1.bf16.msra.mxu0 %v589
    %623 = vmatprep.subr.bf16.mxu0 %v592
    %624 = vmatpush1.bf16.msra.mxu0 %v591
    %625 = vmatprep.subr.bf16.mxu0 %v594
    %626 = vmatpush1.bf16.msra.mxu0 %v593
    %627 = vmatprep.subr.bf16.mxu0 0
    %628 = vmatpush1.bf16.msra.mxu0 0
    %629 = vmatprep.subr.bf16.mxu0 0
    %630 = vmatpush1.bf16.msra.mxu0 0
    %631 = vmatprep.subr.bf16.mxu0 0
    %632 = vmatpush1.bf16.msra.mxu0 0
    %633 = vmatprep.subr.bf16.mxu0 0
    %634 = vmatpush1.bf16.msra.mxu0 0
    %635 = vmatprep.subr.bf16.mxu0 0
    %636 = vmatpush1.bf16.msra.mxu0 0
    %637 = vmatprep.subr.bf16.mxu0 0
    %638 = vmatpush1.bf16.msra.mxu0 0
    %639 = vmatprep.subr.bf16.mxu0 0
    %640 = vmatpush1.bf16.msra.mxu0 0
    %641 = vmatprep.subr.bf16.mxu0 0
    %642 = vmatpush1.bf16.msra.mxu0 0
    %643 = vmatprep.mubr.bf16.mxu0 0
    %644 = vmatmul.mubr.bf16.gmra.mrb[0].mxu0 %v241
    %v645 = vpop.f32.mrb[0].mxu0
    %v646 = vadd.f32 0.0, %v645
    %v647 = vpop.f32.mrb[0].mxu0
    %v648 = vadd.f32 0.0, %v647
    %v649 = vpop.f32.mrb[0].mxu0
    %v650 = vadd.f32 0.0, %v649
    %v651 = vpop.f32.mrb[0].mxu0
    %v652 = vadd.f32 0.0, %v651
    %653 = vmatprep.mubr.bf16.mxu0 0
    %654 = vmatmul.mubr.bf16.gmra.mrb[0].mxu0 %v242
    %v655 = vpop.f32.mrb[0].mxu0
    %v656 = vadd.f32 0.0, %v655
    %v657 = vpop.f32.mrb[0].mxu0
    %v658 = vadd.f32 0.0, %v657
    %v659 = vpop.f32.mrb[0].mxu0
    %v660 = vadd.f32 0.0, %v659
    %v661 = vpop.f32.mrb[0].mxu0
    %v662 = vadd.f32 0.0, %v661
    %663 = vmatprep.mubr.bf16.mxu0 0
    %664 = vmatmul.mubr.bf16.gmra.mrb[0].mxu0 %v243
    %v665 = vpop.f32.mrb[0].mxu0
    %v666 = vadd.f32 0.0, %v665
    %v667 = vpop.f32.mrb[0].mxu0
    %v668 = vadd.f32 0.0, %v667
    %v669 = vpop.f32.mrb[0].mxu0
    %v670 = vadd.f32 0.0, %v669
    %v671 = vpop.f32.mrb[0].mxu0
    %v672 = vadd.f32 0.0, %v671
    %673 = vmatprep.mubr.bf16.mxu0 0
    %674 = vmatmul.mubr.bf16.gmra.mrb[0].mxu0 %v244
    %v675 = vpop.f32.mrb[0].mxu0
    %v676 = vadd.f32 0.0, %v675
    %v677 = vpop.f32.mrb[0].mxu0
    %v678 = vadd.f32 0.0, %v677
    %v679 = vpop.f32.mrb[0].mxu0
    %v680 = vadd.f32 0.0, %v679
    %v681 = vpop.f32.mrb[0].mxu0
    %v682 = vadd.f32 0.0, %v681
    %683 = vmatprep.mubr.bf16.mxu0 0
    %684 = vmatmul.mubr.bf16.gmra.mrb[0].mxu0 %v245
    %v685 = vpop.f32.mrb[0].mxu0
    %v686 = vadd.f32 0.0, %v685
    %v687 = vpop.f32.mrb[0].mxu0
    %v688 = vadd.f32 0.0, %v687
    %v689 = vpop.f32.mrb[0].mxu0
    %v690 = vadd.f32 0.0, %v689
    %v691 = vpop.f32.mrb[0].mxu0
    %v692 = vadd.f32 0.0, %v691
    %693 = vmatprep.mubr.bf16.mxu0 0
    %694 = vmatmul.mubr.bf16.gmra.mrb[0].mxu0 %v246
    %v695 = vpop.f32.mrb[0].mxu0
    %v696 = vadd.f32 0.0, %v695
    %v697 = vpop.f32.mrb[0].mxu0
    %v698 = vadd.f32 0.0, %v697
    %v699 = vpop.f32.mrb[0].mxu0
    %v700 = vadd.f32 0.0, %v699
    %v701 = vpop.f32.mrb[0].mxu0
    %v702 = vadd.f32 0.0, %v701
    %703 = vdwg.mxu0
    %v720 = vunpack.c.l.b16 %v499
    %v721 = vunpack.c.h.b16 %v499
    %v722 = vunpack.c.l.b16 %v500
    %v723 = vunpack.c.h.b16 %v500
    %v724 = vunpack.c.l.b16 %v501
    %v725 = vunpack.c.h.b16 %v501
    %v726 = vunpack.c.l.b16 %v502
    %v727 = vunpack.c.h.b16 %v502
    %v728 = vunpack.c.l.b16 %v503
    %v729 = vunpack.c.h.b16 %v503
    %v730 = vunpack.c.l.b16 %v504
    %v731 = vunpack.c.h.b16 %v504
    %v732 = vunpack.c.l.b16 %v505
    %v733 = vunpack.c.h.b16 %v505
    %v734 = vunpack.c.l.b16 %v506
    %v735 = vunpack.c.h.b16 %v506
    %v736 = vunpack.c.l.b16 %v507
    %v737 = vunpack.c.h.b16 %v507
    %v738 = vunpack.c.l.b16 %v508
    %v739 = vunpack.c.h.b16 %v508
    %v740 = vunpack.c.l.b16 %v509
    %v741 = vunpack.c.h.b16 %v509
    %v742 = vunpack.c.l.b16 %v510
    %v743 = vunpack.c.h.b16 %v510
    %v744 = vunpack.c.l.b16 %v511
    %v745 = vunpack.c.h.b16 %v511
    %v746 = vunpack.c.l.b16 %v512
    %v747 = vunpack.c.h.b16 %v512
    %v748 = vunpack.c.l.b16 %v513
    %v749 = vunpack.c.h.b16 %v513
    %v750 = vunpack.c.l.b16 %v514
    %v751 = vunpack.c.h.b16 %v514
    %v752 = vpack.c.b16 %v722, %v720
    %v753 = vpack.c.b16 %v723, %v721
    %v754 = vpack.c.b16 %v726, %v724
    %v755 = vpack.c.b16 %v727, %v725
    %v756 = vpack.c.b16 %v730, %v728
    %v757 = vpack.c.b16 %v731, %v729
    %v758 = vpack.c.b16 %v734, %v732
    %v759 = vpack.c.b16 %v735, %v733
    %v760 = vpack.c.b16 %v738, %v736
    %v761 = vpack.c.b16 %v739, %v737
    %v762 = vpack.c.b16 %v742, %v740
    %v763 = vpack.c.b16 %v743, %v741
    %v764 = vpack.c.b16 %v746, %v744
    %v765 = vpack.c.b16 %v747, %v745
    %v766 = vpack.c.b16 %v750, %v748
    %v767 = vpack.c.b16 %v751, %v749
    %784 = vmatprep.subr.bf16.mxu0 %v753
    %785 = vmatpush1.bf16.msra.mxu0 %v752
    %786 = vmatprep.subr.bf16.mxu0 %v755
    %787 = vmatpush1.bf16.msra.mxu0 %v754
    %788 = vmatprep.subr.bf16.mxu0 %v757
    %789 = vmatpush1.bf16.msra.mxu0 %v756
    %790 = vmatprep.subr.bf16.mxu0 %v759
    %791 = vmatpush1.bf16.msra.mxu0 %v758
    %792 = vmatprep.subr.bf16.mxu0 %v761
    %793 = vmatpush1.bf16.msra.mxu0 %v760
    %794 = vmatprep.subr.bf16.mxu0 %v763
    %795 = vmatpush1.bf16.msra.mxu0 %v762
    %796 = vmatprep.subr.bf16.mxu0 %v765
    %797 = vmatpush1.bf16.msra.mxu0 %v764
    %798 = vmatprep.subr.bf16.mxu0 %v767
    %799 = vmatpush1.bf16.msra.mxu0 %v766
    %800 = vmatprep.subr.bf16.mxu0 0
    %801 = vmatpush1.bf16.msra.mxu0 0
    %802 = vmatprep.subr.bf16.mxu0 0
    %803 = vmatpush1.bf16.msra.mxu0 0
    %804 = vmatprep.subr.bf16.mxu0 0
    %805 = vmatpush1.bf16.msra.mxu0 0
    %806 = vmatprep.subr.bf16.mxu0 0
    %807 = vmatpush1.bf16.msra.mxu0 0
    %808 = vmatprep.subr.bf16.mxu0 0
    %809 = vmatpush1.bf16.msra.mxu0 0
    %810 = vmatprep.subr.bf16.mxu0 0
    %811 = vmatpush1.bf16.msra.mxu0 0
    %812 = vmatprep.subr.bf16.mxu0 0
    %813 = vmatpush1.bf16.msra.mxu0 0
    %814 = vmatprep.subr.bf16.mxu0 0
    %815 = vmatpush1.bf16.msra.mxu0 0
    %816 = vmatprep.mubr.bf16.mxu0 0
    %817 = vmatmul.mubr.bf16.gmra.mrb[0].mxu0 %v493
    %v818 = vpop.f32.mrb[0].mxu0
    %v819 = vadd.f32 %v646, %v818
    %v820 = vpop.f32.mrb[0].mxu0
    %v821 = vadd.f32 %v648, %v820
    %v822 = vpop.f32.mrb[0].mxu0
    %v823 = vadd.f32 %v650, %v822
    %v824 = vpop.f32.mrb[0].mxu0
    %v825 = vadd.f32 %v652, %v824
    %826 = vmatprep.mubr.bf16.mxu0 0
    %827 = vmatmul.mubr.bf16.gmra.mrb[0].mxu0 %v494
    %v828 = vpop.f32.mrb[0].mxu0
    %v829 = vadd.f32 %v656, %v828
    %v830 = vpop.f32.mrb[0].mxu0
    %v831 = vadd.f32 %v658, %v830
    %v832 = vpop.f32.mrb[0].mxu0
    %v833 = vadd.f32 %v660, %v832
    %v834 = vpop.f32.mrb[0].mxu0
    %v835 = vadd.f32 %v662, %v834
    %836 = vmatprep.mubr.bf16.mxu0 0
    %837 = vmatmul.mubr.bf16.gmra.mrb[0].mxu0 %v495
    %v838 = vpop.f32.mrb[0].mxu0
    %v839 = vadd.f32 %v666, %v838
    %v840 = vpop.f32.mrb[0].mxu0
    %v841 = vadd.f32 %v668, %v840
    %v842 = vpop.f32.mrb[0].mxu0
    %v843 = vadd.f32 %v670, %v842
    %v844 = vpop.f32.mrb[0].mxu0
    %v845 = vadd.f32 %v672, %v844
    %846 = vmatprep.mubr.bf16.mxu0 0
    %847 = vmatmul.mubr.bf16.gmra.mrb[0].mxu0 %v496
    %v848 = vpop.f32.mrb[0].mxu0
    %v849 = vadd.f32 %v676, %v848
    %v850 = vpop.f32.mrb[0].mxu0
    %v851 = vadd.f32 %v678, %v850
    %v852 = vpop.f32.mrb[0].mxu0
    %v853 = vadd.f32 %v680, %v852
    %v854 = vpop.f32.mrb[0].mxu0
    %v855 = vadd.f32 %v682, %v854
    %856 = vmatprep.mubr.bf16.mxu0 0
    %857 = vmatmul.mubr.bf16.gmra.mrb[0].mxu0 %v497
    %v858 = vpop.f32.mrb[0].mxu0
    %v859 = vadd.f32 %v686, %v858
    %v860 = vpop.f32.mrb[0].mxu0
    %v861 = vadd.f32 %v688, %v860
    %v862 = vpop.f32.mrb[0].mxu0
    %v863 = vadd.f32 %v690, %v862
    %v864 = vpop.f32.mrb[0].mxu0
    %v865 = vadd.f32 %v692, %v864
    %866 = vmatprep.mubr.bf16.mxu0 0
    %867 = vmatmul.mubr.bf16.gmra.mrb[0].mxu0 %v498
    %v868 = vpop.f32.mrb[0].mxu0
    %v869 = vadd.f32 %v696, %v868
    %v870 = vpop.f32.mrb[0].mxu0
    %v871 = vadd.f32 %v698, %v870
    %v872 = vpop.f32.mrb[0].mxu0
    %v873 = vadd.f32 %v700, %v872
    %v874 = vpop.f32.mrb[0].mxu0
    %v875 = vadd.f32 %v702, %v874
    %876 = vdwg.mxu0
    %v878 = vlaneseq
    %v879 = vshrl.u32 %v878, 7
    %v880 = vsub.s32 0, %v879
    %v881 = vrot.slane %v193, %v880
    %v882 = vlaneseq
    %v883 = vshrl.u32 %v882, 7
    %v884 = vsub.s32 1, %v883
    %v885 = vrot.slane %v193, %v884
    %v888 = vadd.f32 %v819, %v881
    %v889 = vadd.f32 %v821, %v885
    %v890 = vadd.f32 %v823, %v881
    %v891 = vadd.f32 %v825, %v885
    %v892 = vadd.f32 %v829, %v881
    %v893 = vadd.f32 %v831, %v885
    %v894 = vadd.f32 %v833, %v881
    %v895 = vadd.f32 %v835, %v885
    %v896 = vadd.f32 %v839, %v881
    %v897 = vadd.f32 %v841, %v885
    %v898 = vadd.f32 %v843, %v881
    %v899 = vadd.f32 %v845, %v885
    %v900 = vadd.f32 %v849, %v881
    %v901 = vadd.f32 %v851, %v885
    %v902 = vadd.f32 %v853, %v881
    %v903 = vadd.f32 %v855, %v885
    %v904 = vadd.f32 %v859, %v881
    %v905 = vadd.f32 %v861, %v885
    %v906 = vadd.f32 %v863, %v881
    %v907 = vadd.f32 %v865, %v885
    %v908 = vadd.f32 %v869, %v881
    %v909 = vadd.f32 %v871, %v885
    %v910 = vadd.f32 %v873, %v881
    %v911 = vadd.f32 %v875, %v885
    %v912 = vxor.u32 %v888, 2147483648
    %v913 = vxor.u32 %v889, 2147483648
    %v914 = vxor.u32 %v890, 2147483648
    %v915 = vxor.u32 %v891, 2147483648
    %v916 = vxor.u32 %v892, 2147483648
    %v917 = vxor.u32 %v893, 2147483648
    %v918 = vxor.u32 %v894, 2147483648
    %v919 = vxor.u32 %v895, 2147483648
    %v920 = vxor.u32 %v896, 2147483648
    %v921 = vxor.u32 %v897, 2147483648
    %v922 = vxor.u32 %v898, 2147483648
    %v923 = vxor.u32 %v899, 2147483648
    %v924 = vxor.u32 %v900, 2147483648
    %v925 = vxor.u32 %v901, 2147483648
    %v926 = vxor.u32 %v902, 2147483648
    %v927 = vxor.u32 %v903, 2147483648
    %v928 = vxor.u32 %v904, 2147483648
    %v929 = vxor.u32 %v905, 2147483648
    %v930 = vxor.u32 %v906, 2147483648
    %v931 = vxor.u32 %v907, 2147483648
    %v932 = vxor.u32 %v908, 2147483648
    %v933 = vxor.u32 %v909, 2147483648
    %v934 = vxor.u32 %v910, 2147483648
    %v935 = vxor.u32 %v911, 2147483648
    %v936 = vmul.f32 %v912, 1.442695
    %v937 = vpow.pop %v936
    %v938 = vmul.f32 %v913, 1.442695
    %v939 = vpow.pop %v938
    %v940 = vmul.f32 %v914, 1.442695
    %v941 = vpow.pop %v940
    %v942 = vmul.f32 %v915, 1.442695
    %v943 = vpow.pop %v942
    %v944 = vmul.f32 %v916, 1.442695
    %v945 = vpow.pop %v944
    %v946 = vmul.f32 %v917, 1.442695
    %v947 = vpow.pop %v946
    %v948 = vmul.f32 %v918, 1.442695
    %v949 = vpow.pop %v948
    %v950 = vmul.f32 %v919, 1.442695
    %v951 = vpow.pop %v950
    %v952 = vmul.f32 %v920, 1.442695
    %v953 = vpow.pop %v952
    %v954 = vmul.f32 %v921, 1.442695
    %v955 = vpow.pop %v954
    %v956 = vmul.f32 %v922, 1.442695
    %v957 = vpow.pop %v956
    %v958 = vmul.f32 %v923, 1.442695
    %v959 = vpow.pop %v958
    %v960 = vmul.f32 %v924, 1.442695
    %v961 = vpow.pop %v960
    %v962 = vmul.f32 %v925, 1.442695
    %v963 = vpow.pop %v962
    %v964 = vmul.f32 %v926, 1.442695
    %v965 = vpow.pop %v964
    %v966 = vmul.f32 %v927, 1.442695
    %v967 = vpow.pop %v966
    %v968 = vmul.f32 %v928, 1.442695
    %v969 = vpow.pop %v968
    %v970 = vmul.f32 %v929, 1.442695
    %v971 = vpow.pop %v970
    %v972 = vmul.f32 %v930, 1.442695
    %v973 = vpow.pop %v972
    %v974 = vmul.f32 %v931, 1.442695
    %v975 = vpow.pop %v974
    %v976 = vmul.f32 %v932, 1.442695
    %v977 = vpow.pop %v976
    %v978 = vmul.f32 %v933, 1.442695
    %v979 = vpow.pop %v978
    %v980 = vmul.f32 %v934, 1.442695
    %v981 = vpow.pop %v980
    %v982 = vmul.f32 %v935, 1.442695
    %v983 = vpow.pop %v982
    %v984 = vadd.f32 %v937, 1.0
    %v985 = vadd.f32 %v939, 1.0
    %v986 = vadd.f32 %v941, 1.0
    %v987 = vadd.f32 %v943, 1.0
    %v988 = vadd.f32 %v945, 1.0
    %v989 = vadd.f32 %v947, 1.0
    %v990 = vadd.f32 %v949, 1.0
    %v991 = vadd.f32 %v951, 1.0
    %v992 = vadd.f32 %v953, 1.0
    %v993 = vadd.f32 %v955, 1.0
    %v994 = vadd.f32 %v957, 1.0
    %v995 = vadd.f32 %v959, 1.0
    %v996 = vadd.f32 %v961, 1.0
    %v997 = vadd.f32 %v963, 1.0
    %v998 = vadd.f32 %v965, 1.0
    %v999 = vadd.f32 %v967, 1.0
    %v1000 = vadd.f32 %v969, 1.0
    %v1001 = vadd.f32 %v971, 1.0
    %v1002 = vadd.f32 %v973, 1.0
    %v1003 = vadd.f32 %v975, 1.0
    %v1004 = vadd.f32 %v977, 1.0
    %v1005 = vadd.f32 %v979, 1.0
    %v1006 = vadd.f32 %v981, 1.0
    %v1007 = vadd.f32 %v983, 1.0
    %v1008 = vrcp.pop %v984
    %v1009 = vmul.f32 1.0, %v1008
    %v1010 = vrcp.pop %v985
    %v1011 = vmul.f32 1.0, %v1010
    %v1012 = vrcp.pop %v986
    %v1013 = vmul.f32 1.0, %v1012
    %v1014 = vrcp.pop %v987
    %v1015 = vmul.f32 1.0, %v1014
    %v1016 = vrcp.pop %v988
    %v1017 = vmul.f32 1.0, %v1016
    %v1018 = vrcp.pop %v989
    %v1019 = vmul.f32 1.0, %v1018
    %v1020 = vrcp.pop %v990
    %v1021 = vmul.f32 1.0, %v1020
    %v1022 = vrcp.pop %v991
    %v1023 = vmul.f32 1.0, %v1022
    %v1024 = vrcp.pop %v992
    %v1025 = vmul.f32 1.0, %v1024
    %v1026 = vrcp.pop %v993
    %v1027 = vmul.f32 1.0, %v1026
    %v1028 = vrcp.pop %v994
    %v1029 = vmul.f32 1.0, %v1028
    %v1030 = vrcp.pop %v995
    %v1031 = vmul.f32 1.0, %v1030
    %v1032 = vrcp.pop %v996
    %v1033 = vmul.f32 1.0, %v1032
    %v1034 = vrcp.pop %v997
    %v1035 = vmul.f32 1.0, %v1034
    %v1036 = vrcp.pop %v998
    %v1037 = vmul.f32 1.0, %v1036
    %v1038 = vrcp.pop %v999
    %v1039 = vmul.f32 1.0, %v1038
    %v1040 = vrcp.pop %v1000
    %v1041 = vmul.f32 1.0, %v1040
    %v1042 = vrcp.pop %v1001
    %v1043 = vmul.f32 1.0, %v1042
    %v1044 = vrcp.pop %v1002
    %v1045 = vmul.f32 1.0, %v1044
    %v1046 = vrcp.pop %v1003
    %v1047 = vmul.f32 1.0, %v1046
    %v1048 = vrcp.pop %v1004
    %v1049 = vmul.f32 1.0, %v1048
    %v1050 = vrcp.pop %v1005
    %v1051 = vmul.f32 1.0, %v1050
    %v1052 = vrcp.pop %v1006
    %v1053 = vmul.f32 1.0, %v1052
    %v1054 = vrcp.pop %v1007
    %v1055 = vmul.f32 1.0, %v1054
    %v1056 = vld [vmem:[#allocation12] sm:$0xf]
    %v1057 = vld [vmem:[#allocation12 + $0x4] sm:$0xf]
    %v1058 = vld [vmem:[#allocation12 + $0x8] sm:$0xf]
    %v1059 = vld [vmem:[#allocation12 + $0xc] sm:$0xf]
    %v1060 = vld [vmem:[#allocation12 + $0x10] sm:$0xf]
    %v1061 = vld [vmem:[#allocation12 + $0x14] sm:$0xf]
    %v1062 = vld [vmem:[#allocation12 + $0x18] sm:$0xf]
    %v1063 = vld [vmem:[#allocation12 + $0x1c] sm:$0xf]
    %v1064 = vld [vmem:[#allocation12 + $0x20] sm:$0xf]
    %v1065 = vld [vmem:[#allocation12 + $0x24] sm:$0xf]
    %v1066 = vld [vmem:[#allocation12 + $0x28] sm:$0xf]
    %v1067 = vld [vmem:[#allocation12 + $0x2c] sm:$0xf]
    %v1068 = vld [vmem:[#allocation12 + $0x30] sm:$0xf]
    %v1069 = vld [vmem:[#allocation12 + $0x34] sm:$0xf]
    %v1070 = vld [vmem:[#allocation12 + $0x38] sm:$0xf]
    %v1071 = vld [vmem:[#allocation12 + $0x3c] sm:$0xf]
    %v1072 = vmul.f32 %v1011, %v180
    %v1073 = vmul.f32 %v1015, %v181
    %v1074 = vmul.f32 %v1019, %v182
    %v1075 = vmul.f32 %v1023, %v183
    %v1076 = vmul.f32 %v1027, %v184
    %v1077 = vmul.f32 %v1031, %v185
    %v1078 = vmul.f32 %v1035, %v186
    %v1079 = vmul.f32 %v1039, %v187
    %v1080 = vmul.f32 %v1043, %v188
    %v1081 = vmul.f32 %v1047, %v189
    %v1082 = vmul.f32 %v1051, %v190
    %v1083 = vmul.f32 %v1055, %v191
    %v1084 = vpack.c.bf16 %v1073, %v1072
    %v1085 = vpack.c.bf16 %v1075, %v1074
    %v1086 = vpack.c.bf16 %v1077, %v1076
    %v1087 = vpack.c.bf16 %v1079, %v1078
    %v1088 = vpack.c.bf16 %v1081, %v1080
    %v1089 = vpack.c.bf16 %v1083, %v1082
    %v1090 = vld [vmem:[#allocation14] sm:$0xf]
    %v1091 = vld [vmem:[#allocation14 + $0x4] sm:$0xf]
    %v1092 = vld [vmem:[#allocation14 + $0x8] sm:$0xf]
    %v1093 = vld [vmem:[#allocation14 + $0xc] sm:$0xf]
    %v1094 = vld [vmem:[#allocation14 + $0x10] sm:$0xf]
    %v1095 = vld [vmem:[#allocation14 + $0x14] sm:$0xf]
    %v1096 = vld [vmem:[#allocation14 + $0x18] sm:$0xf]
    %v1097 = vld [vmem:[#allocation14 + $0x1c] sm:$0xf]
    %v1098 = vld [vmem:[#allocation14 + $0x20] sm:$0xf]
    %v1099 = vld [vmem:[#allocation14 + $0x24] sm:$0xf]
    %v1100 = vld [vmem:[#allocation14 + $0x28] sm:$0xf]
    %v1101 = vld [vmem:[#allocation14 + $0x2c] sm:$0xf]
    %v1102 = vld [vmem:[#allocation14 + $0x30] sm:$0xf]
    %v1103 = vld [vmem:[#allocation14 + $0x34] sm:$0xf]
    %v1104 = vld [vmem:[#allocation14 + $0x38] sm:$0xf]
    %v1105 = vld [vmem:[#allocation14 + $0x3c] sm:$0xf]
    %v1122 = vunpack.c.l.b16 %v1090
    %v1123 = vunpack.c.l.b16 %v1091
    %v1124 = vunpack.c.l.b16 %v1092
    %v1125 = vunpack.c.l.b16 %v1093
    %v1126 = vunpack.c.l.b16 %v1094
    %v1127 = vunpack.c.l.b16 %v1095
    %v1128 = vunpack.c.l.b16 %v1096
    %v1129 = vunpack.c.l.b16 %v1097
    %v1130 = vunpack.c.l.b16 %v1098
    %v1131 = vunpack.c.l.b16 %v1099
    %v1132 = vunpack.c.l.b16 %v1100
    %v1133 = vunpack.c.l.b16 %v1101
    %v1134 = vunpack.c.l.b16 %v1102
    %v1135 = vunpack.c.l.b16 %v1103
    %v1136 = vunpack.c.l.b16 %v1104
    %v1137 = vunpack.c.l.b16 %v1105
    %v1138 = vpack.c.b16 %v1123, %v1122
    %v1139 = vpack.c.b16 %v1125, %v1124
    %v1140 = vpack.c.b16 %v1127, %v1126
    %v1141 = vpack.c.b16 %v1129, %v1128
    %v1142 = vpack.c.b16 %v1131, %v1130
    %v1143 = vpack.c.b16 %v1133, %v1132
    %v1144 = vpack.c.b16 %v1135, %v1134
    %v1145 = vpack.c.b16 %v1137, %v1136
    %1154 = vmatprep.subr.bf16.mxu0 0
    %1155 = vmatpush1.bf16.msra.mxu0 %v1138
    %1156 = vmatprep.subr.bf16.mxu0 0
    %1157 = vmatpush1.bf16.msra.mxu0 %v1139
    %1158 = vmatprep.subr.bf16.mxu0 0
    %1159 = vmatpush1.bf16.msra.mxu0 %v1140
    %1160 = vmatprep.subr.bf16.mxu0 0
    %1161 = vmatpush1.bf16.msra.mxu0 %v1141
    %1162 = vmatprep.subr.bf16.mxu0 0
    %1163 = vmatpush1.bf16.msra.mxu0 %v1142
    %1164 = vmatprep.subr.bf16.mxu0 0
    %1165 = vmatpush1.bf16.msra.mxu0 %v1143
    %1166 = vmatprep.subr.bf16.mxu0 0
    %1167 = vmatpush1.bf16.msra.mxu0 %v1144
    %1168 = vmatprep.subr.bf16.mxu0 0
    %1169 = vmatpush1.bf16.msra.mxu0 %v1145
    %1170 = vmatprep.subr.bf16.mxu0 0
    %1171 = vmatpush1.bf16.msra.mxu0 0
    %1172 = vmatprep.subr.bf16.mxu0 0
    %1173 = vmatpush1.bf16.msra.mxu0 0
    %1174 = vmatprep.subr.bf16.mxu0 0
    %1175 = vmatpush1.bf16.msra.mxu0 0
    %1176 = vmatprep.subr.bf16.mxu0 0
    %1177 = vmatpush1.bf16.msra.mxu0 0
    %1178 = vmatprep.subr.bf16.mxu0 0
    %1179 = vmatpush1.bf16.msra.mxu0 0
    %1180 = vmatprep.subr.bf16.mxu0 0
    %1181 = vmatpush1.bf16.msra.mxu0 0
    %1182 = vmatprep.subr.bf16.mxu0 0
    %1183 = vmatpush1.bf16.msra.mxu0 0
    %1184 = vmatprep.subr.bf16.mxu0 0
    %1185 = vmatpush1.bf16.msra.mxu0 0
    %1186 = vmatprep.mubr.bf16.mxu0 0
    %1187 = vmatmul.mubr.bf16.gmra.mrb[0].mxu0 %v1084
    %v1188 = vpop.f32.mrb[0].mxu0
    %v1189 = vadd.f32 0.0, %v1188
    %v1190 = vpop.f32.mrb[0].mxu0
    %v1191 = vpop.f32.mrb[0].mxu0
    %v1192 = vadd.f32 0.0, %v1191
    %v1193 = vpop.f32.mrb[0].mxu0
    %1194 = vmatprep.mubr.bf16.mxu0 0
    %1195 = vmatmul.mubr.bf16.gmra.mrb[0].mxu0 %v1085
    %v1196 = vpop.f32.mrb[0].mxu0
    %v1197 = vadd.f32 0.0, %v1196
    %v1198 = vpop.f32.mrb[0].mxu0
    %v1199 = vpop.f32.mrb[0].mxu0
    %v1200 = vadd.f32 0.0, %v1199
    %v1201 = vpop.f32.mrb[0].mxu0
    %1202 = vmatprep.mubr.bf16.mxu0 0
    %1203 = vmatmul.mubr.bf16.gmra.mrb[0].mxu0 %v1086
    %v1204 = vpop.f32.mrb[0].mxu0
    %v1205 = vadd.f32 0.0, %v1204
    %v1206 = vpop.f32.mrb[0].mxu0
    %v1207 = vpop.f32.mrb[0].mxu0
    %v1208 = vadd.f32 0.0, %v1207
    %v1209 = vpop.f32.mrb[0].mxu0
    %1210 = vmatprep.mubr.bf16.mxu0 0
    %1211 = vmatmul.mubr.bf16.gmra.mrb[0].mxu0 %v1087
    %v1212 = vpop.f32.mrb[0].mxu0
    %v1213 = vadd.f32 0.0, %v1212
    %v1214 = vpop.f32.mrb[0].mxu0
    %v1215 = vpop.f32.mrb[0].mxu0
    %v1216 = vadd.f32 0.0, %v1215
    %v1217 = vpop.f32.mrb[0].mxu0
    %1218 = vmatprep.mubr.bf16.mxu0 0
    %1219 = vmatmul.mubr.bf16.gmra.mrb[0].mxu0 %v1088
    %v1220 = vpop.f32.mrb[0].mxu0
    %v1221 = vadd.f32 0.0, %v1220
    %v1222 = vpop.f32.mrb[0].mxu0
    %v1223 = vpop.f32.mrb[0].mxu0
    %v1224 = vadd.f32 0.0, %v1223
    %v1225 = vpop.f32.mrb[0].mxu0
    %1226 = vmatprep.mubr.bf16.mxu0 0
    %1227 = vmatmul.mubr.bf16.gmra.mrb[0].mxu0 %v1089
    %v1228 = vpop.f32.mrb[0].mxu0
    %v1229 = vadd.f32 0.0, %v1228
    %v1230 = vpop.f32.mrb[0].mxu0
    %v1231 = vpop.f32.mrb[0].mxu0
    %v1232 = vadd.f32 0.0, %v1231
    %v1233 = vpop.f32.mrb[0].mxu0
    %1234 = vdwg.mxu0
    %v1251 = vunpack.c.l.b16 %v1056
    %v1252 = vunpack.c.l.b16 %v1057
    %v1253 = vunpack.c.l.b16 %v1058
    %v1254 = vunpack.c.l.b16 %v1059
    %v1255 = vunpack.c.l.b16 %v1060
    %v1256 = vunpack.c.l.b16 %v1061
    %v1257 = vunpack.c.l.b16 %v1062
    %v1258 = vunpack.c.l.b16 %v1063
    %v1259 = vunpack.c.l.b16 %v1064
    %v1260 = vunpack.c.l.b16 %v1065
    %v1261 = vunpack.c.l.b16 %v1066
    %v1262 = vunpack.c.l.b16 %v1067
    %v1263 = vunpack.c.l.b16 %v1068
    %v1264 = vunpack.c.l.b16 %v1069
    %v1265 = vunpack.c.l.b16 %v1070
    %v1266 = vunpack.c.l.b16 %v1071
    %v1267 = vpack.c.b16 %v1252, %v1251
    %v1268 = vpack.c.b16 %v1254, %v1253
    %v1269 = vpack.c.b16 %v1256, %v1255
    %v1270 = vpack.c.b16 %v1258, %v1257
    %v1271 = vpack.c.b16 %v1260, %v1259
    %v1272 = vpack.c.b16 %v1262, %v1261
    %v1273 = vpack.c.b16 %v1264, %v1263
    %v1274 = vpack.c.b16 %v1266, %v1265
    %1283 = vmatprep.subr.bf16.mxu0 0
    %1284 = vmatpush1.bf16.msra.mxu0 %v1267
    %1285 = vmatprep.subr.bf16.mxu0 0
    %1286 = vmatpush1.bf16.msra.mxu0 %v1268
    %1287 = vmatprep.subr.bf16.mxu0 0
    %1288 = vmatpush1.bf16.msra.mxu0 %v1269
    %1289 = vmatprep.subr.bf16.mxu0 0
    %1290 = vmatpush1.bf16.msra.mxu0 %v1270
    %1291 = vmatprep.subr.bf16.mxu0 0
    %1292 = vmatpush1.bf16.msra.mxu0 %v1271
    %1293 = vmatprep.subr.bf16.mxu0 0
    %1294 = vmatpush1.bf16.msra.mxu0 %v1272
    %1295 = vmatprep.subr.bf16.mxu0 0
    %1296 = vmatpush1.bf16.msra.mxu0 %v1273
    %1297 = vmatprep.subr.bf16.mxu0 0
    %1298 = vmatpush1.bf16.msra.mxu0 %v1274
    %1299 = vmatprep.subr.bf16.mxu0 0
    %1300 = vmatpush1.bf16.msra.mxu0 0
    %1301 = vmatprep.subr.bf16.mxu0 0
    %1302 = vmatpush1.bf16.msra.mxu0 0
    %1303 = vmatprep.subr.bf16.mxu0 0
    %1304 = vmatpush1.bf16.msra.mxu0 0
    %1305 = vmatprep.subr.bf16.mxu0 0
    %1306 = vmatpush1.bf16.msra.mxu0 0
    %1307 = vmatprep.subr.bf16.mxu0 0
    %1308 = vmatpush1.bf16.msra.mxu0 0
    %1309 = vmatprep.subr.bf16.mxu0 0
    %1310 = vmatpush1.bf16.msra.mxu0 0
    %1311 = vmatprep.subr.bf16.mxu0 0
    %1312 = vmatpush1.bf16.msra.mxu0 0
    %1313 = vmatprep.subr.bf16.mxu0 0
    %1314 = vmatpush1.bf16.msra.mxu0 0
    %1315 = vmatprep.mubr.bf16.mxu0 0
    %1316 = vmatmul.mubr.bf16.gmra.mrb[0].mxu0 %v493
    %v1317 = vpop.f32.mrb[0].mxu0
    %v1318 = vadd.f32 %v1189, %v1317
    %v1319 = vpop.f32.mrb[0].mxu0
    %v1320 = vpop.f32.mrb[0].mxu0
    %v1321 = vadd.f32 %v1192, %v1320
    %v1322 = vpop.f32.mrb[0].mxu0
    %1323 = vmatprep.mubr.bf16.mxu0 0
    %1324 = vmatmul.mubr.bf16.gmra.mrb[0].mxu0 %v494
    %v1325 = vpop.f32.mrb[0].mxu0
    %v1326 = vadd.f32 %v1197, %v1325
    %v1327 = vpop.f32.mrb[0].mxu0
    %v1328 = vpop.f32.mrb[0].mxu0
    %v1329 = vadd.f32 %v1200, %v1328
    %v1330 = vpop.f32.mrb[0].mxu0
    %1331 = vmatprep.mubr.bf16.mxu0 0
    %1332 = vmatmul.mubr.bf16.gmra.mrb[0].mxu0 %v495
    %v1333 = vpop.f32.mrb[0].mxu0
    %v1334 = vadd.f32 %v1205, %v1333
    %v1335 = vpop.f32.mrb[0].mxu0
    %v1336 = vpop.f32.mrb[0].mxu0
    %v1337 = vadd.f32 %v1208, %v1336
    %v1338 = vpop.f32.mrb[0].mxu0
    %1339 = vmatprep.mubr.bf16.mxu0 0
    %1340 = vmatmul.mubr.bf16.gmra.mrb[0].mxu0 %v496
    %v1341 = vpop.f32.mrb[0].mxu0
    %v1342 = vadd.f32 %v1213, %v1341
    %v1343 = vpop.f32.mrb[0].mxu0
    %v1344 = vpop.f32.mrb[0].mxu0
    %v1345 = vadd.f32 %v1216, %v1344
    %v1346 = vpop.f32.mrb[0].mxu0
    %1347 = vmatprep.mubr.bf16.mxu0 0
    %1348 = vmatmul.mubr.bf16.gmra.mrb[0].mxu0 %v497
    %v1349 = vpop.f32.mrb[0].mxu0
    %v1350 = vadd.f32 %v1221, %v1349
    %v1351 = vpop.f32.mrb[0].mxu0
    %v1352 = vpop.f32.mrb[0].mxu0
    %v1353 = vadd.f32 %v1224, %v1352
    %v1354 = vpop.f32.mrb[0].mxu0
    %1355 = vmatprep.mubr.bf16.mxu0 0
    %1356 = vmatmul.mubr.bf16.gmra.mrb[0].mxu0 %v498
    %v1357 = vpop.f32.mrb[0].mxu0
    %v1358 = vadd.f32 %v1229, %v1357
    %v1359 = vpop.f32.mrb[0].mxu0
    %v1360 = vpop.f32.mrb[0].mxu0
    %v1361 = vadd.f32 %v1232, %v1360
    %v1362 = vpop.f32.mrb[0].mxu0
    %1363 = vdwg.mxu0
    %v1365 = vlaneseq
    %v1366 = vshrl.u32 %v1365, 7
    %v1367 = vsub.s32 0, %v1366
    %v1368 = vrot.slane %v194, %v1367
    %v1370 = vadd.f32 %v1318, %v1368
    %v1371 = vadd.f32 %v1321, %v1368
    %v1372 = vadd.f32 %v1326, %v1368
    %v1373 = vadd.f32 %v1329, %v1368
    %v1374 = vadd.f32 %v1334, %v1368
    %v1375 = vadd.f32 %v1337, %v1368
    %v1376 = vadd.f32 %v1342, %v1368
    %v1377 = vadd.f32 %v1345, %v1368
    %v1378 = vadd.f32 %v1350, %v1368
    %v1379 = vadd.f32 %v1353, %v1368
    %v1380 = vadd.f32 %v1358, %v1368
    %v1381 = vadd.f32 %v1361, %v1368
    %v1382 = vtanh.pop %v1370
    %v1383 = vtanh.pop %v1371
    %v1384 = vtanh.pop %v1372
    %v1385 = vtanh.pop %v1373
    %v1386 = vtanh.pop %v1374
    %v1387 = vtanh.pop %v1375
    %v1388 = vtanh.pop %v1376
    %v1389 = vtanh.pop %v1377
    %v1390 = vtanh.pop %v1378
    %v1391 = vtanh.pop %v1379
    %v1392 = vtanh.pop %v1380
    %v1393 = vtanh.pop %v1381
    %v1394 = vsub.f32 1.0, %v1009
    %v1395 = vsub.f32 1.0, %v1013
    %v1396 = vsub.f32 1.0, %v1017
    %v1397 = vsub.f32 1.0, %v1021
    %v1398 = vsub.f32 1.0, %v1025
    %v1399 = vsub.f32 1.0, %v1029
    %v1400 = vsub.f32 1.0, %v1033
    %v1401 = vsub.f32 1.0, %v1037
    %v1402 = vsub.f32 1.0, %v1041
    %v1403 = vsub.f32 1.0, %v1045
    %v1404 = vsub.f32 1.0, %v1049
    %v1405 = vsub.f32 1.0, %v1053
    %v1406 = vmul.f32 %v1394, %v180
    %v1407 = vmul.f32 %v1395, %v181
    %v1408 = vmul.f32 %v1396, %v182
    %v1409 = vmul.f32 %v1397, %v183
    %v1410 = vmul.f32 %v1398, %v184
    %v1411 = vmul.f32 %v1399, %v185
    %v1412 = vmul.f32 %v1400, %v186
    %v1413 = vmul.f32 %v1401, %v187
    %v1414 = vmul.f32 %v1402, %v188
    %v1415 = vmul.f32 %v1403, %v189
    %v1416 = vmul.f32 %v1404, %v190
    %v1417 = vmul.f32 %v1405, %v191
    %v1418 = vmul.f32 %v1009, %v1382
    %v1419 = vmul.f32 %v1013, %v1383
    %v1420 = vmul.f32 %v1017, %v1384
    %v1421 = vmul.f32 %v1021, %v1385
    %v1422 = vmul.f32 %v1025, %v1386
    %v1423 = vmul.f32 %v1029, %v1387
    %v1424 = vmul.f32 %v1033, %v1388
    %v1425 = vmul.f32 %v1037, %v1389
    %v1426 = vmul.f32 %v1041, %v1390
    %v1427 = vmul.f32 %v1045, %v1391
    %v1428 = vmul.f32 %v1049, %v1392
    %v1429 = vmul.f32 %v1053, %v1393
    %v1430 = vadd.f32 %v1406, %v1418
    %v1431 = vadd.f32 %v1407, %v1419
    %v1432 = vadd.f32 %v1408, %v1420
    %v1433 = vadd.f32 %v1409, %v1421
    %v1434 = vadd.f32 %v1410, %v1422
    %v1435 = vadd.f32 %v1411, %v1423
    %v1436 = vadd.f32 %v1412, %v1424
    %v1437 = vadd.f32 %v1413, %v1425
    %v1438 = vadd.f32 %v1414, %v1426
    %v1439 = vadd.f32 %v1415, %v1427
    %v1440 = vadd.f32 %v1416, %v1428
    %v1441 = vadd.f32 %v1417, %v1429
    %v1442 = vpack.c.bf16 %v1431, %v1430
    %v1443 = vpack.c.bf16 %v1433, %v1432
    %v1444 = vpack.c.bf16 %v1435, %v1434
    %v1445 = vpack.c.bf16 %v1437, %v1436
    %v1446 = vpack.c.bf16 %v1439, %v1438
    %v1447 = vpack.c.bf16 %v1441, %v1440
    %1448 = vmatprep.subr.bf16.mxu0 0
    %1449 = vmatpush1.bf16.msra.mxu0 %v285
    %1450 = vmatprep.subr.bf16.mxu0 0
    %1451 = vmatpush1.bf16.msra.mxu0 %v286
    %1452 = vmatprep.subr.bf16.mxu0 0
    %1453 = vmatpush1.bf16.msra.mxu0 %v287
    %1454 = vmatprep.subr.bf16.mxu0 0
    %1455 = vmatpush1.bf16.msra.mxu0 %v288
    %1456 = vmatprep.subr.bf16.mxu0 0
    %1457 = vmatpush1.bf16.msra.mxu0 %v289
    %1458 = vmatprep.subr.bf16.mxu0 0
    %1459 = vmatpush1.bf16.msra.mxu0 %v290
    %1460 = vmatprep.subr.bf16.mxu0 0
    %1461 = vmatpush1.bf16.msra.mxu0 %v291
    %1462 = vmatprep.subr.bf16.mxu0 0
    %1463 = vmatpush1.bf16.msra.mxu0 %v292
    %1464 = vmatprep.subr.bf16.mxu0 0
    %1465 = vmatpush1.bf16.msra.mxu0 0
    %1466 = vmatprep.subr.bf16.mxu0 0
    %1467 = vmatpush1.bf16.msra.mxu0 0
    %1468 = vmatprep.subr.bf16.mxu0 0
    %1469 = vmatpush1.bf16.msra.mxu0 0
    %1470 = vmatprep.subr.bf16.mxu0 0
    %1471 = vmatpush1.bf16.msra.mxu0 0
    %1472 = vmatprep.subr.bf16.mxu0 0
    %1473 = vmatpush1.bf16.msra.mxu0 0
    %1474 = vmatprep.subr.bf16.mxu0 0
    %1475 = vmatpush1.bf16.msra.mxu0 0
    %1476 = vmatprep.subr.bf16.mxu0 0
    %1477 = vmatpush1.bf16.msra.mxu0 0
    %1478 = vmatprep.subr.bf16.mxu0 0
    %1479 = vmatpush1.bf16.msra.mxu0 0
    %1480 = vmatprep.mubr.bf16.mxu0 0
    %1481 = vmatmul.mubr.bf16.gmra.mrb[0].mxu0 %v1442
    %v1482 = vpop.f32.mrb[0].mxu0
    %v1483 = vadd.f32 %v215, %v1482
    %v1484 = vpop.f32.mrb[0].mxu0
    %v1485 = vpop.f32.mrb[0].mxu0
    %v1486 = vadd.f32 %v215, %v1485
    %v1487 = vpop.f32.mrb[0].mxu0
    %1488 = vmatprep.mubr.bf16.mxu0 0
    %1489 = vmatmul.mubr.bf16.gmra.mrb[0].mxu0 %v1443
    %v1490 = vpop.f32.mrb[0].mxu0
    %v1491 = vadd.f32 %v215, %v1490
    %v1492 = vpop.f32.mrb[0].mxu0
    %v1493 = vpop.f32.mrb[0].mxu0
    %v1494 = vadd.f32 %v215, %v1493
    %v1495 = vpop.f32.mrb[0].mxu0
    %1496 = vmatprep.mubr.bf16.mxu0 0
    %1497 = vmatmul.mubr.bf16.gmra.mrb[0].mxu0 %v1444
    %v1498 = vpop.f32.mrb[0].mxu0
    %v1499 = vadd.f32 %v215, %v1498
    %v1500 = vpop.f32.mrb[0].mxu0
    %v1501 = vpop.f32.mrb[0].mxu0
    %v1502 = vadd.f32 %v215, %v1501
    %v1503 = vpop.f32.mrb[0].mxu0
    %1504 = vmatprep.mubr.bf16.mxu0 0
    %1505 = vmatmul.mubr.bf16.gmra.mrb[0].mxu0 %v1445
    %v1506 = vpop.f32.mrb[0].mxu0
    %v1507 = vadd.f32 %v215, %v1506
    %v1508 = vpop.f32.mrb[0].mxu0
    %v1509 = vpop.f32.mrb[0].mxu0
    %v1510 = vadd.f32 %v215, %v1509
    %v1511 = vpop.f32.mrb[0].mxu0
    %1512 = vmatprep.mubr.bf16.mxu0 0
    %1513 = vmatmul.mubr.bf16.gmra.mrb[0].mxu0 %v1446
    %v1514 = vpop.f32.mrb[0].mxu0
    %v1515 = vadd.f32 %v215, %v1514
    %v1516 = vpop.f32.mrb[0].mxu0
    %v1517 = vpop.f32.mrb[0].mxu0
    %v1518 = vadd.f32 %v215, %v1517
    %v1519 = vpop.f32.mrb[0].mxu0
    %1520 = vmatprep.mubr.bf16.mxu0 0
    %1521 = vmatmul.mubr.bf16.gmra.mrb[0].mxu0 %v1447
    %v1522 = vpop.f32.mrb[0].mxu0
    %v1523 = vadd.f32 %v215, %v1522
    %v1524 = vpop.f32.mrb[0].mxu0
    %v1525 = vpop.f32.mrb[0].mxu0
    %v1526 = vadd.f32 %v215, %v1525
    %v1527 = vpop.f32.mrb[0].mxu0
    %1528 = vdwg.mxu0
    %v1529 = vpack.c.bf16 %v1486, %v1483
    %v1530 = vpack.c.bf16 %v1494, %v1491
    %v1531 = vpack.c.bf16 %v1502, %v1499
    %v1532 = vpack.c.bf16 %v1510, %v1507
    %v1533 = vpack.c.bf16 %v1518, %v1515
    %v1534 = vpack.c.bf16 %v1526, %v1523
    %1535 = vmatprep.subr.bf16.mxu0 0
    %1536 = vmatpush1.bf16.msra.mxu0 %v1529
    %1537 = vmatprep.subr.bf16.mxu0 0
    %1538 = vmatpush1.bf16.msra.mxu0 %v1530
    %1539 = vmatprep.subr.bf16.mxu0 0
    %1540 = vmatpush1.bf16.msra.mxu0 %v1531
    %1541 = vmatprep.subr.bf16.mxu0 0
    %1542 = vmatpush1.bf16.msra.mxu0 %v1532
    %1543 = vmatprep.subr.bf16.mxu0 0
    %1544 = vmatpush1.bf16.msra.mxu0 %v1533
    %1545 = vmatprep.subr.bf16.mxu0 0
    %1546 = vmatpush1.bf16.msra.mxu0 %v1534
    %1547 = vmatprep.subr.bf16.mxu0 0
    %1548 = vmatpush1.bf16.msra.mxu0 0
    %1549 = vmatprep.subr.bf16.mxu0 0
    %1550 = vmatpush1.bf16.msra.mxu0 0
    %1551 = vmatprep.subr.bf16.mxu0 0
    %1552 = vmatpush1.bf16.msra.mxu0 0
    %1553 = vmatprep.subr.bf16.mxu0 0
    %1554 = vmatpush1.bf16.msra.mxu0 0
    %1555 = vmatprep.subr.bf16.mxu0 0
    %1556 = vmatpush1.bf16.msra.mxu0 0
    %1557 = vmatprep.subr.bf16.mxu0 0
    %1558 = vmatpush1.bf16.msra.mxu0 0
    %1559 = vmatprep.subr.bf16.mxu0 0
    %1560 = vmatpush1.bf16.msra.mxu0 0
    %1561 = vmatprep.subr.bf16.mxu0 0
    %1562 = vmatpush1.bf16.msra.mxu0 0
    %1563 = vmatprep.subr.bf16.mxu0 0
    %1564 = vmatpush1.bf16.msra.mxu0 0
    %1565 = vmatprep.subr.bf16.mxu0 0
    %1566 = vmatpush1.bf16.msra.mxu0 0
    %1567 = vmatprep.mubr.bf16.mxu0 0
    %1568 = vmatmul.mubr.bf16.gmra.mrb[0].mxu0 %v395
    %v1569 = vpop.f32.mrb[0].mxu0
    %v1570 = vadd.f32 0.0, %v1569
    %v1571 = vpop.f32.mrb[0].mxu0
    %v1572 = vpop.f32.mrb[0].mxu0
    %v1573 = vadd.f32 0.0, %v1572
    %v1574 = vpop.f32.mrb[0].mxu0
    %1575 = vmatprep.mubr.bf16.mxu0 0
    %1576 = vmatmul.mubr.bf16.gmra.mrb[0].mxu0 %v398
    %v1577 = vpop.f32.mrb[0].mxu0
    %v1578 = vadd.f32 0.0, %v1577
    %v1579 = vpop.f32.mrb[0].mxu0
    %v1580 = vpop.f32.mrb[0].mxu0
    %v1581 = vadd.f32 0.0, %v1580
    %v1582 = vpop.f32.mrb[0].mxu0
    %1583 = vmatprep.mubr.bf16.mxu0 0
    %1584 = vmatmul.mubr.bf16.gmra.mrb[0].mxu0 %v401
    %v1585 = vpop.f32.mrb[0].mxu0
    %v1586 = vadd.f32 0.0, %v1585
    %v1587 = vpop.f32.mrb[0].mxu0
    %v1588 = vpop.f32.mrb[0].mxu0
    %v1589 = vadd.f32 0.0, %v1588
    %v1590 = vpop.f32.mrb[0].mxu0
    %1591 = vmatprep.mubr.bf16.mxu0 0
    %1592 = vmatmul.mubr.bf16.gmra.mrb[0].mxu0 %v404
    %v1593 = vpop.f32.mrb[0].mxu0
    %v1594 = vadd.f32 0.0, %v1593
    %v1595 = vpop.f32.mrb[0].mxu0
    %v1596 = vpop.f32.mrb[0].mxu0
    %v1597 = vadd.f32 0.0, %v1596
    %v1598 = vpop.f32.mrb[0].mxu0
    %1599 = vmatprep.mubr.bf16.mxu0 0
    %1600 = vmatmul.mubr.bf16.gmra.mrb[0].mxu0 %v407
    %v1601 = vpop.f32.mrb[0].mxu0
    %v1602 = vadd.f32 0.0, %v1601
    %v1603 = vpop.f32.mrb[0].mxu0
    %v1604 = vpop.f32.mrb[0].mxu0
    %v1605 = vadd.f32 0.0, %v1604
    %v1606 = vpop.f32.mrb[0].mxu0
    %1607 = vmatprep.mubr.bf16.mxu0 0
    %1608 = vmatmul.mubr.bf16.gmra.mrb[0].mxu0 %v410
    %v1609 = vpop.f32.mrb[0].mxu0
    %v1610 = vadd.f32 0.0, %v1609
    %v1611 = vpop.f32.mrb[0].mxu0
    %v1612 = vpop.f32.mrb[0].mxu0
    %v1613 = vadd.f32 0.0, %v1612
    %v1614 = vpop.f32.mrb[0].mxu0
    %1615 = vdwg.mxu0
    %v1616 = vpack.c.bf16 %v1573, %v1570
    %v1617 = vpack.c.bf16 %v1581, %v1578
    %v1618 = vpack.c.bf16 %v1589, %v1586
    %v1619 = vpack.c.bf16 %v1597, %v1594
    %v1620 = vpack.c.bf16 %v1605, %v1602
    %v1621 = vpack.c.bf16 %v1613, %v1610
    %1622 = vmatprep.subr.bf16.mxu0 %v580
    %1623 = vmatpush1.bf16.msra.mxu0 %v579
    %1624 = vmatprep.subr.bf16.mxu0 %v582
    %1625 = vmatpush1.bf16.msra.mxu0 %v581
    %1626 = vmatprep.subr.bf16.mxu0 %v584
    %1627 = vmatpush1.bf16.msra.mxu0 %v583
    %1628 = vmatprep.subr.bf16.mxu0 %v586
    %1629 = vmatpush1.bf16.msra.mxu0 %v585
    %1630 = vmatprep.subr.bf16.mxu0 %v588
    %1631 = vmatpush1.bf16.msra.mxu0 %v587
    %1632 = vmatprep.subr.bf16.mxu0 %v590
    %1633 = vmatpush1.bf16.msra.mxu0 %v589
    %1634 = vmatprep.subr.bf16.mxu0 %v592
    %1635 = vmatpush1.bf16.msra.mxu0 %v591
    %1636 = vmatprep.subr.bf16.mxu0 %v594
    %1637 = vmatpush1.bf16.msra.mxu0 %v593
    %1638 = vmatprep.subr.bf16.mxu0 0
    %1639 = vmatpush1.bf16.msra.mxu0 0
    %1640 = vmatprep.subr.bf16.mxu0 0
    %1641 = vmatpush1.bf16.msra.mxu0 0
    %1642 = vmatprep.subr.bf16.mxu0 0
    %1643 = vmatpush1.bf16.msra.mxu0 0
    %1644 = vmatprep.subr.bf16.mxu0 0
    %1645 = vmatpush1.bf16.msra.mxu0 0
    %1646 = vmatprep.subr.bf16.mxu0 0
    %1647 = vmatpush1.bf16.msra.mxu0 0
    %1648 = vmatprep.subr.bf16.mxu0 0
    %1649 = vmatpush1.bf16.msra.mxu0 0
    %1650 = vmatprep.subr.bf16.mxu0 0
    %1651 = vmatpush1.bf16.msra.mxu0 0
    %1652 = vmatprep.subr.bf16.mxu0 0
    %1653 = vmatpush1.bf16.msra.mxu0 0
    %1654 = vmatprep.mubr.bf16.mxu0 0
    %1655 = vmatmul.mubr.bf16.gmra.mrb[0].mxu0 %v1442
    %v1656 = vpop.f32.mrb[0].mxu0
    %v1657 = vadd.f32 0.0, %v1656
    %v1658 = vpop.f32.mrb[0].mxu0
    %v1659 = vadd.f32 0.0, %v1658
    %v1660 = vpop.f32.mrb[0].mxu0
    %v1661 = vadd.f32 0.0, %v1660
    %v1662 = vpop.f32.mrb[0].mxu0
    %v1663 = vadd.f32 0.0, %v1662
    %1664 = vmatprep.mubr.bf16.mxu0 0
    %1665 = vmatmul.mubr.bf16.gmra.mrb[0].mxu0 %v1443
    %v1666 = vpop.f32.mrb[0].mxu0
    %v1667 = vadd.f32 0.0, %v1666
    %v1668 = vpop.f32.mrb[0].mxu0
    %v1669 = vadd.f32 0.0, %v1668
    %v1670 = vpop.f32.mrb[0].mxu0
    %v1671 = vadd.f32 0.0, %v1670
    %v1672 = vpop.f32.mrb[0].mxu0
    %v1673 = vadd.f32 0.0, %v1672
    %1674 = vmatprep.mubr.bf16.mxu0 0
    %1675 = vmatmul.mubr.bf16.gmra.mrb[0].mxu0 %v1444
    %v1676 = vpop.f32.mrb[0].mxu0
    %v1677 = vadd.f32 0.0, %v1676
    %v1678 = vpop.f32.mrb[0].mxu0
    %v1679 = vadd.f32 0.0, %v1678
    %v1680 = vpop.f32.mrb[0].mxu0
    %v1681 = vadd.f32 0.0, %v1680
    %v1682 = vpop.f32.mrb[0].mxu0
    %v1683 = vadd.f32 0.0, %v1682
    %1684 = vmatprep.mubr.bf16.mxu0 0
    %1685 = vmatmul.mubr.bf16.gmra.mrb[0].mxu0 %v1445
    %v1686 = vpop.f32.mrb[0].mxu0
    %v1687 = vadd.f32 0.0, %v1686
    %v1688 = vpop.f32.mrb[0].mxu0
    %v1689 = vadd.f32 0.0, %v1688
    %v1690 = vpop.f32.mrb[0].mxu0
    %v1691 = vadd.f32 0.0, %v1690
    %v1692 = vpop.f32.mrb[0].mxu0
    %v1693 = vadd.f32 0.0, %v1692
    %1694 = vmatprep.mubr.bf16.mxu0 0
    %1695 = vmatmul.mubr.bf16.gmra.mrb[0].mxu0 %v1446
    %v1696 = vpop.f32.mrb[0].mxu0
    %v1697 = vadd.f32 0.0, %v1696
    %v1698 = vpop.f32.mrb[0].mxu0
    %v1699 = vadd.f32 0.0, %v1698
    %v1700 = vpop.f32.mrb[0].mxu0
    %v1701 = vadd.f32 0.0, %v1700
    %v1702 = vpop.f32.mrb[0].mxu0
    %v1703 = vadd.f32 0.0, %v1702
    %1704 = vmatprep.mubr.bf16.mxu0 0
    %1705 = vmatmul.mubr.bf16.gmra.mrb[0].mxu0 %v1447
    %v1706 = vpop.f32.mrb[0].mxu0
    %v1707 = vadd.f32 0.0, %v1706
    %v1708 = vpop.f32.mrb[0].mxu0
    %v1709 = vadd.f32 0.0, %v1708
    %v1710 = vpop.f32.mrb[0].mxu0
    %v1711 = vadd.f32 0.0, %v1710
    %v1712 = vpop.f32.mrb[0].mxu0
    %v1713 = vadd.f32 0.0, %v1712
    %1714 = vdwg.mxu0
    %1715 = vmatprep.subr.bf16.mxu0 %v753
    %1716 = vmatpush1.bf16.msra.mxu0 %v752
    %1717 = vmatprep.subr.bf16.mxu0 %v755
    %1718 = vmatpush1.bf16.msra.mxu0 %v754
    %1719 = vmatprep.subr.bf16.mxu0 %v757
    %1720 = vmatpush1.bf16.msra.mxu0 %v756
    %1721 = vmatprep.subr.bf16.mxu0 %v759
    %1722 = vmatpush1.bf16.msra.mxu0 %v758
    %1723 = vmatprep.subr.bf16.mxu0 %v761
    %1724 = vmatpush1.bf16.msra.mxu0 %v760
    %1725 = vmatprep.subr.bf16.mxu0 %v763
    %1726 = vmatpush1.bf16.msra.mxu0 %v762
    %1727 = vmatprep.subr.bf16.mxu0 %v765
    %1728 = vmatpush1.bf16.msra.mxu0 %v764
    %1729 = vmatprep.subr.bf16.mxu0 %v767
    %1730 = vmatpush1.bf16.msra.mxu0 %v766
    %1731 = vmatprep.subr.bf16.mxu0 0
    %1732 = vmatpush1.bf16.msra.mxu0 0
    %1733 = vmatprep.subr.bf16.mxu0 0
    %1734 = vmatpush1.bf16.msra.mxu0 0
    %1735 = vmatprep.subr.bf16.mxu0 0
    %1736 = vmatpush1.bf16.msra.mxu0 0
    %1737 = vmatprep.subr.bf16.mxu0 0
    %1738 = vmatpush1.bf16.msra.mxu0 0
    %1739 = vmatprep.subr.bf16.mxu0 0
    %1740 = vmatpush1.bf16.msra.mxu0 0
    %1741 = vmatprep.subr.bf16.mxu0 0
    %1742 = vmatpush1.bf16.msra.mxu0 0
    %1743 = vmatprep.subr.bf16.mxu0 0
    %1744 = vmatpush1.bf16.msra.mxu0 0
    %1745 = vmatprep.subr.bf16.mxu0 0
    %1746 = vmatpush1.bf16.msra.mxu0 0
    %1747 = vmatprep.mubr.bf16.mxu0 0
    %1748 = vmatmul.mubr.bf16.gmra.mrb[0].mxu0 %v1616
    %v1749 = vpop.f32.mrb[0].mxu0
    %v1750 = vadd.f32 %v1657, %v1749
    %v1751 = vpop.f32.mrb[0].mxu0
    %v1752 = vadd.f32 %v1659, %v1751
    %v1753 = vpop.f32.mrb[0].mxu0
    %v1754 = vadd.f32 %v1661, %v1753
    %v1755 = vpop.f32.mrb[0].mxu0
    %v1756 = vadd.f32 %v1663, %v1755
    %1757 = vmatprep.mubr.bf16.mxu0 0
    %1758 = vmatmul.mubr.bf16.gmra.mrb[0].mxu0 %v1617
    %v1759 = vpop.f32.mrb[0].mxu0
    %v1760 = vadd.f32 %v1667, %v1759
    %v1761 = vpop.f32.mrb[0].mxu0
    %v1762 = vadd.f32 %v1669, %v1761
    %v1763 = vpop.f32.mrb[0].mxu0
    %v1764 = vadd.f32 %v1671, %v1763
    %v1765 = vpop.f32.mrb[0].mxu0
    %v1766 = vadd.f32 %v1673, %v1765
    %1767 = vmatprep.mubr.bf16.mxu0 0
    %1768 = vmatmul.mubr.bf16.gmra.mrb[0].mxu0 %v1618
    %v1769 = vpop.f32.mrb[0].mxu0
    %v1770 = vadd.f32 %v1677, %v1769
    %v1771 = vpop.f32.mrb[0].mxu0
    %v1772 = vadd.f32 %v1679, %v1771
    %v1773 = vpop.f32.mrb[0].mxu0
    %v1774 = vadd.f32 %v1681, %v1773
    %v1775 = vpop.f32.mrb[0].mxu0
    %v1776 = vadd.f32 %v1683, %v1775
    %1777 = vmatprep.mubr.bf16.mxu0 0
    %1778 = vmatmul.mubr.bf16.gmra.mrb[0].mxu0 %v1619
    %v1779 = vpop.f32.mrb[0].mxu0
    %v1780 = vadd.f32 %v1687, %v1779
    %v1781 = vpop.f32.mrb[0].mxu0
    %v1782 = vadd.f32 %v1689, %v1781
    %v1783 = vpop.f32.mrb[0].mxu0
    %v1784 = vadd.f32 %v1691, %v1783
    %v1785 = vpop.f32.mrb[0].mxu0
    %v1786 = vadd.f32 %v1693, %v1785
    %1787 = vmatprep.mubr.bf16.mxu0 0
    %1788 = vmatmul.mubr.bf16.gmra.mrb[0].mxu0 %v1620
    %v1789 = vpop.f32.mrb[0].mxu0
    %v1790 = vadd.f32 %v1697, %v1789
    %v1791 = vpop.f32.mrb[0].mxu0
    %v1792 = vadd.f32 %v1699, %v1791
    %v1793 = vpop.f32.mrb[0].mxu0
    %v1794 = vadd.f32 %v1701, %v1793
    %v1795 = vpop.f32.mrb[0].mxu0
    %v1796 = vadd.f32 %v1703, %v1795
    %1797 = vmatprep.mubr.bf16.mxu0 0
    %1798 = vmatmul.mubr.bf16.gmra.mrb[0].mxu0 %v1621
    %v1799 = vpop.f32.mrb[0].mxu0
    %v1800 = vadd.f32 %v1707, %v1799
    %v1801 = vpop.f32.mrb[0].mxu0
    %v1802 = vadd.f32 %v1709, %v1801
    %v1803 = vpop.f32.mrb[0].mxu0
    %v1804 = vadd.f32 %v1711, %v1803
    %v1805 = vpop.f32.mrb[0].mxu0
    %v1806 = vadd.f32 %v1713, %v1805
    %1807 = vdwg.mxu0
    %v1808 = vadd.f32 %v1750, %v881
    %v1809 = vadd.f32 %v1752, %v885
    %v1810 = vadd.f32 %v1754, %v881
    %v1811 = vadd.f32 %v1756, %v885
    %v1812 = vadd.f32 %v1760, %v881
    %v1813 = vadd.f32 %v1762, %v885
    %v1814 = vadd.f32 %v1764, %v881
    %v1815 = vadd.f32 %v1766, %v885
    %v1816 = vadd.f32 %v1770, %v881
    %v1817 = vadd.f32 %v1772, %v885
    %v1818 = vadd.f32 %v1774, %v881
    %v1819 = vadd.f32 %v1776, %v885
    %v1820 = vadd.f32 %v1780, %v881
    %v1821 = vadd.f32 %v1782, %v885
    %v1822 = vadd.f32 %v1784, %v881
    %v1823 = vadd.f32 %v1786, %v885
    %v1824 = vadd.f32 %v1790, %v881
    %v1825 = vadd.f32 %v1792, %v885
    %v1826 = vadd.f32 %v1794, %v881
    %v1827 = vadd.f32 %v1796, %v885
    %v1828 = vadd.f32 %v1800, %v881
    %v1829 = vadd.f32 %v1802, %v885
    %v1830 = vadd.f32 %v1804, %v881
    %v1831 = vadd.f32 %v1806, %v885
    %v1832 = vxor.u32 %v1808, 2147483648
    %v1833 = vxor.u32 %v1809, 2147483648
    %v1834 = vxor.u32 %v1810, 2147483648
    %v1835 = vxor.u32 %v1811, 2147483648
    %v1836 = vxor.u32 %v1812, 2147483648
    %v1837 = vxor.u32 %v1813, 2147483648
    %v1838 = vxor.u32 %v1814, 2147483648
    %v1839 = vxor.u32 %v1815, 2147483648
    %v1840 = vxor.u32 %v1816, 2147483648
    %v1841 = vxor.u32 %v1817, 2147483648
    %v1842 = vxor.u32 %v1818, 2147483648
    %v1843 = vxor.u32 %v1819, 2147483648
    %v1844 = vxor.u32 %v1820, 2147483648
    %v1845 = vxor.u32 %v1821, 2147483648
    %v1846 = vxor.u32 %v1822, 2147483648
    %v1847 = vxor.u32 %v1823, 2147483648
    %v1848 = vxor.u32 %v1824, 2147483648
    %v1849 = vxor.u32 %v1825, 2147483648
    %v1850 = vxor.u32 %v1826, 2147483648
    %v1851 = vxor.u32 %v1827, 2147483648
    %v1852 = vxor.u32 %v1828, 2147483648
    %v1853 = vxor.u32 %v1829, 2147483648
    %v1854 = vxor.u32 %v1830, 2147483648
    %v1855 = vxor.u32 %v1831, 2147483648
    %v1856 = vmul.f32 %v1832, 1.442695
    %v1857 = vpow.pop %v1856
    %v1858 = vmul.f32 %v1833, 1.442695
    %v1859 = vpow.pop %v1858
    %v1860 = vmul.f32 %v1834, 1.442695
    %v1861 = vpow.pop %v1860
    %v1862 = vmul.f32 %v1835, 1.442695
    %v1863 = vpow.pop %v1862
    %v1864 = vmul.f32 %v1836, 1.442695
    %v1865 = vpow.pop %v1864
    %v1866 = vmul.f32 %v1837, 1.442695
    %v1867 = vpow.pop %v1866
    %v1868 = vmul.f32 %v1838, 1.442695
    %v1869 = vpow.pop %v1868
    %v1870 = vmul.f32 %v1839, 1.442695
    %v1871 = vpow.pop %v1870
    %v1872 = vmul.f32 %v1840, 1.442695
    %v1873 = vpow.pop %v1872
    %v1874 = vmul.f32 %v1841, 1.442695
    %v1875 = vpow.pop %v1874
    %v1876 = vmul.f32 %v1842, 1.442695
    %v1877 = vpow.pop %v1876
    %v1878 = vmul.f32 %v1843, 1.442695
    %v1879 = vpow.pop %v1878
    %v1880 = vmul.f32 %v1844, 1.442695
    %v1881 = vpow.pop %v1880
    %v1882 = vmul.f32 %v1845, 1.442695
    %v1883 = vpow.pop %v1882
    %v1884 = vmul.f32 %v1846, 1.442695
    %v1885 = vpow.pop %v1884
    %v1886 = vmul.f32 %v1847, 1.442695
    %v1887 = vpow.pop %v1886
    %v1888 = vmul.f32 %v1848, 1.442695
    %v1889 = vpow.pop %v1888
    %v1890 = vmul.f32 %v1849, 1.442695
    %v1891 = vpow.pop %v1890
    %v1892 = vmul.f32 %v1850, 1.442695
    %v1893 = vpow.pop %v1892
    %v1894 = vmul.f32 %v1851, 1.442695
    %v1895 = vpow.pop %v1894
    %v1896 = vmul.f32 %v1852, 1.442695
    %v1897 = vpow.pop %v1896
    %v1898 = vmul.f32 %v1853, 1.442695
    %v1899 = vpow.pop %v1898
    %v1900 = vmul.f32 %v1854, 1.442695
    %v1901 = vpow.pop %v1900
    %v1902 = vmul.f32 %v1855, 1.442695
    %v1903 = vpow.pop %v1902
    %v1904 = vadd.f32 %v1857, 1.0
    %v1905 = vadd.f32 %v1859, 1.0
    %v1906 = vadd.f32 %v1861, 1.0
    %v1907 = vadd.f32 %v1863, 1.0
    %v1908 = vadd.f32 %v1865, 1.0
    %v1909 = vadd.f32 %v1867, 1.0
    %v1910 = vadd.f32 %v1869, 1.0
    %v1911 = vadd.f32 %v1871, 1.0
    %v1912 = vadd.f32 %v1873, 1.0
    %v1913 = vadd.f32 %v1875, 1.0
    %v1914 = vadd.f32 %v1877, 1.0
    %v1915 = vadd.f32 %v1879, 1.0
    %v1916 = vadd.f32 %v1881, 1.0
    %v1917 = vadd.f32 %v1883, 1.0
    %v1918 = vadd.f32 %v1885, 1.0
    %v1919 = vadd.f32 %v1887, 1.0
    %v1920 = vadd.f32 %v1889, 1.0
    %v1921 = vadd.f32 %v1891, 1.0
    %v1922 = vadd.f32 %v1893, 1.0
    %v1923 = vadd.f32 %v1895, 1.0
    %v1924 = vadd.f32 %v1897, 1.0
    %v1925 = vadd.f32 %v1899, 1.0
    %v1926 = vadd.f32 %v1901, 1.0
    %v1927 = vadd.f32 %v1903, 1.0
    %v1928 = vrcp.pop %v1904
    %v1929 = vmul.f32 1.0, %v1928
    %v1930 = vrcp.pop %v1905
    %v1931 = vmul.f32 1.0, %v1930
    %v1932 = vrcp.pop %v1906
    %v1933 = vmul.f32 1.0, %v1932
    %v1934 = vrcp.pop %v1907
    %v1935 = vmul.f32 1.0, %v1934
    %v1936 = vrcp.pop %v1908
    %v1937 = vmul.f32 1.0, %v1936
    %v1938 = vrcp.pop %v1909
    %v1939 = vmul.f32 1.0, %v1938
    %v1940 = vrcp.pop %v1910
    %v1941 = vmul.f32 1.0, %v1940
    %v1942 = vrcp.pop %v1911
    %v1943 = vmul.f32 1.0, %v1942
    %v1944 = vrcp.pop %v1912
    %v1945 = vmul.f32 1.0, %v1944
    %v1946 = vrcp.pop %v1913
    %v1947 = vmul.f32 1.0, %v1946
    %v1948 = vrcp.pop %v1914
    %v1949 = vmul.f32 1.0, %v1948
    %v1950 = vrcp.pop %v1915
    %v1951 = vmul.f32 1.0, %v1950
    %v1952 = vrcp.pop %v1916
    %v1953 = vmul.f32 1.0, %v1952
    %v1954 = vrcp.pop %v1917
    %v1955 = vmul.f32 1.0, %v1954
    %v1956 = vrcp.pop %v1918
    %v1957 = vmul.f32 1.0, %v1956
    %v1958 = vrcp.pop %v1919
    %v1959 = vmul.f32 1.0, %v1958
    %v1960 = vrcp.pop %v1920
    %v1961 = vmul.f32 1.0, %v1960
    %v1962 = vrcp.pop %v1921
    %v1963 = vmul.f32 1.0, %v1962
    %v1964 = vrcp.pop %v1922
    %v1965 = vmul.f32 1.0, %v1964
    %v1966 = vrcp.pop %v1923
    %v1967 = vmul.f32 1.0, %v1966
    %v1968 = vrcp.pop %v1924
    %v1969 = vmul.f32 1.0, %v1968
    %v1970 = vrcp.pop %v1925
    %v1971 = vmul.f32 1.0, %v1970
    %v1972 = vrcp.pop %v1926
    %v1973 = vmul.f32 1.0, %v1972
    %v1974 = vrcp.pop %v1927
    %v1975 = vmul.f32 1.0, %v1974
    %v1976 = vmul.f32 %v1931, %v1430
    %v1977 = vmul.f32 %v1935, %v1431
    %v1978 = vmul.f32 %v1939, %v1432
    %v1979 = vmul.f32 %v1943, %v1433
    %v1980 = vmul.f32 %v1947, %v1434
    %v1981 = vmul.f32 %v1951, %v1435
    %v1982 = vmul.f32 %v1955, %v1436
    %v1983 = vmul.f32 %v1959, %v1437
    %v1984 = vmul.f32 %v1963, %v1438
    %v1985 = vmul.f32 %v1967, %v1439
    %v1986 = vmul.f32 %v1971, %v1440
    %v1987 = vmul.f32 %v1975, %v1441
    %v1988 = vpack.c.bf16 %v1977, %v1976
    %v1989 = vpack.c.bf16 %v1979, %v1978
    %v1990 = vpack.c.bf16 %v1981, %v1980
    %v1991 = vpack.c.bf16 %v1983, %v1982
    %v1992 = vpack.c.bf16 %v1985, %v1984
    %v1993 = vpack.c.bf16 %v1987, %v1986
    %1994 = vmatprep.subr.bf16.mxu0 0
    %1995 = vmatpush1.bf16.msra.mxu0 %v1138
    %1996 = vmatprep.subr.bf16.mxu0 0
    %1997 = vmatpush1.bf16.msra.mxu0 %v1139
    %1998 = vmatprep.subr.bf16.mxu0 0
    %1999 = vmatpush1.bf16.msra.mxu0 %v1140
    %2000 = vmatprep.subr.bf16.mxu0 0
    %2001 = vmatpush1.bf16.msra.mxu0 %v1141
    %2002 = vmatprep.subr.bf16.mxu0 0
    %2003 = vmatpush1.bf16.msra.mxu0 %v1142
    %2004 = vmatprep.subr.bf16.mxu0 0
    %2005 = vmatpush1.bf16.msra.mxu0 %v1143
    %2006 = vmatprep.subr.bf16.mxu0 0
    %2007 = vmatpush1.bf16.msra.mxu0 %v1144
    %2008 = vmatprep.subr.bf16.mxu0 0
    %2009 = vmatpush1.bf16.msra.mxu0 %v1145
    %2010 = vmatprep.subr.bf16.mxu0 0
    %2011 = vmatpush1.bf16.msra.mxu0 0
    %2012 = vmatprep.subr.bf16.mxu0 0
    %2013 = vmatpush1.bf16.msra.mxu0 0
    %2014 = vmatprep.subr.bf16.mxu0 0
    %2015 = vmatpush1.bf16.msra.mxu0 0
    %2016 = vmatprep.subr.bf16.mxu0 0
    %2017 = vmatpush1.bf16.msra.mxu0 0
    %2018 = vmatprep.subr.bf16.mxu0 0
    %2019 = vmatpush1.bf16.msra.mxu0 0
    %2020 = vmatprep.subr.bf16.mxu0 0
    %2021 = vmatpush1.bf16.msra.mxu0 0
    %2022 = vmatprep.subr.bf16.mxu0 0
    %2023 = vmatpush1.bf16.msra.mxu0 0
    %2024 = vmatprep.subr.bf16.mxu0 0
    %2025 = vmatpush1.bf16.msra.mxu0 0
    %2026 = vmatprep.mubr.bf16.mxu0 0
    %2027 = vmatmul.mubr.bf16.gmra.mrb[0].mxu0 %v1988
    %v2028 = vpop.f32.mrb[0].mxu0
    %v2029 = vadd.f32 0.0, %v2028
    %v2030 = vpop.f32.mrb[0].mxu0
    %v2031 = vpop.f32.mrb[0].mxu0
    %v2032 = vadd.f32 0.0, %v2031
    %v2033 = vpop.f32.mrb[0].mxu0
    %2034 = vmatprep.mubr.bf16.mxu0 0
    %2035 = vmatmul.mubr.bf16.gmra.mrb[0].mxu0 %v1989
    %v2036 = vpop.f32.mrb[0].mxu0
    %v2037 = vadd.f32 0.0, %v2036
    %v2038 = vpop.f32.mrb[0].mxu0
    %v2039 = vpop.f32.mrb[0].mxu0
    %v2040 = vadd.f32 0.0, %v2039
    %v2041 = vpop.f32.mrb[0].mxu0
    %2042 = vmatprep.mubr.bf16.mxu0 0
    %2043 = vmatmul.mubr.bf16.gmra.mrb[0].mxu0 %v1990
    %v2044 = vpop.f32.mrb[0].mxu0
    %v2045 = vadd.f32 0.0, %v2044
    %v2046 = vpop.f32.mrb[0].mxu0
    %v2047 = vpop.f32.mrb[0].mxu0
    %v2048 = vadd.f32 0.0, %v2047
    %v2049 = vpop.f32.mrb[0].mxu0
    %2050 = vmatprep.mubr.bf16.mxu0 0
    %2051 = vmatmul.mubr.bf16.gmra.mrb[0].mxu0 %v1991
    %v2052 = vpop.f32.mrb[0].mxu0
    %v2053 = vadd.f32 0.0, %v2052
    %v2054 = vpop.f32.mrb[0].mxu0
    %v2055 = vpop.f32.mrb[0].mxu0
    %v2056 = vadd.f32 0.0, %v2055
    %v2057 = vpop.f32.mrb[0].mxu0
    %2058 = vmatprep.mubr.bf16.mxu0 0
    %2059 = vmatmul.mubr.bf16.gmra.mrb[0].mxu0 %v1992
    %v2060 = vpop.f32.mrb[0].mxu0
    %v2061 = vadd.f32 0.0, %v2060
    %v2062 = vpop.f32.mrb[0].mxu0
    %v2063 = vpop.f32.mrb[0].mxu0
    %v2064 = vadd.f32 0.0, %v2063
    %v2065 = vpop.f32.mrb[0].mxu0
    %2066 = vmatprep.mubr.bf16.mxu0 0
    %2067 = vmatmul.mubr.bf16.gmra.mrb[0].mxu0 %v1993
    %v2068 = vpop.f32.mrb[0].mxu0
    %v2069 = vadd.f32 0.0, %v2068
    %v2070 = vpop.f32.mrb[0].mxu0
    %v2071 = vpop.f32.mrb[0].mxu0
    %v2072 = vadd.f32 0.0, %v2071
    %v2073 = vpop.f32.mrb[0].mxu0
    %2074 = vdwg.mxu0
    %2075 = vmatprep.subr.bf16.mxu0 0
    %2076 = vmatpush1.bf16.msra.mxu0 %v1267
    %2077 = vmatprep.subr.bf16.mxu0 0
    %2078 = vmatpush1.bf16.msra.mxu0 %v1268
    %2079 = vmatprep.subr.bf16.mxu0 0
    %2080 = vmatpush1.bf16.msra.mxu0 %v1269
    %2081 = vmatprep.subr.bf16.mxu0 0
    %2082 = vmatpush1.bf16.msra.mxu0 %v1270
    %2083 = vmatprep.subr.bf16.mxu0 0
    %2084 = vmatpush1.bf16.msra.mxu0 %v1271
    %2085 = vmatprep.subr.bf16.mxu0 0
    %2086 = vmatpush1.bf16.msra.mxu0 %v1272
    %2087 = vmatprep.subr.bf16.mxu0 0
    %2088 = vmatpush1.bf16.msra.mxu0 %v1273
    %2089 = vmatprep.subr.bf16.mxu0 0
    %2090 = vmatpush1.bf16.msra.mxu0 %v1274
    %2091 = vmatprep.subr.bf16.mxu0 0
    %2092 = vmatpush1.bf16.msra.mxu0 0
    %2093 = vmatprep.subr.bf16.mxu0 0
    %2094 = vmatpush1.bf16.msra.mxu0 0
    %2095 = vmatprep.subr.bf16.mxu0 0
    %2096 = vmatpush1.bf16.msra.mxu0 0
    %2097 = vmatprep.subr.bf16.mxu0 0
    %2098 = vmatpush1.bf16.msra.mxu0 0
    %2099 = vmatprep.subr.bf16.mxu0 0
    %2100 = vmatpush1.bf16.msra.mxu0 0
    %2101 = vmatprep.subr.bf16.mxu0 0
    %2102 = vmatpush1.bf16.msra.mxu0 0
    %2103 = vmatprep.subr.bf16.mxu0 0
    %2104 = vmatpush1.bf16.msra.mxu0 0
    %2105 = vmatprep.subr.bf16.mxu0 0
    %2106 = vmatpush1.bf16.msra.mxu0 0
    %2107 = vmatprep.mubr.bf16.mxu0 0
    %2108 = vmatmul.mubr.bf16.gmra.mrb[0].mxu0 %v1616
    %v2109 = vpop.f32.mrb[0].mxu0
    %v2110 = vadd.f32 %v2029, %v2109
    %v2111 = vpop.f32.mrb[0].mxu0
    %v2112 = vpop.f32.mrb[0].mxu0
    %v2113 = vadd.f32 %v2032, %v2112
    %v2114 = vpop.f32.mrb[0].mxu0
    %2115 = vmatprep.mubr.bf16.mxu0 0
    %2116 = vmatmul.mubr.bf16.gmra.mrb[0].mxu0 %v1617
    %v2117 = vpop.f32.mrb[0].mxu0
    %v2118 = vadd.f32 %v2037, %v2117
    %v2119 = vpop.f32.mrb[0].mxu0
    %v2120 = vpop.f32.mrb[0].mxu0
    %v2121 = vadd.f32 %v2040, %v2120
    %v2122 = vpop.f32.mrb[0].mxu0
    %2123 = vmatprep.mubr.bf16.mxu0 0
    %2124 = vmatmul.mubr.bf16.gmra.mrb[0].mxu0 %v1618
    %v2125 = vpop.f32.mrb[0].mxu0
    %v2126 = vadd.f32 %v2045, %v2125
    %v2127 = vpop.f32.mrb[0].mxu0
    %v2128 = vpop.f32.mrb[0].mxu0
    %v2129 = vadd.f32 %v2048, %v2128
    %v2130 = vpop.f32.mrb[0].mxu0
    %2131 = vmatprep.mubr.bf16.mxu0 0
    %2132 = vmatmul.mubr.bf16.gmra.mrb[0].mxu0 %v1619
    %v2133 = vpop.f32.mrb[0].mxu0
    %v2134 = vadd.f32 %v2053, %v2133
    %v2135 = vpop.f32.mrb[0].mxu0
    %v2136 = vpop.f32.mrb[0].mxu0
    %v2137 = vadd.f32 %v2056, %v2136
    %v2138 = vpop.f32.mrb[0].mxu0
    %2139 = vmatprep.mubr.bf16.mxu0 0
    %2140 = vmatmul.mubr.bf16.gmra.mrb[0].mxu0 %v1620
    %v2141 = vpop.f32.mrb[0].mxu0
    %v2142 = vadd.f32 %v2061, %v2141
    %v2143 = vpop.f32.mrb[0].mxu0
    %v2144 = vpop.f32.mrb[0].mxu0
    %v2145 = vadd.f32 %v2064, %v2144
    %v2146 = vpop.f32.mrb[0].mxu0
    %2147 = vmatprep.mubr.bf16.mxu0 0
    %2148 = vmatmul.mubr.bf16.gmra.mrb[0].mxu0 %v1621
    %v2149 = vpop.f32.mrb[0].mxu0
    %v2150 = vadd.f32 %v2069, %v2149
    %v2151 = vpop.f32.mrb[0].mxu0
    %v2152 = vpop.f32.mrb[0].mxu0
    %v2153 = vadd.f32 %v2072, %v2152
    %v2154 = vpop.f32.mrb[0].mxu0
    %2155 = vdwg.mxu0
    %v2156 = vadd.f32 %v2110, %v1368
    %v2157 = vadd.f32 %v2113, %v1368
    %v2158 = vadd.f32 %v2118, %v1368
    %v2159 = vadd.f32 %v2121, %v1368
    %v2160 = vadd.f32 %v2126, %v1368
    %v2161 = vadd.f32 %v2129, %v1368
    %v2162 = vadd.f32 %v2134, %v1368
    %v2163 = vadd.f32 %v2137, %v1368
    %v2164 = vadd.f32 %v2142, %v1368
    %v2165 = vadd.f32 %v2145, %v1368
    %v2166 = vadd.f32 %v2150, %v1368
    %v2167 = vadd.f32 %v2153, %v1368
    %v2168 = vtanh.pop %v2156
    %v2169 = vtanh.pop %v2157
    %v2170 = vtanh.pop %v2158
    %v2171 = vtanh.pop %v2159
    %v2172 = vtanh.pop %v2160
    %v2173 = vtanh.pop %v2161
    %v2174 = vtanh.pop %v2162
    %v2175 = vtanh.pop %v2163
    %v2176 = vtanh.pop %v2164
    %v2177 = vtanh.pop %v2165
    %v2178 = vtanh.pop %v2166
    %v2179 = vtanh.pop %v2167
    %v2180 = vsub.f32 1.0, %v1929
    %v2181 = vsub.f32 1.0, %v1933
    %v2182 = vsub.f32 1.0, %v1937
    %v2183 = vsub.f32 1.0, %v1941
    %v2184 = vsub.f32 1.0, %v1945
    %v2185 = vsub.f32 1.0, %v1949
    %v2186 = vsub.f32 1.0, %v1953
    %v2187 = vsub.f32 1.0, %v1957
    %v2188 = vsub.f32 1.0, %v1961
    %v2189 = vsub.f32 1.0, %v1965
    %v2190 = vsub.f32 1.0, %v1969
    %v2191 = vsub.f32 1.0, %v1973
    %v2192 = vmul.f32 %v2180, %v1430
    %v2193 = vmul.f32 %v2181, %v1431
    %v2194 = vmul.f32 %v2182, %v1432
    %v2195 = vmul.f32 %v2183, %v1433
    %v2196 = vmul.f32 %v2184, %v1434
    %v2197 = vmul.f32 %v2185, %v1435
    %v2198 = vmul.f32 %v2186, %v1436
    %v2199 = vmul.f32 %v2187, %v1437
    %v2200 = vmul.f32 %v2188, %v1438
    %v2201 = vmul.f32 %v2189, %v1439
    %v2202 = vmul.f32 %v2190, %v1440
    %v2203 = vmul.f32 %v2191, %v1441
    %v2204 = vmul.f32 %v1929, %v2168
    %v2205 = vmul.f32 %v1933, %v2169
    %v2206 = vmul.f32 %v1937, %v2170
    %v2207 = vmul.f32 %v1941, %v2171
    %v2208 = vmul.f32 %v1945, %v2172
    %v2209 = vmul.f32 %v1949, %v2173
    %v2210 = vmul.f32 %v1953, %v2174
    %v2211 = vmul.f32 %v1957, %v2175
    %v2212 = vmul.f32 %v1961, %v2176
    %v2213 = vmul.f32 %v1965, %v2177
    %v2214 = vmul.f32 %v1969, %v2178
    %v2215 = vmul.f32 %v1973, %v2179
    %v2216 = vadd.f32 %v2192, %v2204
    %v2217 = vadd.f32 %v2193, %v2205
    %v2218 = vadd.f32 %v2194, %v2206
    %v2219 = vadd.f32 %v2195, %v2207
    %v2220 = vadd.f32 %v2196, %v2208
    %v2221 = vadd.f32 %v2197, %v2209
    %v2222 = vadd.f32 %v2198, %v2210
    %v2223 = vadd.f32 %v2199, %v2211
    %v2224 = vadd.f32 %v2200, %v2212
    %v2225 = vadd.f32 %v2201, %v2213
    %v2226 = vadd.f32 %v2202, %v2214
    %v2227 = vadd.f32 %v2203, %v2215
    %v2228 = vpack.c.bf16 %v2217, %v2216
    %v2229 = vpack.c.bf16 %v2219, %v2218
    %v2230 = vpack.c.bf16 %v2221, %v2220
    %v2231 = vpack.c.bf16 %v2223, %v2222
    %v2232 = vpack.c.bf16 %v2225, %v2224
    %v2233 = vpack.c.bf16 %v2227, %v2226
    %2234 = vmatprep.subr.bf16.mxu0 0
    %2235 = vmatpush1.bf16.msra.mxu0 %v285
    %2236 = vmatprep.subr.bf16.mxu0 0
    %2237 = vmatpush1.bf16.msra.mxu0 %v286
    %2238 = vmatprep.subr.bf16.mxu0 0
    %2239 = vmatpush1.bf16.msra.mxu0 %v287
    %2240 = vmatprep.subr.bf16.mxu0 0
    %2241 = vmatpush1.bf16.msra.mxu0 %v288
    %2242 = vmatprep.subr.bf16.mxu0 0
    %2243 = vmatpush1.bf16.msra.mxu0 %v289
    %2244 = vmatprep.subr.bf16.mxu0 0
    %2245 = vmatpush1.bf16.msra.mxu0 %v290
    %2246 = vmatprep.subr.bf16.mxu0 0
    %2247 = vmatpush1.bf16.msra.mxu0 %v291
    %2248 = vmatprep.subr.bf16.mxu0 0
    %2249 = vmatpush1.bf16.msra.mxu0 %v292
    %2250 = vmatprep.subr.bf16.mxu0 0
    %2251 = vmatpush1.bf16.msra.mxu0 0
    %2252 = vmatprep.subr.bf16.mxu0 0
    %2253 = vmatpush1.bf16.msra.mxu0 0
    %2254 = vmatprep.subr.bf16.mxu0 0
    %2255 = vmatpush1.bf16.msra.mxu0 0
    %2256 = vmatprep.subr.bf16.mxu0 0
    %2257 = vmatpush1.bf16.msra.mxu0 0
    %2258 = vmatprep.subr.bf16.mxu0 0
    %2259 = vmatpush1.bf16.msra.mxu0 0
    %2260 = vmatprep.subr.bf16.mxu0 0
    %2261 = vmatpush1.bf16.msra.mxu0 0
    %2262 = vmatprep.subr.bf16.mxu0 0
    %2263 = vmatpush1.bf16.msra.mxu0 0
    %2264 = vmatprep.subr.bf16.mxu0 0
    %2265 = vmatpush1.bf16.msra.mxu0 0
    %2266 = vmatprep.mubr.bf16.mxu0 0
    %2267 = vmatmul.mubr.bf16.gmra.mrb[0].mxu0 %v2228
    %v2268 = vpop.f32.mrb[0].mxu0
    %v2269 = vadd.f32 %v215, %v2268
    %v2270 = vpop.f32.mrb[0].mxu0
    %v2271 = vpop.f32.mrb[0].mxu0
    %v2272 = vadd.f32 %v215, %v2271
    %v2273 = vpop.f32.mrb[0].mxu0
    %2274 = vmatprep.mubr.bf16.mxu0 0
    %2275 = vmatmul.mubr.bf16.gmra.mrb[0].mxu0 %v2229
    %v2276 = vpop.f32.mrb[0].mxu0
    %v2277 = vadd.f32 %v215, %v2276
    %v2278 = vpop.f32.mrb[0].mxu0
    %v2279 = vpop.f32.mrb[0].mxu0
    %v2280 = vadd.f32 %v215, %v2279
    %v2281 = vpop.f32.mrb[0].mxu0
    %2282 = vmatprep.mubr.bf16.mxu0 0
    %2283 = vmatmul.mubr.bf16.gmra.mrb[0].mxu0 %v2230
    %v2284 = vpop.f32.mrb[0].mxu0
    %v2285 = vadd.f32 %v215, %v2284
    %v2286 = vpop.f32.mrb[0].mxu0
    %v2287 = vpop.f32.mrb[0].mxu0
    %v2288 = vadd.f32 %v215, %v2287
    %v2289 = vpop.f32.mrb[0].mxu0
    %2290 = vmatprep.mubr.bf16.mxu0 0
    %2291 = vmatmul.mubr.bf16.gmra.mrb[0].mxu0 %v2231
    %v2292 = vpop.f32.mrb[0].mxu0
    %v2293 = vadd.f32 %v215, %v2292
    %v2294 = vpop.f32.mrb[0].mxu0
    %v2295 = vpop.f32.mrb[0].mxu0
    %v2296 = vadd.f32 %v215, %v2295
    %v2297 = vpop.f32.mrb[0].mxu0
    %2298 = vmatprep.mubr.bf16.mxu0 0
    %2299 = vmatmul.mubr.bf16.gmra.mrb[0].mxu0 %v2232
    %v2300 = vpop.f32.mrb[0].mxu0
    %v2301 = vadd.f32 %v215, %v2300
    %v2302 = vpop.f32.mrb[0].mxu0
    %v2303 = vpop.f32.mrb[0].mxu0
    %v2304 = vadd.f32 %v215, %v2303
    %v2305 = vpop.f32.mrb[0].mxu0
    %2306 = vmatprep.mubr.bf16.mxu0 0
    %2307 = vmatmul.mubr.bf16.gmra.mrb[0].mxu0 %v2233
    %v2308 = vpop.f32.mrb[0].mxu0
    %v2309 = vadd.f32 %v215, %v2308
    %v2310 = vpop.f32.mrb[0].mxu0
    %v2311 = vpop.f32.mrb[0].mxu0
    %v2312 = vadd.f32 %v215, %v2311
    %v2313 = vpop.f32.mrb[0].mxu0
    %2314 = vdwg.mxu0
    %v2315 = vpack.c.bf16 %v2272, %v2269
    %v2316 = vpack.c.bf16 %v2280, %v2277
    %v2317 = vpack.c.bf16 %v2288, %v2285
    %v2318 = vpack.c.bf16 %v2296, %v2293
    %v2319 = vpack.c.bf16 %v2304, %v2301
    %v2320 = vpack.c.bf16 %v2312, %v2309
    %2321 = vmatprep.subr.bf16.mxu0 0
    %2322 = vmatpush1.bf16.msra.mxu0 %v2315
    %2323 = vmatprep.subr.bf16.mxu0 0
    %2324 = vmatpush1.bf16.msra.mxu0 %v2316
    %2325 = vmatprep.subr.bf16.mxu0 0
    %2326 = vmatpush1.bf16.msra.mxu0 %v2317
    %2327 = vmatprep.subr.bf16.mxu0 0
    %2328 = vmatpush1.bf16.msra.mxu0 %v2318
    %2329 = vmatprep.subr.bf16.mxu0 0
    %2330 = vmatpush1.bf16.msra.mxu0 %v2319
    %2331 = vmatprep.subr.bf16.mxu0 0
    %2332 = vmatpush1.bf16.msra.mxu0 %v2320
    %2333 = vmatprep.subr.bf16.mxu0 0
    %2334 = vmatpush1.bf16.msra.mxu0 0
    %2335 = vmatprep.subr.bf16.mxu0 0
    %2336 = vmatpush1.bf16.msra.mxu0 0
    %2337 = vmatprep.subr.bf16.mxu0 0
    %2338 = vmatpush1.bf16.msra.mxu0 0
    %2339 = vmatprep.subr.bf16.mxu0 0
    %2340 = vmatpush1.bf16.msra.mxu0 0
    %2341 = vmatprep.subr.bf16.mxu0 0
    %2342 = vmatpush1.bf16.msra.mxu0 0
    %2343 = vmatprep.subr.bf16.mxu0 0
    %2344 = vmatpush1.bf16.msra.mxu0 0
    %2345 = vmatprep.subr.bf16.mxu0 0
    %2346 = vmatpush1.bf16.msra.mxu0 0
    %2347 = vmatprep.subr.bf16.mxu0 0
    %2348 = vmatpush1.bf16.msra.mxu0 0
    %2349 = vmatprep.subr.bf16.mxu0 0
    %2350 = vmatpush1.bf16.msra.mxu0 0
    %2351 = vmatprep.subr.bf16.mxu0 0
    %2352 = vmatpush1.bf16.msra.mxu0 0
    %2353 = vmatprep.mubr.bf16.mxu0 0
    %2354 = vmatmul.mubr.bf16.gmra.mrb[0].mxu0 %v395
    %v2355 = vpop.f32.mrb[0].mxu0
    %v2356 = vadd.f32 0.0, %v2355
    %v2357 = vpop.f32.mrb[0].mxu0
    %v2358 = vpop.f32.mrb[0].mxu0
    %v2359 = vadd.f32 0.0, %v2358
    %v2360 = vpop.f32.mrb[0].mxu0
    %2361 = vmatprep.mubr.bf16.mxu0 0
    %2362 = vmatmul.mubr.bf16.gmra.mrb[0].mxu0 %v398
    %v2363 = vpop.f32.mrb[0].mxu0
    %v2364 = vadd.f32 0.0, %v2363
    %v2365 = vpop.f32.mrb[0].mxu0
    %v2366 = vpop.f32.mrb[0].mxu0
    %v2367 = vadd.f32 0.0, %v2366
    %v2368 = vpop.f32.mrb[0].mxu0
    %2369 = vmatprep.mubr.bf16.mxu0 0
    %2370 = vmatmul.mubr.bf16.gmra.mrb[0].mxu0 %v401
    %v2371 = vpop.f32.mrb[0].mxu0
    %v2372 = vadd.f32 0.0, %v2371
    %v2373 = vpop.f32.mrb[0].mxu0
    %v2374 = vpop.f32.mrb[0].mxu0
    %v2375 = vadd.f32 0.0, %v2374
    %v2376 = vpop.f32.mrb[0].mxu0
    %2377 = vmatprep.mubr.bf16.mxu0 0
    %2378 = vmatmul.mubr.bf16.gmra.mrb[0].mxu0 %v404
    %v2379 = vpop.f32.mrb[0].mxu0
    %v2380 = vadd.f32 0.0, %v2379
    %v2381 = vpop.f32.mrb[0].mxu0
    %v2382 = vpop.f32.mrb[0].mxu0
    %v2383 = vadd.f32 0.0, %v2382
    %v2384 = vpop.f32.mrb[0].mxu0
    %2385 = vmatprep.mubr.bf16.mxu0 0
    %2386 = vmatmul.mubr.bf16.gmra.mrb[0].mxu0 %v407
    %v2387 = vpop.f32.mrb[0].mxu0
    %v2388 = vadd.f32 0.0, %v2387
    %v2389 = vpop.f32.mrb[0].mxu0
    %v2390 = vpop.f32.mrb[0].mxu0
    %v2391 = vadd.f32 0.0, %v2390
    %v2392 = vpop.f32.mrb[0].mxu0
    %2393 = vmatprep.mubr.bf16.mxu0 0
    %2394 = vmatmul.mubr.bf16.gmra.mrb[0].mxu0 %v410
    %v2395 = vpop.f32.mrb[0].mxu0
    %v2396 = vadd.f32 0.0, %v2395
    %v2397 = vpop.f32.mrb[0].mxu0
    %v2398 = vpop.f32.mrb[0].mxu0
    %v2399 = vadd.f32 0.0, %v2398
    %v2400 = vpop.f32.mrb[0].mxu0
    %2401 = vdwg.mxu0
    %v2402 = vpack.c.bf16 %v2359, %v2356
    %v2403 = vpack.c.bf16 %v2367, %v2364
    %v2404 = vpack.c.bf16 %v2375, %v2372
    %v2405 = vpack.c.bf16 %v2383, %v2380
    %v2406 = vpack.c.bf16 %v2391, %v2388
    %v2407 = vpack.c.bf16 %v2399, %v2396
    %2408 = vmatprep.subr.bf16.mxu0 %v580
    %2409 = vmatpush1.bf16.msra.mxu0 %v579
    %2410 = vmatprep.subr.bf16.mxu0 %v582
    %2411 = vmatpush1.bf16.msra.mxu0 %v581
    %2412 = vmatprep.subr.bf16.mxu0 %v584
    %2413 = vmatpush1.bf16.msra.mxu0 %v583
    %2414 = vmatprep.subr.bf16.mxu0 %v586
    %2415 = vmatpush1.bf16.msra.mxu0 %v585
    %2416 = vmatprep.subr.bf16.mxu0 %v588
    %2417 = vmatpush1.bf16.msra.mxu0 %v587
    %2418 = vmatprep.subr.bf16.mxu0 %v590
    %2419 = vmatpush1.bf16.msra.mxu0 %v589
    %2420 = vmatprep.subr.bf16.mxu0 %v592
    %2421 = vmatpush1.bf16.msra.mxu0 %v591
    %2422 = vmatprep.subr.bf16.mxu0 %v594
    %2423 = vmatpush1.bf16.msra.mxu0 %v593
    %2424 = vmatprep.subr.bf16.mxu0 0
    %2425 = vmatpush1.bf16.msra.mxu0 0
    %2426 = vmatprep.subr.bf16.mxu0 0
    %2427 = vmatpush1.bf16.msra.mxu0 0
    %2428 = vmatprep.subr.bf16.mxu0 0
    %2429 = vmatpush1.bf16.msra.mxu0 0
    %2430 = vmatprep.subr.bf16.mxu0 0
    %2431 = vmatpush1.bf16.msra.mxu0 0
    %2432 = vmatprep.subr.bf16.mxu0 0
    %2433 = vmatpush1.bf16.msra.mxu0 0
    %2434 = vmatprep.subr.bf16.mxu0 0
    %2435 = vmatpush1.bf16.msra.mxu0 0
    %2436 = vmatprep.subr.bf16.mxu0 0
    %2437 = vmatpush1.bf16.msra.mxu0 0
    %2438 = vmatprep.subr.bf16.mxu0 0
    %2439 = vmatpush1.bf16.msra.mxu0 0
    %2440 = vmatprep.mubr.bf16.mxu0 0
    %2441 = vmatmul.mubr.bf16.gmra.mrb[0].mxu0 %v2228
    %v2442 = vpop.f32.mrb[0].mxu0
    %v2443 = vadd.f32 0.0, %v2442
    %v2444 = vpop.f32.mrb[0].mxu0
    %v2445 = vadd.f32 0.0, %v2444
    %v2446 = vpop.f32.mrb[0].mxu0
    %v2447 = vadd.f32 0.0, %v2446
    %v2448 = vpop.f32.mrb[0].mxu0
    %v2449 = vadd.f32 0.0, %v2448
    %2450 = vmatprep.mubr.bf16.mxu0 0
    %2451 = vmatmul.mubr.bf16.gmra.mrb[0].mxu0 %v2229
    %v2452 = vpop.f32.mrb[0].mxu0
    %v2453 = vadd.f32 0.0, %v2452
    %v2454 = vpop.f32.mrb[0].mxu0
    %v2455 = vadd.f32 0.0, %v2454
    %v2456 = vpop.f32.mrb[0].mxu0
    %v2457 = vadd.f32 0.0, %v2456
    %v2458 = vpop.f32.mrb[0].mxu0
    %v2459 = vadd.f32 0.0, %v2458
    %2460 = vmatprep.mubr.bf16.mxu0 0
    %2461 = vmatmul.mubr.bf16.gmra.mrb[0].mxu0 %v2230
    %v2462 = vpop.f32.mrb[0].mxu0
    %v2463 = vadd.f32 0.0, %v2462
    %v2464 = vpop.f32.mrb[0].mxu0
    %v2465 = vadd.f32 0.0, %v2464
    %v2466 = vpop.f32.mrb[0].mxu0
    %v2467 = vadd.f32 0.0, %v2466
    %v2468 = vpop.f32.mrb[0].mxu0
    %v2469 = vadd.f32 0.0, %v2468
    %2470 = vmatprep.mubr.bf16.mxu0 0
    %2471 = vmatmul.mubr.bf16.gmra.mrb[0].mxu0 %v2231
    %v2472 = vpop.f32.mrb[0].mxu0
    %v2473 = vadd.f32 0.0, %v2472
    %v2474 = vpop.f32.mrb[0].mxu0
    %v2475 = vadd.f32 0.0, %v2474
    %v2476 = vpop.f32.mrb[0].mxu0
    %v2477 = vadd.f32 0.0, %v2476
    %v2478 = vpop.f32.mrb[0].mxu0
    %v2479 = vadd.f32 0.0, %v2478
    %2480 = vmatprep.mubr.bf16.mxu0 0
    %2481 = vmatmul.mubr.bf16.gmra.mrb[0].mxu0 %v2232
    %v2482 = vpop.f32.mrb[0].mxu0
    %v2483 = vadd.f32 0.0, %v2482
    %v2484 = vpop.f32.mrb[0].mxu0
    %v2485 = vadd.f32 0.0, %v2484
    %v2486 = vpop.f32.mrb[0].mxu0
    %v2487 = vadd.f32 0.0, %v2486
    %v2488 = vpop.f32.mrb[0].mxu0
    %v2489 = vadd.f32 0.0, %v2488
    %2490 = vmatprep.mubr.bf16.mxu0 0
    %2491 = vmatmul.mubr.bf16.gmra.mrb[0].mxu0 %v2233
    %v2492 = vpop.f32.mrb[0].mxu0
    %v2493 = vadd.f32 0.0, %v2492
    %v2494 = vpop.f32.mrb[0].mxu0
    %v2495 = vadd.f32 0.0, %v2494
    %v2496 = vpop.f32.mrb[0].mxu0
    %v2497 = vadd.f32 0.0, %v2496
    %v2498 = vpop.f32.mrb[0].mxu0
    %v2499 = vadd.f32 0.0, %v2498
    %2500 = vdwg.mxu0
    %2501 = vmatprep.subr.bf16.mxu0 %v753
    %2502 = vmatpush1.bf16.msra.mxu0 %v752
    %2503 = vmatprep.subr.bf16.mxu0 %v755
    %2504 = vmatpush1.bf16.msra.mxu0 %v754
    %2505 = vmatprep.subr.bf16.mxu0 %v757
    %2506 = vmatpush1.bf16.msra.mxu0 %v756
    %2507 = vmatprep.subr.bf16.mxu0 %v759
    %2508 = vmatpush1.bf16.msra.mxu0 %v758
    %2509 = vmatprep.subr.bf16.mxu0 %v761
    %2510 = vmatpush1.bf16.msra.mxu0 %v760
    %2511 = vmatprep.subr.bf16.mxu0 %v763
    %2512 = vmatpush1.bf16.msra.mxu0 %v762
    %2513 = vmatprep.subr.bf16.mxu0 %v765
    %2514 = vmatpush1.bf16.msra.mxu0 %v764
    %2515 = vmatprep.subr.bf16.mxu0 %v767
    %2516 = vmatpush1.bf16.msra.mxu0 %v766
    %2517 = vmatprep.subr.bf16.mxu0 0
    %2518 = vmatpush1.bf16.msra.mxu0 0
    %2519 = vmatprep.subr.bf16.mxu0 0
    %2520 = vmatpush1.bf16.msra.mxu0 0
    %2521 = vmatprep.subr.bf16.mxu0 0
    %2522 = vmatpush1.bf16.msra.mxu0 0
    %2523 = vmatprep.subr.bf16.mxu0 0
    %2524 = vmatpush1.bf16.msra.mxu0 0
    %2525 = vmatprep.subr.bf16.mxu0 0
    %2526 = vmatpush1.bf16.msra.mxu0 0
    %2527 = vmatprep.subr.bf16.mxu0 0
    %2528 = vmatpush1.bf16.msra.mxu0 0
    %2529 = vmatprep.subr.bf16.mxu0 0
    %2530 = vmatpush1.bf16.msra.mxu0 0
    %2531 = vmatprep.subr.bf16.mxu0 0
    %2532 = vmatpush1.bf16.msra.mxu0 0
    %2533 = vmatprep.mubr.bf16.mxu0 0
    %2534 = vmatmul.mubr.bf16.gmra.mrb[0].mxu0 %v2402
    %v2535 = vpop.f32.mrb[0].mxu0
    %v2536 = vadd.f32 %v2443, %v2535
    %v2537 = vpop.f32.mrb[0].mxu0
    %v2538 = vadd.f32 %v2445, %v2537
    %v2539 = vpop.f32.mrb[0].mxu0
    %v2540 = vadd.f32 %v2447, %v2539
    %v2541 = vpop.f32.mrb[0].mxu0
    %v2542 = vadd.f32 %v2449, %v2541
    %2543 = vmatprep.mubr.bf16.mxu0 0
    %2544 = vmatmul.mubr.bf16.gmra.mrb[0].mxu0 %v2403
    %v2545 = vpop.f32.mrb[0].mxu0
    %v2546 = vadd.f32 %v2453, %v2545
    %v2547 = vpop.f32.mrb[0].mxu0
    %v2548 = vadd.f32 %v2455, %v2547
    %v2549 = vpop.f32.mrb[0].mxu0
    %v2550 = vadd.f32 %v2457, %v2549
    %v2551 = vpop.f32.mrb[0].mxu0
    %v2552 = vadd.f32 %v2459, %v2551
    %2553 = vmatprep.mubr.bf16.mxu0 0
    %2554 = vmatmul.mubr.bf16.gmra.mrb[0].mxu0 %v2404
    %v2555 = vpop.f32.mrb[0].mxu0
    %v2556 = vadd.f32 %v2463, %v2555
    %v2557 = vpop.f32.mrb[0].mxu0
    %v2558 = vadd.f32 %v2465, %v2557
    %v2559 = vpop.f32.mrb[0].mxu0
    %v2560 = vadd.f32 %v2467, %v2559
    %v2561 = vpop.f32.mrb[0].mxu0
    %v2562 = vadd.f32 %v2469, %v2561
    %2563 = vmatprep.mubr.bf16.mxu0 0
    %2564 = vmatmul.mubr.bf16.gmra.mrb[0].mxu0 %v2405
    %v2565 = vpop.f32.mrb[0].mxu0
    %v2566 = vadd.f32 %v2473, %v2565
    %v2567 = vpop.f32.mrb[0].mxu0
    %v2568 = vadd.f32 %v2475, %v2567
    %v2569 = vpop.f32.mrb[0].mxu0
    %v2570 = vadd.f32 %v2477, %v2569
    %v2571 = vpop.f32.mrb[0].mxu0
    %v2572 = vadd.f32 %v2479, %v2571
    %2573 = vmatprep.mubr.bf16.mxu0 0
    %2574 = vmatmul.mubr.bf16.gmra.mrb[0].mxu0 %v2406
    %v2575 = vpop.f32.mrb[0].mxu0
    %v2576 = vadd.f32 %v2483, %v2575
    %v2577 = vpop.f32.mrb[0].mxu0
    %v2578 = vadd.f32 %v2485, %v2577
    %v2579 = vpop.f32.mrb[0].mxu0
    %v2580 = vadd.f32 %v2487, %v2579
    %v2581 = vpop.f32.mrb[0].mxu0
    %v2582 = vadd.f32 %v2489, %v2581
    %2583 = vmatprep.mubr.bf16.mxu0 0
    %2584 = vmatmul.mubr.bf16.gmra.mrb[0].mxu0 %v2407
    %v2585 = vpop.f32.mrb[0].mxu0
    %v2586 = vadd.f32 %v2493, %v2585
    %v2587 = vpop.f32.mrb[0].mxu0
    %v2588 = vadd.f32 %v2495, %v2587
    %v2589 = vpop.f32.mrb[0].mxu0
    %v2590 = vadd.f32 %v2497, %v2589
    %v2591 = vpop.f32.mrb[0].mxu0
    %v2592 = vadd.f32 %v2499, %v2591
    %2593 = vdwg.mxu0
    %v2594 = vadd.f32 %v2536, %v881
    %v2595 = vadd.f32 %v2538, %v885
    %v2596 = vadd.f32 %v2540, %v881
    %v2597 = vadd.f32 %v2542, %v885
    %v2598 = vadd.f32 %v2546, %v881
    %v2599 = vadd.f32 %v2548, %v885
    %v2600 = vadd.f32 %v2550, %v881
    %v2601 = vadd.f32 %v2552, %v885
    %v2602 = vadd.f32 %v2556, %v881
    %v2603 = vadd.f32 %v2558, %v885
    %v2604 = vadd.f32 %v2560, %v881
    %v2605 = vadd.f32 %v2562, %v885
    %v2606 = vadd.f32 %v2566, %v881
    %v2607 = vadd.f32 %v2568, %v885
    %v2608 = vadd.f32 %v2570, %v881
    %v2609 = vadd.f32 %v2572, %v885
    %v2610 = vadd.f32 %v2576, %v881
    %v2611 = vadd.f32 %v2578, %v885
    %v2612 = vadd.f32 %v2580, %v881
    %v2613 = vadd.f32 %v2582, %v885
    %v2614 = vadd.f32 %v2586, %v881
    %v2615 = vadd.f32 %v2588, %v885
    %v2616 = vadd.f32 %v2590, %v881
    %v2617 = vadd.f32 %v2592, %v885
    %v2618 = vxor.u32 %v2594, 2147483648
    %v2619 = vxor.u32 %v2595, 2147483648
    %v2620 = vxor.u32 %v2596, 2147483648
    %v2621 = vxor.u32 %v2597, 2147483648
    %v2622 = vxor.u32 %v2598, 2147483648
    %v2623 = vxor.u32 %v2599, 2147483648
    %v2624 = vxor.u32 %v2600, 2147483648
    %v2625 = vxor.u32 %v2601, 2147483648
    %v2626 = vxor.u32 %v2602, 2147483648
    %v2627 = vxor.u32 %v2603, 2147483648
    %v2628 = vxor.u32 %v2604, 2147483648
    %v2629 = vxor.u32 %v2605, 2147483648
    %v2630 = vxor.u32 %v2606, 2147483648
    %v2631 = vxor.u32 %v2607, 2147483648
    %v2632 = vxor.u32 %v2608, 2147483648
    %v2633 = vxor.u32 %v2609, 2147483648
    %v2634 = vxor.u32 %v2610, 2147483648
    %v2635 = vxor.u32 %v2611, 2147483648
    %v2636 = vxor.u32 %v2612, 2147483648
    %v2637 = vxor.u32 %v2613, 2147483648
    %v2638 = vxor.u32 %v2614, 2147483648
    %v2639 = vxor.u32 %v2615, 2147483648
    %v2640 = vxor.u32 %v2616, 2147483648
    %v2641 = vxor.u32 %v2617, 2147483648
    %v2642 = vmul.f32 %v2618, 1.442695
    %v2643 = vpow.pop %v2642
    %v2644 = vmul.f32 %v2619, 1.442695
    %v2645 = vpow.pop %v2644
    %v2646 = vmul.f32 %v2620, 1.442695
    %v2647 = vpow.pop %v2646
    %v2648 = vmul.f32 %v2621, 1.442695
    %v2649 = vpow.pop %v2648
    %v2650 = vmul.f32 %v2622, 1.442695
    %v2651 = vpow.pop %v2650
    %v2652 = vmul.f32 %v2623, 1.442695
    %v2653 = vpow.pop %v2652
    %v2654 = vmul.f32 %v2624, 1.442695
    %v2655 = vpow.pop %v2654
    %v2656 = vmul.f32 %v2625, 1.442695
    %v2657 = vpow.pop %v2656
    %v2658 = vmul.f32 %v2626, 1.442695
    %v2659 = vpow.pop %v2658
    %v2660 = vmul.f32 %v2627, 1.442695
    %v2661 = vpow.pop %v2660
    %v2662 = vmul.f32 %v2628, 1.442695
    %v2663 = vpow.pop %v2662
    %v2664 = vmul.f32 %v2629, 1.442695
    %v2665 = vpow.pop %v2664
    %v2666 = vmul.f32 %v2630, 1.442695
    %v2667 = vpow.pop %v2666
    %v2668 = vmul.f32 %v2631, 1.442695
    %v2669 = vpow.pop %v2668
    %v2670 = vmul.f32 %v2632, 1.442695
    %v2671 = vpow.pop %v2670
    %v2672 = vmul.f32 %v2633, 1.442695
    %v2673 = vpow.pop %v2672
    %v2674 = vmul.f32 %v2634, 1.442695
    %v2675 = vpow.pop %v2674
    %v2676 = vmul.f32 %v2635, 1.442695
    %v2677 = vpow.pop %v2676
    %v2678 = vmul.f32 %v2636, 1.442695
    %v2679 = vpow.pop %v2678
    %v2680 = vmul.f32 %v2637, 1.442695
    %v2681 = vpow.pop %v2680
    %v2682 = vmul.f32 %v2638, 1.442695
    %v2683 = vpow.pop %v2682
    %v2684 = vmul.f32 %v2639, 1.442695
    %v2685 = vpow.pop %v2684
    %v2686 = vmul.f32 %v2640, 1.442695
    %v2687 = vpow.pop %v2686
    %v2688 = vmul.f32 %v2641, 1.442695
    %v2689 = vpow.pop %v2688
    %v2690 = vadd.f32 %v2643, 1.0
    %v2691 = vadd.f32 %v2645, 1.0
    %v2692 = vadd.f32 %v2647, 1.0
    %v2693 = vadd.f32 %v2649, 1.0
    %v2694 = vadd.f32 %v2651, 1.0
    %v2695 = vadd.f32 %v2653, 1.0
    %v2696 = vadd.f32 %v2655, 1.0
    %v2697 = vadd.f32 %v2657, 1.0
    %v2698 = vadd.f32 %v2659, 1.0
    %v2699 = vadd.f32 %v2661, 1.0
    %v2700 = vadd.f32 %v2663, 1.0
    %v2701 = vadd.f32 %v2665, 1.0
    %v2702 = vadd.f32 %v2667, 1.0
    %v2703 = vadd.f32 %v2669, 1.0
    %v2704 = vadd.f32 %v2671, 1.0
    %v2705 = vadd.f32 %v2673, 1.0
    %v2706 = vadd.f32 %v2675, 1.0
    %v2707 = vadd.f32 %v2677, 1.0
    %v2708 = vadd.f32 %v2679, 1.0
    %v2709 = vadd.f32 %v2681, 1.0
    %v2710 = vadd.f32 %v2683, 1.0
    %v2711 = vadd.f32 %v2685, 1.0
    %v2712 = vadd.f32 %v2687, 1.0
    %v2713 = vadd.f32 %v2689, 1.0
    %v2714 = vrcp.pop %v2690
    %v2715 = vmul.f32 1.0, %v2714
    %v2716 = vrcp.pop %v2691
    %v2717 = vmul.f32 1.0, %v2716
    %v2718 = vrcp.pop %v2692
    %v2719 = vmul.f32 1.0, %v2718
    %v2720 = vrcp.pop %v2693
    %v2721 = vmul.f32 1.0, %v2720
    %v2722 = vrcp.pop %v2694
    %v2723 = vmul.f32 1.0, %v2722
    %v2724 = vrcp.pop %v2695
    %v2725 = vmul.f32 1.0, %v2724
    %v2726 = vrcp.pop %v2696
    %v2727 = vmul.f32 1.0, %v2726
    %v2728 = vrcp.pop %v2697
    %v2729 = vmul.f32 1.0, %v2728
    %v2730 = vrcp.pop %v2698
    %v2731 = vmul.f32 1.0, %v2730
    %v2732 = vrcp.pop %v2699
    %v2733 = vmul.f32 1.0, %v2732
    %v2734 = vrcp.pop %v2700
    %v2735 = vmul.f32 1.0, %v2734
    %v2736 = vrcp.pop %v2701
    %v2737 = vmul.f32 1.0, %v2736
    %v2738 = vrcp.pop %v2702
    %v2739 = vmul.f32 1.0, %v2738
    %v2740 = vrcp.pop %v2703
    %v2741 = vmul.f32 1.0, %v2740
    %v2742 = vrcp.pop %v2704
    %v2743 = vmul.f32 1.0, %v2742
    %v2744 = vrcp.pop %v2705
    %v2745 = vmul.f32 1.0, %v2744
    %v2746 = vrcp.pop %v2706
    %v2747 = vmul.f32 1.0, %v2746
    %v2748 = vrcp.pop %v2707
    %v2749 = vmul.f32 1.0, %v2748
    %v2750 = vrcp.pop %v2708
    %v2751 = vmul.f32 1.0, %v2750
    %v2752 = vrcp.pop %v2709
    %v2753 = vmul.f32 1.0, %v2752
    %v2754 = vrcp.pop %v2710
    %v2755 = vmul.f32 1.0, %v2754
    %v2756 = vrcp.pop %v2711
    %v2757 = vmul.f32 1.0, %v2756
    %v2758 = vrcp.pop %v2712
    %v2759 = vmul.f32 1.0, %v2758
    %v2760 = vrcp.pop %v2713
    %v2761 = vmul.f32 1.0, %v2760
    %v2762 = vmul.f32 %v2717, %v2216
    %v2763 = vmul.f32 %v2721, %v2217
    %v2764 = vmul.f32 %v2725, %v2218
    %v2765 = vmul.f32 %v2729, %v2219
    %v2766 = vmul.f32 %v2733, %v2220
    %v2767 = vmul.f32 %v2737, %v2221
    %v2768 = vmul.f32 %v2741, %v2222
    %v2769 = vmul.f32 %v2745, %v2223
    %v2770 = vmul.f32 %v2749, %v2224
    %v2771 = vmul.f32 %v2753, %v2225
    %v2772 = vmul.f32 %v2757, %v2226
    %v2773 = vmul.f32 %v2761, %v2227
    %v2774 = vpack.c.bf16 %v2763, %v2762
    %v2775 = vpack.c.bf16 %v2765, %v2764
    %v2776 = vpack.c.bf16 %v2767, %v2766
    %v2777 = vpack.c.bf16 %v2769, %v2768
    %v2778 = vpack.c.bf16 %v2771, %v2770
    %v2779 = vpack.c.bf16 %v2773, %v2772
    %2780 = vmatprep.subr.bf16.mxu0 0
    %2781 = vmatpush1.bf16.msra.mxu0 %v1138
    %2782 = vmatprep.subr.bf16.mxu0 0
    %2783 = vmatpush1.bf16.msra.mxu0 %v1139
    %2784 = vmatprep.subr.bf16.mxu0 0
    %2785 = vmatpush1.bf16.msra.mxu0 %v1140
    %2786 = vmatprep.subr.bf16.mxu0 0
    %2787 = vmatpush1.bf16.msra.mxu0 %v1141
    %2788 = vmatprep.subr.bf16.mxu0 0
    %2789 = vmatpush1.bf16.msra.mxu0 %v1142
    %2790 = vmatprep.subr.bf16.mxu0 0
    %2791 = vmatpush1.bf16.msra.mxu0 %v1143
    %2792 = vmatprep.subr.bf16.mxu0 0
    %2793 = vmatpush1.bf16.msra.mxu0 %v1144
    %2794 = vmatprep.subr.bf16.mxu0 0
    %2795 = vmatpush1.bf16.msra.mxu0 %v1145
    %2796 = vmatprep.subr.bf16.mxu0 0
    %2797 = vmatpush1.bf16.msra.mxu0 0
    %2798 = vmatprep.subr.bf16.mxu0 0
    %2799 = vmatpush1.bf16.msra.mxu0 0
    %2800 = vmatprep.subr.bf16.mxu0 0
    %2801 = vmatpush1.bf16.msra.mxu0 0
    %2802 = vmatprep.subr.bf16.mxu0 0
    %2803 = vmatpush1.bf16.msra.mxu0 0
    %2804 = vmatprep.subr.bf16.mxu0 0
    %2805 = vmatpush1.bf16.msra.mxu0 0
    %2806 = vmatprep.subr.bf16.mxu0 0
    %2807 = vmatpush1.bf16.msra.mxu0 0
    %2808 = vmatprep.subr.bf16.mxu0 0
    %2809 = vmatpush1.bf16.msra.mxu0 0
    %2810 = vmatprep.subr.bf16.mxu0 0
    %2811 = vmatpush1.bf16.msra.mxu0 0
    %2812 = vmatprep.mubr.bf16.mxu0 0
    %2813 = vmatmul.mubr.bf16.gmra.mrb[0].mxu0 %v2774
    %v2814 = vpop.f32.mrb[0].mxu0
    %v2815 = vadd.f32 0.0, %v2814
    %v2816 = vpop.f32.mrb[0].mxu0
    %v2817 = vpop.f32.mrb[0].mxu0
    %v2818 = vadd.f32 0.0, %v2817
    %v2819 = vpop.f32.mrb[0].mxu0
    %2820 = vmatprep.mubr.bf16.mxu0 0
    %2821 = vmatmul.mubr.bf16.gmra.mrb[0].mxu0 %v2775
    %v2822 = vpop.f32.mrb[0].mxu0
    %v2823 = vadd.f32 0.0, %v2822
    %v2824 = vpop.f32.mrb[0].mxu0
    %v2825 = vpop.f32.mrb[0].mxu0
    %v2826 = vadd.f32 0.0, %v2825
    %v2827 = vpop.f32.mrb[0].mxu0
    %2828 = vmatprep.mubr.bf16.mxu0 0
    %2829 = vmatmul.mubr.bf16.gmra.mrb[0].mxu0 %v2776
    %v2830 = vpop.f32.mrb[0].mxu0
    %v2831 = vadd.f32 0.0, %v2830
    %v2832 = vpop.f32.mrb[0].mxu0
    %v2833 = vpop.f32.mrb[0].mxu0
    %v2834 = vadd.f32 0.0, %v2833
    %v2835 = vpop.f32.mrb[0].mxu0
    %2836 = vmatprep.mubr.bf16.mxu0 0
    %2837 = vmatmul.mubr.bf16.gmra.mrb[0].mxu0 %v2777
    %v2838 = vpop.f32.mrb[0].mxu0
    %v2839 = vadd.f32 0.0, %v2838
    %v2840 = vpop.f32.mrb[0].mxu0
    %v2841 = vpop.f32.mrb[0].mxu0
    %v2842 = vadd.f32 0.0, %v2841
    %v2843 = vpop.f32.mrb[0].mxu0
    %2844 = vmatprep.mubr.bf16.mxu0 0
    %2845 = vmatmul.mubr.bf16.gmra.mrb[0].mxu0 %v2778
    %v2846 = vpop.f32.mrb[0].mxu0
    %v2847 = vadd.f32 0.0, %v2846
    %v2848 = vpop.f32.mrb[0].mxu0
    %v2849 = vpop.f32.mrb[0].mxu0
    %v2850 = vadd.f32 0.0, %v2849
    %v2851 = vpop.f32.mrb[0].mxu0
    %2852 = vmatprep.mubr.bf16.mxu0 0
    %2853 = vmatmul.mubr.bf16.gmra.mrb[0].mxu0 %v2779
    %v2854 = vpop.f32.mrb[0].mxu0
    %v2855 = vadd.f32 0.0, %v2854
    %v2856 = vpop.f32.mrb[0].mxu0
    %v2857 = vpop.f32.mrb[0].mxu0
    %v2858 = vadd.f32 0.0, %v2857
    %v2859 = vpop.f32.mrb[0].mxu0
    %2860 = vdwg.mxu0
    %2861 = vmatprep.subr.bf16.mxu0 0
    %2862 = vmatpush1.bf16.msra.mxu0 %v1267
    %2863 = vmatprep.subr.bf16.mxu0 0
    %2864 = vmatpush1.bf16.msra.mxu0 %v1268
    %2865 = vmatprep.subr.bf16.mxu0 0
    %2866 = vmatpush1.bf16.msra.mxu0 %v1269
    %2867 = vmatprep.subr.bf16.mxu0 0
    %2868 = vmatpush1.bf16.msra.mxu0 %v1270
    %2869 = vmatprep.subr.bf16.mxu0 0
    %2870 = vmatpush1.bf16.msra.mxu0 %v1271
    %2871 = vmatprep.subr.bf16.mxu0 0
    %2872 = vmatpush1.bf16.msra.mxu0 %v1272
    %2873 = vmatprep.subr.bf16.mxu0 0
    %2874 = vmatpush1.bf16.msra.mxu0 %v1273
    %2875 = vmatprep.subr.bf16.mxu0 0
    %2876 = vmatpush1.bf16.msra.mxu0 %v1274
    %2877 = vmatprep.subr.bf16.mxu0 0
    %2878 = vmatpush1.bf16.msra.mxu0 0
    %2879 = vmatprep.subr.bf16.mxu0 0
    %2880 = vmatpush1.bf16.msra.mxu0 0
    %2881 = vmatprep.subr.bf16.mxu0 0
    %2882 = vmatpush1.bf16.msra.mxu0 0
    %2883 = vmatprep.subr.bf16.mxu0 0
    %2884 = vmatpush1.bf16.msra.mxu0 0
    %2885 = vmatprep.subr.bf16.mxu0 0
    %2886 = vmatpush1.bf16.msra.mxu0 0
    %2887 = vmatprep.subr.bf16.mxu0 0
    %2888 = vmatpush1.bf16.msra.mxu0 0
    %2889 = vmatprep.subr.bf16.mxu0 0
    %2890 = vmatpush1.bf16.msra.mxu0 0
    %2891 = vmatprep.subr.bf16.mxu0 0
    %2892 = vmatpush1.bf16.msra.mxu0 0
    %2893 = vmatprep.mubr.bf16.mxu0 0
    %2894 = vmatmul.mubr.bf16.gmra.mrb[0].mxu0 %v2402
    %v2895 = vpop.f32.mrb[0].mxu0
    %v2896 = vadd.f32 %v2815, %v2895
    %v2897 = vpop.f32.mrb[0].mxu0
    %v2898 = vpop.f32.mrb[0].mxu0
    %v2899 = vadd.f32 %v2818, %v2898
    %v2900 = vpop.f32.mrb[0].mxu0
    %2901 = vmatprep.mubr.bf16.mxu0 0
    %2902 = vmatmul.mubr.bf16.gmra.mrb[0].mxu0 %v2403
    %v2903 = vpop.f32.mrb[0].mxu0
    %v2904 = vadd.f32 %v2823, %v2903
    %v2905 = vpop.f32.mrb[0].mxu0
    %v2906 = vpop.f32.mrb[0].mxu0
    %v2907 = vadd.f32 %v2826, %v2906
    %v2908 = vpop.f32.mrb[0].mxu0
    %2909 = vmatprep.mubr.bf16.mxu0 0
    %2910 = vmatmul.mubr.bf16.gmra.mrb[0].mxu0 %v2404
    %v2911 = vpop.f32.mrb[0].mxu0
    %v2912 = vadd.f32 %v2831, %v2911
    %v2913 = vpop.f32.mrb[0].mxu0
    %v2914 = vpop.f32.mrb[0].mxu0
    %v2915 = vadd.f32 %v2834, %v2914
    %v2916 = vpop.f32.mrb[0].mxu0
    %2917 = vmatprep.mubr.bf16.mxu0 0
    %2918 = vmatmul.mubr.bf16.gmra.mrb[0].mxu0 %v2405
    %v2919 = vpop.f32.mrb[0].mxu0
    %v2920 = vadd.f32 %v2839, %v2919
    %v2921 = vpop.f32.mrb[0].mxu0
    %v2922 = vpop.f32.mrb[0].mxu0
    %v2923 = vadd.f32 %v2842, %v2922
    %v2924 = vpop.f32.mrb[0].mxu0
    %2925 = vmatprep.mubr.bf16.mxu0 0
    %2926 = vmatmul.mubr.bf16.gmra.mrb[0].mxu0 %v2406
    %v2927 = vpop.f32.mrb[0].mxu0
    %v2928 = vadd.f32 %v2847, %v2927
    %v2929 = vpop.f32.mrb[0].mxu0
    %v2930 = vpop.f32.mrb[0].mxu0
    %v2931 = vadd.f32 %v2850, %v2930
    %v2932 = vpop.f32.mrb[0].mxu0
    %2933 = vmatprep.mubr.bf16.mxu0 0
    %2934 = vmatmul.mubr.bf16.gmra.mrb[0].mxu0 %v2407
    %v2935 = vpop.f32.mrb[0].mxu0
    %v2936 = vadd.f32 %v2855, %v2935
    %v2937 = vpop.f32.mrb[0].mxu0
    %v2938 = vpop.f32.mrb[0].mxu0
    %v2939 = vadd.f32 %v2858, %v2938
    %v2940 = vpop.f32.mrb[0].mxu0
    %2941 = vdwg.mxu0
    %v2942 = vadd.f32 %v2896, %v1368
    %v2943 = vadd.f32 %v2899, %v1368
    %v2944 = vadd.f32 %v2904, %v1368
    %v2945 = vadd.f32 %v2907, %v1368
    %v2946 = vadd.f32 %v2912, %v1368
    %v2947 = vadd.f32 %v2915, %v1368
    %v2948 = vadd.f32 %v2920, %v1368
    %v2949 = vadd.f32 %v2923, %v1368
    %v2950 = vadd.f32 %v2928, %v1368
    %v2951 = vadd.f32 %v2931, %v1368
    %v2952 = vadd.f32 %v2936, %v1368
    %v2953 = vadd.f32 %v2939, %v1368
    %v2954 = vtanh.pop %v2942
    %v2955 = vtanh.pop %v2943
    %v2956 = vtanh.pop %v2944
    %v2957 = vtanh.pop %v2945
    %v2958 = vtanh.pop %v2946
    %v2959 = vtanh.pop %v2947
    %v2960 = vtanh.pop %v2948
    %v2961 = vtanh.pop %v2949
    %v2962 = vtanh.pop %v2950
    %v2963 = vtanh.pop %v2951
    %v2964 = vtanh.pop %v2952
    %v2965 = vtanh.pop %v2953
    %v2966 = vsub.f32 1.0, %v2715
    %v2967 = vsub.f32 1.0, %v2719
    %v2968 = vsub.f32 1.0, %v2723
    %v2969 = vsub.f32 1.0, %v2727
    %v2970 = vsub.f32 1.0, %v2731
    %v2971 = vsub.f32 1.0, %v2735
    %v2972 = vsub.f32 1.0, %v2739
    %v2973 = vsub.f32 1.0, %v2743
    %v2974 = vsub.f32 1.0, %v2747
    %v2975 = vsub.f32 1.0, %v2751
    %v2976 = vsub.f32 1.0, %v2755
    %v2977 = vsub.f32 1.0, %v2759
    %v2978 = vmul.f32 %v2966, %v2216
    %v2979 = vmul.f32 %v2967, %v2217
    %v2980 = vmul.f32 %v2968, %v2218
    %v2981 = vmul.f32 %v2969, %v2219
    %v2982 = vmul.f32 %v2970, %v2220
    %v2983 = vmul.f32 %v2971, %v2221
    %v2984 = vmul.f32 %v2972, %v2222
    %v2985 = vmul.f32 %v2973, %v2223
    %v2986 = vmul.f32 %v2974, %v2224
    %v2987 = vmul.f32 %v2975, %v2225
    %v2988 = vmul.f32 %v2976, %v2226
    %v2989 = vmul.f32 %v2977, %v2227
    %v2990 = vmul.f32 %v2715, %v2954
    %v2991 = vmul.f32 %v2719, %v2955
    %v2992 = vmul.f32 %v2723, %v2956
    %v2993 = vmul.f32 %v2727, %v2957
    %v2994 = vmul.f32 %v2731, %v2958
    %v2995 = vmul.f32 %v2735, %v2959
    %v2996 = vmul.f32 %v2739, %v2960
    %v2997 = vmul.f32 %v2743, %v2961
    %v2998 = vmul.f32 %v2747, %v2962
    %v2999 = vmul.f32 %v2751, %v2963
    %v3000 = vmul.f32 %v2755, %v2964
    %v3001 = vmul.f32 %v2759, %v2965
    %v3002 = vadd.f32 %v2978, %v2990
    %v3003 = vadd.f32 %v2979, %v2991
    %v3004 = vadd.f32 %v2980, %v2992
    %v3005 = vadd.f32 %v2981, %v2993
    %v3006 = vadd.f32 %v2982, %v2994
    %v3007 = vadd.f32 %v2983, %v2995
    %v3008 = vadd.f32 %v2984, %v2996
    %v3009 = vadd.f32 %v2985, %v2997
    %v3010 = vadd.f32 %v2986, %v2998
    %v3011 = vadd.f32 %v2987, %v2999
    %v3012 = vadd.f32 %v2988, %v3000
    %v3013 = vadd.f32 %v2989, %v3001
    %v3014 = vpack.c.bf16 %v3003, %v3002
    %v3015 = vpack.c.bf16 %v3005, %v3004
    %v3016 = vpack.c.bf16 %v3007, %v3006
    %v3017 = vpack.c.bf16 %v3009, %v3008
    %v3018 = vpack.c.bf16 %v3011, %v3010
    %v3019 = vpack.c.bf16 %v3013, %v3012
    %v3020 = vld [vmem:[#allocation15] sm:$0xf]
    %v3021 = vld [vmem:[#allocation15 + $0x4] sm:$0xf]
    %v3022 = vld [vmem:[#allocation15 + $0x8] sm:$0xf]
    %v3023 = vld [vmem:[#allocation15 + $0xc] sm:$0xf]
    %v3024 = vld [vmem:[#allocation15 + $0x10] sm:$0xf]
    %v3025 = vld [vmem:[#allocation15 + $0x14] sm:$0xf]
    %v3026 = vld [vmem:[#allocation15 + $0x18] sm:$0xf]
    %v3027 = vld [vmem:[#allocation15 + $0x1c] sm:$0xf]
    %v3028 = vld [vmem:[#allocation15 + $0x20] sm:$0xf]
    %v3029 = vld [vmem:[#allocation15 + $0x24] sm:$0xf]
    %v3030 = vld [vmem:[#allocation15 + $0x28] sm:$0xf]
    %v3031 = vld [vmem:[#allocation15 + $0x2c] sm:$0xf]
    %v3032 = vld [vmem:[#allocation15 + $0x30] sm:$0xf]
    %v3033 = vld [vmem:[#allocation15 + $0x34] sm:$0xf]
    %v3034 = vld [vmem:[#allocation15 + $0x38] sm:$0xf]
    %v3035 = vld [vmem:[#allocation15 + $0x3c] sm:$0xf]
    %v3036 = vld [vmem:[%s11] sm:$0x1]
    %v3038 = vlaneseq
    %v3039 = vshrl.u32 %v3038, 7
    %v3040 = vsub.s32 0, %v3039
    %v3041 = vrot.slane %v3036, %v3040
    %v3059 = vunpack.c.l.b16 %v3020
    %v3060 = vunpack.c.l.b16 %v3021
    %v3061 = vunpack.c.l.b16 %v3022
    %v3062 = vunpack.c.l.b16 %v3023
    %v3063 = vunpack.c.l.b16 %v3024
    %v3064 = vunpack.c.l.b16 %v3025
    %v3065 = vunpack.c.l.b16 %v3026
    %v3066 = vunpack.c.l.b16 %v3027
    %v3067 = vunpack.c.l.b16 %v3028
    %v3068 = vunpack.c.l.b16 %v3029
    %v3069 = vunpack.c.l.b16 %v3030
    %v3070 = vunpack.c.l.b16 %v3031
    %v3071 = vunpack.c.l.b16 %v3032
    %v3072 = vunpack.c.l.b16 %v3033
    %v3073 = vunpack.c.l.b16 %v3034
    %v3074 = vunpack.c.l.b16 %v3035
    %v3075 = vpack.c.b16 %v3060, %v3059
    %v3076 = vpack.c.b16 %v3062, %v3061
    %v3077 = vpack.c.b16 %v3064, %v3063
    %v3078 = vpack.c.b16 %v3066, %v3065
    %v3079 = vpack.c.b16 %v3068, %v3067
    %v3080 = vpack.c.b16 %v3070, %v3069
    %v3081 = vpack.c.b16 %v3072, %v3071
    %v3082 = vpack.c.b16 %v3074, %v3073
    %3091 = vmatprep.subr.bf16.mxu0 0
    %3092 = vmatpush1.bf16.msra.mxu0 %v3075
    %3093 = vmatprep.subr.bf16.mxu0 0
    %3094 = vmatpush1.bf16.msra.mxu0 %v3076
    %3095 = vmatprep.subr.bf16.mxu0 0
    %3096 = vmatpush1.bf16.msra.mxu0 %v3077
    %3097 = vmatprep.subr.bf16.mxu0 0
    %3098 = vmatpush1.bf16.msra.mxu0 %v3078
    %3099 = vmatprep.subr.bf16.mxu0 0
    %3100 = vmatpush1.bf16.msra.mxu0 %v3079
    %3101 = vmatprep.subr.bf16.mxu0 0
    %3102 = vmatpush1.bf16.msra.mxu0 %v3080
    %3103 = vmatprep.subr.bf16.mxu0 0
    %3104 = vmatpush1.bf16.msra.mxu0 %v3081
    %3105 = vmatprep.subr.bf16.mxu0 0
    %3106 = vmatpush1.bf16.msra.mxu0 %v3082
    %3107 = vmatprep.subr.bf16.mxu0 0
    %3108 = vmatpush1.bf16.msra.mxu0 0
    %3109 = vmatprep.subr.bf16.mxu0 0
    %3110 = vmatpush1.bf16.msra.mxu0 0
    %3111 = vmatprep.subr.bf16.mxu0 0
    %3112 = vmatpush1.bf16.msra.mxu0 0
    %3113 = vmatprep.subr.bf16.mxu0 0
    %3114 = vmatpush1.bf16.msra.mxu0 0
    %3115 = vmatprep.subr.bf16.mxu0 0
    %3116 = vmatpush1.bf16.msra.mxu0 0
    %3117 = vmatprep.subr.bf16.mxu0 0
    %3118 = vmatpush1.bf16.msra.mxu0 0
    %3119 = vmatprep.subr.bf16.mxu0 0
    %3120 = vmatpush1.bf16.msra.mxu0 0
    %3121 = vmatprep.subr.bf16.mxu0 0
    %3122 = vmatpush1.bf16.msra.mxu0 0
    %3123 = vmatprep.mubr.bf16.mxu0 0
    %3124 = vmatmul.mubr.bf16.gmra.mrb[0].mxu0 %v3014
    %v3125 = vpop.f32.mrb[0].mxu0
    %v3126 = vadd.f32 %v3041, %v3125
    %v3127 = vpop.f32.mrb[0].mxu0
    %v3128 = vpop.f32.mrb[0].mxu0
    %v3129 = vadd.f32 %v3041, %v3128
    %v3130 = vpop.f32.mrb[0].mxu0
    %3131 = vmatprep.mubr.bf16.mxu0 0
    %3132 = vmatmul.mubr.bf16.gmra.mrb[0].mxu0 %v3015
    %v3133 = vpop.f32.mrb[0].mxu0
    %v3134 = vadd.f32 %v3041, %v3133
    %v3135 = vpop.f32.mrb[0].mxu0
    %v3136 = vpop.f32.mrb[0].mxu0
    %v3137 = vadd.f32 %v3041, %v3136
    %v3138 = vpop.f32.mrb[0].mxu0
    %3139 = vmatprep.mubr.bf16.mxu0 0
    %3140 = vmatmul.mubr.bf16.gmra.mrb[0].mxu0 %v3016
    %v3141 = vpop.f32.mrb[0].mxu0
    %v3142 = vadd.f32 %v3041, %v3141
    %v3143 = vpop.f32.mrb[0].mxu0
    %v3144 = vpop.f32.mrb[0].mxu0
    %v3145 = vadd.f32 %v3041, %v3144
    %v3146 = vpop.f32.mrb[0].mxu0
    %3147 = vmatprep.mubr.bf16.mxu0 0
    %3148 = vmatmul.mubr.bf16.gmra.mrb[0].mxu0 %v3017
    %v3149 = vpop.f32.mrb[0].mxu0
    %v3150 = vadd.f32 %v3041, %v3149
    %v3151 = vpop.f32.mrb[0].mxu0
    %v3152 = vpop.f32.mrb[0].mxu0
    %v3153 = vadd.f32 %v3041, %v3152
    %v3154 = vpop.f32.mrb[0].mxu0
    %3155 = vmatprep.mubr.bf16.mxu0 0
    %3156 = vmatmul.mubr.bf16.gmra.mrb[0].mxu0 %v3018
    %v3157 = vpop.f32.mrb[0].mxu0
    %v3158 = vadd.f32 %v3041, %v3157
    %v3159 = vpop.f32.mrb[0].mxu0
    %v3160 = vpop.f32.mrb[0].mxu0
    %v3161 = vadd.f32 %v3041, %v3160
    %v3162 = vpop.f32.mrb[0].mxu0
    %3163 = vmatprep.mubr.bf16.mxu0 0
    %3164 = vmatmul.mubr.bf16.gmra.mrb[0].mxu0 %v3019
    %v3165 = vpop.f32.mrb[0].mxu0
    %v3166 = vadd.f32 %v3041, %v3165
    %v3167 = vpop.f32.mrb[0].mxu0
    %v3168 = vpop.f32.mrb[0].mxu0
    %v3169 = vadd.f32 %v3041, %v3168
    %v3170 = vpop.f32.mrb[0].mxu0
    %3171 = vdwg.mxu0
    %3172 = vst [vmem:[#allocation17] sm:$0xff] %v3126
    %3173 = vst [vmem:[#allocation17 + $0x8] sm:$0xff] %v3129
    %3174 = vst [vmem:[#allocation17 + $0x10] sm:$0xff] %v3134
    %3175 = vst [vmem:[#allocation17 + $0x18] sm:$0xff] %v3137
    %3176 = vst [vmem:[#allocation17 + $0x20] sm:$0xff] %v3142
    %3177 = vst [vmem:[#allocation17 + $0x28] sm:$0xff] %v3145
    %3178 = vst [vmem:[#allocation17 + $0x30] sm:$0xff] %v3150
    %3179 = vst [vmem:[#allocation17 + $0x38] sm:$0xff] %v3153
    %3180 = vst [vmem:[#allocation17 + $0x40] sm:$0xff] %v3158
    %3181 = vst [vmem:[#allocation17 + $0x48] sm:$0xff] %v3161
    %3182 = vst [vmem:[#allocation17 + $0x50] sm:$0xff] %v3166
    %3183 = vst [vmem:[#allocation17 + $0x58] sm:$0xff] %v3169
    // Predicated region
    $region82: #{tpu_custom_call.1} parent=1 // pred_check
      _
    $region83: #{tpu_custom_call.1} parent=1 // pred_check_branch
      %3185 = sbr.rel (0) target = $region85
    $region84: #{tpu_custom_call.1} parent=1 // pred_region
      %s3187 = ssub.s32 1536, 1536
      %3188 = vsyncadd [#allocation5], %s3187
      %s3189 = sshll.u32 [#allocation17], 4
      %s3190 = int_to_ptr.vmem [resolvable:$true] %s3189
      %3195 = dma.vmem_to_hbm [thread:$0]  %s3190, 1536, %s12, [#allocation5], 128, 128, 8
    $region85: #{tpu_custom_call.1} parent=1 // pred_fallthru
      _
    // Predicated region
    $region86: #{tpu_custom_call.1} parent=1 // pred_check
      _
    $region87: #{tpu_custom_call.1} parent=1 // pred_check_branch
      %3197 = sbr.rel (0) target = $region89
    $region88: #{tpu_custom_call.1} parent=1 // pred_region
      %3198 = dma.done [#allocation5], 1536
    $region89: #{tpu_custom_call.1} parent=1 // pred_fallthru
      _
    %3199 = vsyncpa [#allocation4], 1
    %3200 = vsyncpa [#allocation7], 1
    %3201 = vsyncpa [#allocation10], 1
    %3202 = vsyncpa [#allocation13], 1
    %3203 = vsyncpa [#allocation16], 1
    %3204 = vsyncpa [#allocation5], 1

</llo_original>
